<compile_context>
chip_gen: v5e
topology: v5e:2x2
jax: 0.10.0
libtpu: 0.0.40
codegen_flags: <defaults>
</compile_context>

<pallas_src>
import jax
import jax.numpy as jnp
from jax.experimental import pallas as pl
from jax.experimental.pallas import tpu as pltpu

LATENT_DIM = 1280   # MobileNetV3-large `last_layer_shape`
STEM_CH = 16        # MobileNetV3-large conv_stem width

_TAPS = ((0, 0), (0, 1), (1, 0), (1, 1))   # (dy, dx); matches w2 flatten order


def _hardswish(x):
    return x * jnp.clip(x + 3.0, 0.0, 6.0) * (1.0 / 6.0)


def _round_up(n, m):
    return ((n + m - 1) // m) * m


# ------------------------------- kernel ------------------------------------ #

def _make_fused_kernel(tb, ho, wo, c4):
    m = tb * ho * wo          # stem matmul M dim (all pixels of all TB images)
    px = ho * wo              # pixels per image

    def kernel(x_ref, w2_ref, bstem_ref, whead_ref, bhead_ref,
               wheads_ref, bheads_ref, latent_ref, heads_ref,
               slab_ref, pooled_ref):
        # --- stem conv (3x3 / stride 2 / pad 1) as a 2x2 stride-1 conv over
        #     the space-to-depth input.  The 4 shifted windows are packed once
        #     along K into the slab scratch -> ONE MXU matmul with K = 4*c4
        #     (instead of 4 matmuls + 3 full-size accumulate adds).
        x = x_ref[...]                                  # (tb, hs, ws, c4) bf16
        for idx, (dy, dx) in enumerate(_TAPS):
            part = x[:, dy:dy + ho, dx:dx + wo, :].reshape(m, c4)
            slab_ref[:, idx * c4:(idx + 1) * c4] = part
        acc = jnp.dot(slab_ref[...], w2_ref[...],
                      preferred_element_type=jnp.float32)        # (m, 16) f32
        stem = _hardswish(acc + bstem_ref[...])

        # --- global average pool (the 1/px scale is folded into w_head, so
        #     only per-image sums are accumulated here)
        for i in range(tb):
            pooled_ref[i:i + 1, :] = jnp.sum(
                stem[i * px:(i + 1) * px, :], axis=0, keepdims=True)

        # --- conv_head projection + fused output heads, written per row-block
        #     (no cross-step state -> batch grid axis is fully parallel)
        latent = _hardswish(
            jnp.dot(pooled_ref[...], whead_ref[...],
                    preferred_element_type=jnp.float32) + bhead_ref[...])
        latent_ref[...] = latent.astype(latent_ref.dtype)
        heads_ref[...] = (
            jnp.dot(latent, wheads_ref[...],
                    preferred_element_type=jnp.float32) + bheads_ref[...]
        ).astype(heads_ref.dtype)

    return kernel


# ---------------------------- wrapper helpers ------------------------------ #

def _space_to_depth_pad(x_nhwc):
    """(B,H,W,C) -> (B, H/2+1, W/2+1, 4C), zero-padded 1 row top / 1 col left."""
    B, H, W, C = x_nhwc.shape
    ho, wo = H // 2, W // 2
    s2d = (x_nhwc.reshape(B, ho, 2, wo, 2, C)
           .transpose(0, 1, 3, 2, 4, 5)
           .reshape(B, ho, wo, 4 * C))
    return jnp.pad(s2d, ((0, 0), (1, 0), (1, 0), (0, 0)))


# 3x3/s2 tap index -> (2x2 conv offset, space-to-depth phase)
_TAP = {0: (0, 1), 1: (1, 0), 2: (1, 1)}


def _stem_weight_to_2x2(w_stem):
    """HWIO (3,3,Cin,STEM_CH) -> (2,2,4*Cin,STEM_CH) for the s2d formulation."""
    _, _, cin, cout = w_stem.shape
    w2 = jnp.zeros((2, 2, 4 * cin, cout), w_stem.dtype)
    for ky in range(3):
        dy, p = _TAP[ky]
        for kx in range(3):
            dx, q = _TAP[kx]
            c0 = (p * 2 + q) * cin
            w2 = w2.at[dy, dx, c0:c0 + cin, :].set(w_stem[ky, kx])
    return w2


def _padded_buffer_bytes(shape, dtype):
    """Approximate VMEM bytes for a buffer after (8, 128) layout padding."""
    itemsize = jnp.dtype(dtype).itemsize
    if len(shape) == 1:
        return _round_up(shape[0], 128) * 8 * itemsize
    lead = 1
    for d in shape[:-2]:
        lead *= d
    return lead * _round_up(shape[-2], 8) * _round_up(shape[-1], 128) * itemsize


# ----------------------------- parameters ---------------------------------- #

def init_params(key, targets, in_chans=3):
    k1, k2, k3, k4 = jax.random.split(key, 4)
    params = {}
    params["w_stem"] = 0.1 * jax.random.normal(
        k1, (3, 3, in_chans, STEM_CH), jnp.float32)       # HWIO
    params["b_stem"] = jnp.zeros((1, STEM_CH), jnp.float32)
    params["w_head"] = 0.1 * jax.random.normal(
        k2, (STEM_CH, LATENT_DIM), jnp.float32)
    params["b_head"] = jnp.zeros((1, LATENT_DIM), jnp.float32)
    out_dims = [targets[k]["out_dim"] for k in targets.keys()]
    total = sum(out_dims)
    params["w_heads"] = 0.02 * jax.random.normal(
        k3, (LATENT_DIM, total), jnp.float32)
    params["b_heads"] = 0.01 * jax.random.normal(k4, (1, total), jnp.float32)
    params["out_dims"] = out_dims
    return params


# ------------------------------- forward ----------------------------------- #

def multi_target_cnn_forward(params, img):
    """img: (B, C, H, W) float32 NCHW, like the PyTorch module."""
    B, C, H, W = img.shape
    assert H % 2 == 0 and W % 2 == 0, "stride-2 stem expects even H, W"
    x = jnp.transpose(img, (0, 2, 3, 1))                  # NHWC
    x_sp = _space_to_depth_pad(x)                         # (B, Ho+1, Wo+1, 4C)
    _, hs, ws, c4 = x_sp.shape
    ho, wo = hs - 1, ws - 1
    px = ho * wo
    k_fused = 4 * c4

    # --- images per grid step: amortize per-step overhead but keep the
    #     double-buffered image block + slab scratch under a v7x-safe budget.
    def _img_block_bytes(tb_):
        return _padded_buffer_bytes((tb_, hs, ws, c4), jnp.bfloat16)

    tb = 8
    budget = 24 * 1024 * 1024
    while tb > 1 and (2 * _img_block_bytes(tb)
                      + _padded_buffer_bytes((tb * px, k_fused), jnp.bfloat16)
                      ) > budget:
        tb //= 2
    b_pad = _round_up(max(B, tb), tb)

    x_sp = jnp.pad(x_sp, ((0, b_pad - B), (0, 0), (0, 0), (0, 0)))
    x_sp = x_sp.astype(jnp.bfloat16)                      # halve image DMA bytes

    # fused-K stem weight (bf16; f32 accumulation happens in-kernel)
    w2 = (_stem_weight_to_2x2(params["w_stem"])
          .reshape(k_fused, STEM_CH).astype(jnp.bfloat16))
    b_stem = params["b_stem"]
    # fold the 1/(Ho*Wo) average-pool scale into the head projection weight
    w_head = (params["w_head"] / float(px)).astype(jnp.float32)
    b_head = params["b_head"]

    out_dims = params["out_dims"]
    total = sum(out_dims)
    head_pad = _round_up(total, 128)                      # lane-dense heads out
    w_heads = jnp.pad(params["w_heads"], ((0, 0), (0, head_pad - total)))
    b_heads = jnp.pad(params["b_heads"], ((0, 0), (0, head_pad - total)))

    # right-sized VMEM limit from the actual (layout-padded) buffer sum
    buf_bytes = (
        2 * _img_block_bytes(tb)
        + 2 * _padded_buffer_bytes(w2.shape, w2.dtype)
        + 2 * _padded_buffer_bytes(b_stem.shape, b_stem.dtype)
        + 2 * _padded_buffer_bytes(w_head.shape, w_head.dtype)
        + 2 * _padded_buffer_bytes(b_head.shape, b_head.dtype)
        + 2 * _padded_buffer_bytes(w_heads.shape, w_heads.dtype)
        + 2 * _padded_buffer_bytes(b_heads.shape, b_heads.dtype)
        + 2 * _padded_buffer_bytes((tb, LATENT_DIM), jnp.float32)
        + 2 * _padded_buffer_bytes((tb, head_pad), jnp.float32)
        + _padded_buffer_bytes((tb * px, k_fused), jnp.bfloat16)   # slab scratch
        + _padded_buffer_bytes((tb, STEM_CH), jnp.float32)         # pooled scratch
        + _padded_buffer_bytes((tb * px, STEM_CH), jnp.float32)    # stem value
    )
    vmem_limit = int(min(100 * 1024 * 1024, max(16 * 1024 * 1024, 2 * buf_bytes)))

    flops = (2 * b_pad * px * k_fused * STEM_CH
             + 2 * b_pad * STEM_CH * LATENT_DIM
             + 2 * b_pad * LATENT_DIM * head_pad)
    bytes_accessed = (2 * (x_sp.size + w2.size)
                      + 4 * (b_stem.size + w_head.size + b_head.size
                             + w_heads.size + b_heads.size
                             + b_pad * LATENT_DIM + b_pad * head_pad))

    kernel = _make_fused_kernel(tb, ho, wo, c4)

    latent_pad, heads_out = pl.pallas_call(
        kernel,
        out_shape=(
            jax.ShapeDtypeStruct((b_pad, LATENT_DIM), jnp.float32),
            jax.ShapeDtypeStruct((b_pad, head_pad), jnp.float32),
        ),
        grid_spec=pltpu.PrefetchScalarGridSpec(
            num_scalar_prefetch=0,
            grid=(b_pad // tb,),
            in_specs=[
                # TB-image tile, pipelined across the batch axis
                pl.BlockSpec((tb, hs, ws, c4), lambda b: (b, 0, 0, 0)),
                # weights/biases: constant block index -> DMA'd once, VMEM-resident
                pl.BlockSpec((k_fused, STEM_CH), lambda b: (0, 0)),
                pl.BlockSpec((1, STEM_CH), lambda b: (0, 0)),
                pl.BlockSpec((STEM_CH, LATENT_DIM), lambda b: (0, 0)),
                pl.BlockSpec((1, LATENT_DIM), lambda b: (0, 0)),
                pl.BlockSpec((LATENT_DIM, head_pad), lambda b: (0, 0)),
                pl.BlockSpec((1, head_pad), lambda b: (0, 0)),
            ],
            out_specs=(
                pl.BlockSpec((tb, LATENT_DIM), lambda b: (b, 0)),
                pl.BlockSpec((tb, head_pad), lambda b: (b, 0)),
            ),
            scratch_shapes=[
                pltpu.VMEM((tb * px, k_fused), jnp.bfloat16),   # fused-K slab
                pltpu.VMEM((tb, STEM_CH), jnp.float32),         # pooled sums
            ],
        ),
        compiler_params=pltpu.CompilerParams(
            # each grid step owns a disjoint output row block -> fully parallel
            dimension_semantics=("parallel",),
            vmem_limit_bytes=vmem_limit,
        ),
        cost_estimate=pl.CostEstimate(
            flops=flops, transcendentals=0, bytes_accessed=bytes_accessed),
    )(x_sp, w2, b_stem, w_head, b_head, w_heads, b_heads)

    latent = latent_pad[:B]
    outs, off = [], 0
    for d in out_dims:
        outs.append(heads_out[:B, off:off + d])
        off += d
    return outs, latent


# ------------------------- pure-JAX reference ------------------------------ #

def _reference_forward(params, img):
    x = jnp.transpose(img, (0, 2, 3, 1))
    conv = jax.lax.conv_general_dilated(
        x, params["w_stem"], window_strides=(2, 2), padding=((1, 1), (1, 1)),
        dimension_numbers=("NHWC", "HWIO", "NHWC"),
        precision=jax.lax.Precision.HIGHEST)
    stem = _hardswish(conv + params["b_stem"])
    pooled = jnp.mean(stem, axis=(1, 2))
    latent = _hardswish(
        jnp.dot(pooled, params["w_head"],
                precision=jax.lax.Precision.HIGHEST) + params["b_head"])
    heads = jnp.dot(latent, params["w_heads"],
                    precision=jax.lax.Precision.HIGHEST) + params["b_heads"]
    outs, off = [], 0
    for d in params["out_dims"]:
        outs.append(heads[:, off:off + d])
        off += d
    return outs, latent


# --------------------------------- main ------------------------------------ #

if __name__ == "__main__":
    targets = {
        "grapheme": {"out_dim": 5},
        "vowel": {"out_dim": 3},
        "consonant": {"out_dim": 7},
    }
    key = jax.random.PRNGKey(0)
    k_img, k_par = jax.random.split(key)

    img = jax.random.normal(k_img, (2, 3, 16, 16), jnp.float32)   # NCHW, small
    params = init_params(k_par, targets, in_chans=3)

    fwd = jax.jit(lambda im: multi_target_cnn_forward(params, im))
    outs, latent = fwd(img)
    jax.block_until_ready(latent)
    for o in outs:
        jax.block_until_ready(o)

    assert latent.shape == (2, LATENT_DIM)
    assert [o.shape for o in outs] == [(2, 5), (2, 3), (2, 7)]

    # numerical check vs. a pure-JAX implementation of the same skeleton
    ref_outs, ref_latent = _reference_forward(params, img)
    assert jnp.allclose(latent, ref_latent, atol=5e-3, rtol=5e-3)
    for o, r in zip(outs, ref_outs):
        assert jnp.allclose(o, r, atol=5e-3, rtol=5e-3)

    print("KERNEL_OK")
</pallas_src>

<mosaic_0001>
module attributes {stable_mosaic.version = 11 : i64} {
  func.func @kernel(%arg0: i32, %arg1: memref<8x9x9x12xbf16, #tpu.memory_space<vmem>>, %arg2: memref<48x16xbf16, #tpu.memory_space<vmem>>, %arg3: memref<1x16xf32, #tpu.memory_space<vmem>>, %arg4: memref<16x1280xf32, #tpu.memory_space<vmem>>, %arg5: memref<1x1280xf32, #tpu.memory_space<vmem>>, %arg6: memref<1280x128xf32, #tpu.memory_space<vmem>>, %arg7: memref<1x128xf32, #tpu.memory_space<vmem>>, %arg8: memref<8x1280xf32, #tpu.memory_space<vmem>>, %arg9: memref<8x128xf32, #tpu.memory_space<vmem>>, %arg10: memref<512x48xbf16, #tpu.memory_space<vmem>>, %arg11: memref<8x16xf32, #tpu.memory_space<vmem>>) attributes {dimension_semantics = [#tpu.dimension_semantics<parallel>], iteration_bounds = array<i64: 1>, scalar_prefetch = 0 : i64, scratch_operands = 2 : i64, tpu.core_type = #tpu.core_type<tc>, window_params = [{transform_indices = @transform_0, window_bounds = array<i64: 8, 9, 9, 12>}, {pipeline_mode = #tpu.pipeline_mode<synchronous>, transform_indices = @transform_1, window_bounds = array<i64: 48, 16>}, {pipeline_mode = #tpu.pipeline_mode<synchronous>, transform_indices = @transform_2, window_bounds = array<i64: 1, 16>}, {pipeline_mode = #tpu.pipeline_mode<synchronous>, transform_indices = @transform_3, window_bounds = array<i64: 16, 1280>}, {pipeline_mode = #tpu.pipeline_mode<synchronous>, transform_indices = @transform_4, window_bounds = array<i64: 1, 1280>}, {pipeline_mode = #tpu.pipeline_mode<synchronous>, transform_indices = @transform_5, window_bounds = array<i64: 1280, 128>}, {pipeline_mode = #tpu.pipeline_mode<synchronous>, transform_indices = @transform_6, window_bounds = array<i64: 1, 128>}, {transform_indices = @transform_7, window_bounds = array<i64: 8, 1280>}, {transform_indices = @transform_8, window_bounds = array<i64: 8, 128>}]} {
    %c0 = arith.constant 0 : index
    %c0_0 = arith.constant 0 : index
    %c0_1 = arith.constant 0 : index
    %c0_2 = arith.constant 0 : index
    %0 = vector.load %arg1[%c0, %c0_0, %c0_1, %c0_2] : memref<8x9x9x12xbf16, #tpu.memory_space<vmem>>, vector<8x9x9x12xbf16>
    %1 = vector.extract_strided_slice %0 {offsets = [0, 0, 0, 0], sizes = [8, 8, 8, 12], strides = [1, 1, 1, 1]} : vector<8x9x9x12xbf16> to vector<8x8x8x12xbf16>
    %2 = vector.shape_cast %1 : vector<8x8x8x12xbf16> to vector<512x12xbf16>
    %c0_3 = arith.constant 0 : index
    %c0_4 = arith.constant 0 : index
    %3 = vector.load %arg10[%c0_3, %c0_4] : memref<512x48xbf16, #tpu.memory_space<vmem>>, vector<512x12xbf16>
    tpu.vector_store %arg10[%c0_3, %c0_4], %2 {strides = array<i32>} : memref<512x48xbf16, #tpu.memory_space<vmem>>, vector<512x12xbf16>,
    %4 = vector.extract_strided_slice %0 {offsets = [0, 0, 1, 0], sizes = [8, 8, 8, 12], strides = [1, 1, 1, 1]} : vector<8x9x9x12xbf16> to vector<8x8x8x12xbf16>
    %5 = vector.shape_cast %4 : vector<8x8x8x12xbf16> to vector<512x12xbf16>
    %c0_5 = arith.constant 0 : index
    %c12 = arith.constant 12 : index
    %6 = vector.load %arg10[%c0_5, %c12] : memref<512x48xbf16, #tpu.memory_space<vmem>>, vector<512x12xbf16>
    tpu.vector_store %arg10[%c0_5, %c12], %5 {strides = array<i32>} : memref<512x48xbf16, #tpu.memory_space<vmem>>, vector<512x12xbf16>,
    %7 = vector.extract_strided_slice %0 {offsets = [0, 1, 0, 0], sizes = [8, 8, 8, 12], strides = [1, 1, 1, 1]} : vector<8x9x9x12xbf16> to vector<8x8x8x12xbf16>
    %8 = vector.shape_cast %7 : vector<8x8x8x12xbf16> to vector<512x12xbf16>
    %c0_6 = arith.constant 0 : index
    %c24 = arith.constant 24 : index
    %9 = vector.load %arg10[%c0_6, %c24] : memref<512x48xbf16, #tpu.memory_space<vmem>>, vector<512x12xbf16>
    tpu.vector_store %arg10[%c0_6, %c24], %8 {strides = array<i32>} : memref<512x48xbf16, #tpu.memory_space<vmem>>, vector<512x12xbf16>,
    %10 = vector.extract_strided_slice %0 {offsets = [0, 1, 1, 0], sizes = [8, 8, 8, 12], strides = [1, 1, 1, 1]} : vector<8x9x9x12xbf16> to vector<8x8x8x12xbf16>
    %11 = vector.shape_cast %10 : vector<8x8x8x12xbf16> to vector<512x12xbf16>
    %c0_7 = arith.constant 0 : index
    %c36 = arith.constant 36 : index
    %12 = vector.load %arg10[%c0_7, %c36] : memref<512x48xbf16, #tpu.memory_space<vmem>>, vector<512x12xbf16>
    tpu.vector_store %arg10[%c0_7, %c36], %11 {strides = array<i32>} : memref<512x48xbf16, #tpu.memory_space<vmem>>, vector<512x12xbf16>,
    %c0_8 = arith.constant 0 : index
    %c0_9 = arith.constant 0 : index
    %13 = vector.load %arg10[%c0_8, %c0_9] : memref<512x48xbf16, #tpu.memory_space<vmem>>, vector<512x48xbf16>
    %c0_10 = arith.constant 0 : index
    %c0_11 = arith.constant 0 : index
    %14 = vector.load %arg2[%c0_10, %c0_11] : memref<48x16xbf16, #tpu.memory_space<vmem>>, vector<48x16xbf16>
    %cst = arith.constant dense<0.000000e+00> : vector<512x16xf32>
    %15 = tpu.matmul %13, %14, %cst {dimension_numbers = #tpu.dot_dimension_numbers<[1], [0], [0], [1], [0, 0, 1, 1], [], []>} : vector<512x48xbf16>, vector<48x16xbf16>, vector<512x16xf32> -> vector<512x16xf32>
    %c0_12 = arith.constant 0 : index
    %c0_13 = arith.constant 0 : index
    %16 = vector.load %arg3[%c0_12, %c0_13] : memref<1x16xf32, #tpu.memory_space<vmem>>, vector<1x16xf32>
    %17 = vector.broadcast %16 : vector<1x16xf32> to vector<512x16xf32>
    %18 = arith.addf %15, %17 : vector<512x16xf32>
    %cst_14 = arith.constant 3.000000e+00 : f32
    %19 = vector.broadcast %cst_14 : f32 to vector<512x16xf32>
    %20 = arith.addf %18, %19 : vector<512x16xf32>
    %cst_15 = arith.constant 0.000000e+00 : f32
    %cst_16 = arith.constant 6.000000e+00 : f32
    %21 = vector.broadcast %cst_15 : f32 to vector<512x16xf32>
    %22 = arith.maximumf %21, %20 : vector<512x16xf32>
    %23 = vector.broadcast %cst_16 : f32 to vector<512x16xf32>
    %24 = arith.minimumf %23, %22 : vector<512x16xf32>
    %25 = arith.mulf %18, %24 : vector<512x16xf32>
    %cst_17 = arith.constant 0.166666672 : f32
    %26 = vector.broadcast %cst_17 : f32 to vector<512x16xf32>
    %27 = arith.mulf %25, %26 : vector<512x16xf32>
    %28 = vector.extract_strided_slice %27 {offsets = [0, 0], sizes = [64, 16], strides = [1, 1]} : vector<512x16xf32> to vector<64x16xf32>
    %cst_18 = arith.constant dense<0.000000e+00> : vector<16xf32>
    %29 = vector.multi_reduction <add>, %28, %cst_18 [0] : vector<64x16xf32> to vector<16xf32>
    %30 = vector.shape_cast %29 : vector<16xf32> to vector<1x16xf32>
    %c0_19 = arith.constant 0 : index
    %c0_20 = arith.constant 0 : index
    %31 = vector.load %arg11[%c0_19, %c0_20] : memref<8x16xf32, #tpu.memory_space<vmem>>, vector<1x16xf32>
    tpu.vector_store %arg11[%c0_19, %c0_20], %30 {strides = array<i32>} : memref<8x16xf32, #tpu.memory_space<vmem>>, vector<1x16xf32>,
    %32 = vector.extract_strided_slice %27 {offsets = [64, 0], sizes = [64, 16], strides = [1, 1]} : vector<512x16xf32> to vector<64x16xf32>
    %cst_21 = arith.constant dense<0.000000e+00> : vector<16xf32>
    %33 = vector.multi_reduction <add>, %32, %cst_21 [0] : vector<64x16xf32> to vector<16xf32>
    %34 = vector.shape_cast %33 : vector<16xf32> to vector<1x16xf32>
    %c1 = arith.constant 1 : index
    %c0_22 = arith.constant 0 : index
    %35 = vector.load %arg11[%c1, %c0_22] : memref<8x16xf32, #tpu.memory_space<vmem>>, vector<1x16xf32>
    tpu.vector_store %arg11[%c1, %c0_22], %34 {strides = array<i32>} : memref<8x16xf32, #tpu.memory_space<vmem>>, vector<1x16xf32>,
    %36 = vector.extract_strided_slice %27 {offsets = [128, 0], sizes = [64, 16], strides = [1, 1]} : vector<512x16xf32> to vector<64x16xf32>
    %cst_23 = arith.constant dense<0.000000e+00> : vector<16xf32>
    %37 = vector.multi_reduction <add>, %36, %cst_23 [0] : vector<64x16xf32> to vector<16xf32>
    %38 = vector.shape_cast %37 : vector<16xf32> to vector<1x16xf32>
    %c2 = arith.constant 2 : index
    %c0_24 = arith.constant 0 : index
    %39 = vector.load %arg11[%c2, %c0_24] : memref<8x16xf32, #tpu.memory_space<vmem>>, vector<1x16xf32>
    tpu.vector_store %arg11[%c2, %c0_24], %38 {strides = array<i32>} : memref<8x16xf32, #tpu.memory_space<vmem>>, vector<1x16xf32>,
    %40 = vector.extract_strided_slice %27 {offsets = [192, 0], sizes = [64, 16], strides = [1, 1]} : vector<512x16xf32> to vector<64x16xf32>
    %cst_25 = arith.constant dense<0.000000e+00> : vector<16xf32>
    %41 = vector.multi_reduction <add>, %40, %cst_25 [0] : vector<64x16xf32> to vector<16xf32>
    %42 = vector.shape_cast %41 : vector<16xf32> to vector<1x16xf32>
    %c3 = arith.constant 3 : index
    %c0_26 = arith.constant 0 : index
    %43 = vector.load %arg11[%c3, %c0_26] : memref<8x16xf32, #tpu.memory_space<vmem>>, vector<1x16xf32>
    tpu.vector_store %arg11[%c3, %c0_26], %42 {strides = array<i32>} : memref<8x16xf32, #tpu.memory_space<vmem>>, vector<1x16xf32>,
    %44 = vector.extract_strided_slice %27 {offsets = [256, 0], sizes = [64, 16], strides = [1, 1]} : vector<512x16xf32> to vector<64x16xf32>
    %cst_27 = arith.constant dense<0.000000e+00> : vector<16xf32>
    %45 = vector.multi_reduction <add>, %44, %cst_27 [0] : vector<64x16xf32> to vector<16xf32>
    %46 = vector.shape_cast %45 : vector<16xf32> to vector<1x16xf32>
    %c4 = arith.constant 4 : index
    %c0_28 = arith.constant 0 : index
    %47 = vector.load %arg11[%c4, %c0_28] : memref<8x16xf32, #tpu.memory_space<vmem>>, vector<1x16xf32>
    tpu.vector_store %arg11[%c4, %c0_28], %46 {strides = array<i32>} : memref<8x16xf32, #tpu.memory_space<vmem>>, vector<1x16xf32>,
    %48 = vector.extract_strided_slice %27 {offsets = [320, 0], sizes = [64, 16], strides = [1, 1]} : vector<512x16xf32> to vector<64x16xf32>
    %cst_29 = arith.constant dense<0.000000e+00> : vector<16xf32>
    %49 = vector.multi_reduction <add>, %48, %cst_29 [0] : vector<64x16xf32> to vector<16xf32>
    %50 = vector.shape_cast %49 : vector<16xf32> to vector<1x16xf32>
    %c5 = arith.constant 5 : index
    %c0_30 = arith.constant 0 : index
    %51 = vector.load %arg11[%c5, %c0_30] : memref<8x16xf32, #tpu.memory_space<vmem>>, vector<1x16xf32>
    tpu.vector_store %arg11[%c5, %c0_30], %50 {strides = array<i32>} : memref<8x16xf32, #tpu.memory_space<vmem>>, vector<1x16xf32>,
    %52 = vector.extract_strided_slice %27 {offsets = [384, 0], sizes = [64, 16], strides = [1, 1]} : vector<512x16xf32> to vector<64x16xf32>
    %cst_31 = arith.constant dense<0.000000e+00> : vector<16xf32>
    %53 = vector.multi_reduction <add>, %52, %cst_31 [0] : vector<64x16xf32> to vector<16xf32>
    %54 = vector.shape_cast %53 : vector<16xf32> to vector<1x16xf32>
    %c6 = arith.constant 6 : index
    %c0_32 = arith.constant 0 : index
    %55 = vector.load %arg11[%c6, %c0_32] : memref<8x16xf32, #tpu.memory_space<vmem>>, vector<1x16xf32>
    tpu.vector_store %arg11[%c6, %c0_32], %54 {strides = array<i32>} : memref<8x16xf32, #tpu.memory_space<vmem>>, vector<1x16xf32>,
    %56 = vector.extract_strided_slice %27 {offsets = [448, 0], sizes = [64, 16], strides = [1, 1]} : vector<512x16xf32> to vector<64x16xf32>
    %cst_33 = arith.constant dense<0.000000e+00> : vector<16xf32>
    %57 = vector.multi_reduction <add>, %56, %cst_33 [0] : vector<64x16xf32> to vector<16xf32>
    %58 = vector.shape_cast %57 : vector<16xf32> to vector<1x16xf32>
    %c7 = arith.constant 7 : index
    %c0_34 = arith.constant 0 : index
    %59 = vector.load %arg11[%c7, %c0_34] : memref<8x16xf32, #tpu.memory_space<vmem>>, vector<1x16xf32>
    tpu.vector_store %arg11[%c7, %c0_34], %58 {strides = array<i32>} : memref<8x16xf32, #tpu.memory_space<vmem>>, vector<1x16xf32>,
    %c0_35 = arith.constant 0 : index
    %c0_36 = arith.constant 0 : index
    %60 = vector.load %arg11[%c0_35, %c0_36] : memref<8x16xf32, #tpu.memory_space<vmem>>, vector<8x16xf32>
    %c0_37 = arith.constant 0 : index
    %c0_38 = arith.constant 0 : index
    %61 = vector.load %arg4[%c0_37, %c0_38] : memref<16x1280xf32, #tpu.memory_space<vmem>>, vector<16x1280xf32>
    %cst_39 = arith.constant dense<0.000000e+00> : vector<8x1280xf32>
    %62 = tpu.matmul %60, %61, %cst_39 {dimension_numbers = #tpu.dot_dimension_numbers<[1], [0], [0], [1], [0, 0, 1, 1], [], []>} : vector<8x16xf32>, vector<16x1280xf32>, vector<8x1280xf32> -> vector<8x1280xf32>
    %c0_40 = arith.constant 0 : index
    %c0_41 = arith.constant 0 : index
    %63 = vector.load %arg5[%c0_40, %c0_41] : memref<1x1280xf32, #tpu.memory_space<vmem>>, vector<1x1280xf32>
    %64 = vector.broadcast %63 : vector<1x1280xf32> to vector<8x1280xf32>
    %65 = arith.addf %62, %64 : vector<8x1280xf32>
    %cst_42 = arith.constant 3.000000e+00 : f32
    %66 = vector.broadcast %cst_42 : f32 to vector<8x1280xf32>
    %67 = arith.addf %65, %66 : vector<8x1280xf32>
    %cst_43 = arith.constant 0.000000e+00 : f32
    %cst_44 = arith.constant 6.000000e+00 : f32
    %68 = vector.broadcast %cst_43 : f32 to vector<8x1280xf32>
    %69 = arith.maximumf %68, %67 : vector<8x1280xf32>
    %70 = vector.broadcast %cst_44 : f32 to vector<8x1280xf32>
    %71 = arith.minimumf %70, %69 : vector<8x1280xf32>
    %72 = arith.mulf %65, %71 : vector<8x1280xf32>
    %cst_45 = arith.constant 0.166666672 : f32
    %73 = vector.broadcast %cst_45 : f32 to vector<8x1280xf32>
    %74 = arith.mulf %72, %73 : vector<8x1280xf32>
    %c0_46 = arith.constant 0 : index
    %c0_47 = arith.constant 0 : index
    %75 = vector.load %arg8[%c0_46, %c0_47] : memref<8x1280xf32, #tpu.memory_space<vmem>>, vector<8x1280xf32>
    tpu.vector_store %arg8[%c0_46, %c0_47], %74 {strides = array<i32>} : memref<8x1280xf32, #tpu.memory_space<vmem>>, vector<8x1280xf32>,
    %c0_48 = arith.constant 0 : index
    %c0_49 = arith.constant 0 : index
    %76 = vector.load %arg6[%c0_48, %c0_49] : memref<1280x128xf32, #tpu.memory_space<vmem>>, vector<1280x128xf32>
    %cst_50 = arith.constant dense<0.000000e+00> : vector<8x128xf32>
    %77 = tpu.matmul %74, %76, %cst_50 {dimension_numbers = #tpu.dot_dimension_numbers<[1], [0], [0], [1], [0, 0, 1, 1], [], []>} : vector<8x1280xf32>, vector<1280x128xf32>, vector<8x128xf32> -> vector<8x128xf32>
    %c0_51 = arith.constant 0 : index
    %c0_52 = arith.constant 0 : index
    %78 = vector.load %arg7[%c0_51, %c0_52] : memref<1x128xf32, #tpu.memory_space<vmem>>, vector<1x128xf32>
    %79 = vector.broadcast %78 : vector<1x128xf32> to vector<8x128xf32>
    %80 = arith.addf %77, %79 : vector<8x128xf32>
    %c0_53 = arith.constant 0 : index
    %c0_54 = arith.constant 0 : index
    %81 = vector.load %arg9[%c0_53, %c0_54] : memref<8x128xf32, #tpu.memory_space<vmem>>, vector<8x128xf32>
    tpu.vector_store %arg9[%c0_53, %c0_54], %80 {strides = array<i32>} : memref<8x128xf32, #tpu.memory_space<vmem>>, vector<8x128xf32>,
    return
  }
  func.func @transform_0(%arg0: i32) -> (i32, i32, i32, i32) {
    %c0_i32 = arith.constant 0 : i32
    %c0_i32_0 = arith.constant 0 : i32
    %c0_i32_1 = arith.constant 0 : i32
    %c0_i32_2 = arith.constant 0 : i32
    return %arg0, %c0_i32, %c0_i32_0, %c0_i32_1 : i32, i32, i32, i32
  }
  func.func @transform_1(%arg0: i32) -> (i32, i32) {
    %c0_i32 = arith.constant 0 : i32
    %c0_i32_0 = arith.constant 0 : i32
    %c0_i32_1 = arith.constant 0 : i32
    return %c0_i32, %c0_i32_0 : i32, i32
  }
  func.func @transform_2(%arg0: i32) -> (i32, i32) {
    %c0_i32 = arith.constant 0 : i32
    %c0_i32_0 = arith.constant 0 : i32
    %c0_i32_1 = arith.constant 0 : i32
    return %c0_i32, %c0_i32_0 : i32, i32
  }
  func.func @transform_3(%arg0: i32) -> (i32, i32) {
    %c0_i32 = arith.constant 0 : i32
    %c0_i32_0 = arith.constant 0 : i32
    %c0_i32_1 = arith.constant 0 : i32
    return %c0_i32, %c0_i32_0 : i32, i32
  }
  func.func @transform_4(%arg0: i32) -> (i32, i32) {
    %c0_i32 = arith.constant 0 : i32
    %c0_i32_0 = arith.constant 0 : i32
    %c0_i32_1 = arith.constant 0 : i32
    return %c0_i32, %c0_i32_0 : i32, i32
  }
  func.func @transform_5(%arg0: i32) -> (i32, i32) {
    %c0_i32 = arith.constant 0 : i32
    %c0_i32_0 = arith.constant 0 : i32
    %c0_i32_1 = arith.constant 0 : i32
    return %c0_i32, %c0_i32_0 : i32, i32
  }
  func.func @transform_6(%arg0: i32) -> (i32, i32) {
    %c0_i32 = arith.constant 0 : i32
    %c0_i32_0 = arith.constant 0 : i32
    %c0_i32_1 = arith.constant 0 : i32
    return %c0_i32, %c0_i32_0 : i32, i32
  }
  func.func @transform_7(%arg0: i32) -> (i32, i32) {
    %c0_i32 = arith.constant 0 : i32
    %c0_i32_0 = arith.constant 0 : i32
    return %arg0, %c0_i32 : i32, i32
  }
  func.func @transform_8(%arg0: i32) -> (i32, i32) {
    %c0_i32 = arith.constant 0 : i32
    %c0_i32_0 = arith.constant 0 : i32
    return %arg0, %c0_i32 : i32, i32
  }
}

</mosaic_0001>

<llo_original>
// kernel: _lambda_.1
$region0: #{_lambda_.1}
  #allocation0 [shape = 'u32[]', space=smem, size = 0x4, offset = 0x4, fixed_abs, tag = 'smem constant byte address 0x4 - core index']
  #allocation1 [shape = 'u32[72,128]{1,0:T(1,128)}', space=vmem, size = 0x9000, scoped, tag = 'internal scratch']
  #allocation2 [shape = 'bf16[512,48]{1,0:T(8,128)(2,1)}', space=vmem, size = 0x20000, scoped, tag = 'scratch operand']
  #allocation3 [shape = 'f32[8,16]{1,0:T(8,128)}', space=vmem, size = 0x1000, scoped, tag = 'scratch operand']
  %s0 = inlined_call_operand.vmem [shape: bf16[8,9,9,12], index: 0, kind: input, shape index: {}]
  %s1 = inlined_call_operand.vmem [shape: bf16[48,16], index: 1, kind: input, shape index: {}]
  %s2 = inlined_call_operand.vmem [shape: f32[1,16], index: 2, kind: input, shape index: {}]
  %s3 = inlined_call_operand.vmem [shape: f32[16,1280], index: 3, kind: input, shape index: {}]
  %s4 = inlined_call_operand.vmem [shape: f32[1,1280], index: 4, kind: input, shape index: {}]
  %s5 = inlined_call_operand.vmem [shape: f32[1280,128], index: 5, kind: input, shape index: {}]
  %s6 = inlined_call_operand.vmem [shape: f32[1,128], index: 6, kind: input, shape index: {}]
  %s7 = inlined_call_operand.vmem [shape: f32[8,1280], index: 7, kind: output, shape index: {0}]
  %s8 = inlined_call_operand.vmem [shape: f32[8,128], index: 8, kind: output, shape index: {1}]
  %9 = xla_tuple %s7, %s8
  %s10 = sld [smem:[#allocation0]]
  $region46: #{_lambda_.1} parent=0
    _
  %s12 = ssub.s32 1, %s10
  %s13 = scalar_select 0, %s12, %s10
  // Predicated region
  $region2: #{_lambda_.1} parent=0 // pred_check
    _
  $region3: #{_lambda_.1} parent=0 // pred_check_branch
    %15 = sbr.rel (0) target = $region5
  $region4: #{_lambda_.1} parent=0 // pred_region
    _
  $region5: #{_lambda_.1} parent=0 // pred_fallthru
    _
  // Predicated region
  $region6: #{_lambda_.1} parent=0 // pred_check
    _
  $region7: #{_lambda_.1} parent=0 // pred_check_branch
    %17 = sbr.rel (0) target = $region9
  $region8: #{_lambda_.1} parent=0 // pred_region
    _
  $region9: #{_lambda_.1} parent=0 // pred_fallthru
    _
  // Predicated region
  $region10: #{_lambda_.1} parent=0 // pred_check
    _
  $region11: #{_lambda_.1} parent=0 // pred_check_branch
    %19 = sbr.rel (0) target = $region13
  $region12: #{_lambda_.1} parent=0 // pred_region
    _
  $region13: #{_lambda_.1} parent=0 // pred_fallthru
    _
  // Predicated region
  $region14: #{_lambda_.1} parent=0 // pred_check
    _
  $region15: #{_lambda_.1} parent=0 // pred_check_branch
    %21 = sbr.rel (0) target = $region17
  $region16: #{_lambda_.1} parent=0 // pred_region
    _
  $region17: #{_lambda_.1} parent=0 // pred_fallthru
    _
  // Predicated region
  $region18: #{_lambda_.1} parent=0 // pred_check
    _
  $region19: #{_lambda_.1} parent=0 // pred_check_branch
    %23 = sbr.rel (0) target = $region21
  $region20: #{_lambda_.1} parent=0 // pred_region
    _
  $region21: #{_lambda_.1} parent=0 // pred_fallthru
    _
  // Predicated region
  $region22: #{_lambda_.1} parent=0 // pred_check
    _
  $region23: #{_lambda_.1} parent=0 // pred_check_branch
    %25 = sbr.rel (0) target = $region25
  $region24: #{_lambda_.1} parent=0 // pred_region
    _
  $region25: #{_lambda_.1} parent=0 // pred_fallthru
    _
  // Predicated region
  $region26: #{_lambda_.1} parent=0 // pred_check
    _
  $region27: #{_lambda_.1} parent=0 // pred_check_branch
    %27 = sbr.rel (0) target = $region29
  $region28: #{_lambda_.1} parent=0 // pred_region
    _
  $region29: #{_lambda_.1} parent=0 // pred_fallthru
    _
  %v29 = vld [vmem:[%s0] sm:$0xf]
  %v30 = vld [vmem:[%s0 + $0x4] sm:$0x1]
  %v31 = vld [vmem:[%s0 + $0x8] sm:$0xf]
  %v32 = vld [vmem:[%s0 + $0xc] sm:$0x1]
  %v33 = vld [vmem:[%s0 + $0x10] sm:$0xf]
  %v34 = vld [vmem:[%s0 + $0x14] sm:$0x1]
  %v35 = vld [vmem:[%s0 + $0x18] sm:$0xf]
  %v36 = vld [vmem:[%s0 + $0x1c] sm:$0x1]
  %v37 = vld [vmem:[%s0 + $0x20] sm:$0xf]
  %v38 = vld [vmem:[%s0 + $0x24] sm:$0x1]
  %v39 = vld [vmem:[%s0 + $0x28] sm:$0xf]
  %v40 = vld [vmem:[%s0 + $0x2c] sm:$0x1]
  %v41 = vld [vmem:[%s0 + $0x30] sm:$0xf]
  %v42 = vld [vmem:[%s0 + $0x34] sm:$0x1]
  %v43 = vld [vmem:[%s0 + $0x38] sm:$0xf]
  %v44 = vld [vmem:[%s0 + $0x3c] sm:$0x1]
  %v45 = vld [vmem:[%s0 + $0x40] sm:$0xf]
  %v46 = vld [vmem:[%s0 + $0x44] sm:$0x1]
  %v47 = vld [vmem:[%s0 + $0x48] sm:$0xf]
  %v48 = vld [vmem:[%s0 + $0x4c] sm:$0x1]
  %v49 = vld [vmem:[%s0 + $0x50] sm:$0xf]
  %v50 = vld [vmem:[%s0 + $0x54] sm:$0x1]
  %v51 = vld [vmem:[%s0 + $0x58] sm:$0xf]
  %v52 = vld [vmem:[%s0 + $0x5c] sm:$0x1]
  %v53 = vld [vmem:[%s0 + $0x60] sm:$0xf]
  %v54 = vld [vmem:[%s0 + $0x64] sm:$0x1]
  %v55 = vld [vmem:[%s0 + $0x68] sm:$0xf]
  %v56 = vld [vmem:[%s0 + $0x6c] sm:$0x1]
  %v57 = vld [vmem:[%s0 + $0x70] sm:$0xf]
  %v58 = vld [vmem:[%s0 + $0x74] sm:$0x1]
  %v59 = vld [vmem:[%s0 + $0x78] sm:$0xf]
  %v60 = vld [vmem:[%s0 + $0x7c] sm:$0x1]
  %v61 = vld [vmem:[%s0 + $0x80] sm:$0xf]
  %v62 = vld [vmem:[%s0 + $0x84] sm:$0x1]
  %v63 = vld [vmem:[%s0 + $0x88] sm:$0xf]
  %v64 = vld [vmem:[%s0 + $0x8c] sm:$0x1]
  %v65 = vld [vmem:[%s0 + $0x90] sm:$0xf]
  %v66 = vld [vmem:[%s0 + $0x94] sm:$0x1]
  %v67 = vld [vmem:[%s0 + $0x98] sm:$0xf]
  %v68 = vld [vmem:[%s0 + $0x9c] sm:$0x1]
  %v69 = vld [vmem:[%s0 + $0xa0] sm:$0xf]
  %v70 = vld [vmem:[%s0 + $0xa4] sm:$0x1]
  %v71 = vld [vmem:[%s0 + $0xa8] sm:$0xf]
  %v72 = vld [vmem:[%s0 + $0xac] sm:$0x1]
  %v73 = vld [vmem:[%s0 + $0xb0] sm:$0xf]
  %v74 = vld [vmem:[%s0 + $0xb4] sm:$0x1]
  %v75 = vld [vmem:[%s0 + $0xb8] sm:$0xf]
  %v76 = vld [vmem:[%s0 + $0xbc] sm:$0x1]
  %v77 = vld [vmem:[%s0 + $0xc0] sm:$0xf]
  %v78 = vld [vmem:[%s0 + $0xc4] sm:$0x1]
  %v79 = vld [vmem:[%s0 + $0xc8] sm:$0xf]
  %v80 = vld [vmem:[%s0 + $0xcc] sm:$0x1]
  %v81 = vld [vmem:[%s0 + $0xd0] sm:$0xf]
  %v82 = vld [vmem:[%s0 + $0xd4] sm:$0x1]
  %v83 = vld [vmem:[%s0 + $0xd8] sm:$0xf]
  %v84 = vld [vmem:[%s0 + $0xdc] sm:$0x1]
  %v85 = vld [vmem:[%s0 + $0xe0] sm:$0xf]
  %v86 = vld [vmem:[%s0 + $0xe4] sm:$0x1]
  %v87 = vld [vmem:[%s0 + $0xe8] sm:$0xf]
  %v88 = vld [vmem:[%s0 + $0xec] sm:$0x1]
  %v89 = vld [vmem:[%s0 + $0xf0] sm:$0xf]
  %v90 = vld [vmem:[%s0 + $0xf4] sm:$0x1]
  %v91 = vld [vmem:[%s0 + $0xf8] sm:$0xf]
  %v92 = vld [vmem:[%s0 + $0xfc] sm:$0x1]
  %v93 = vld [vmem:[%s0 + $0x100] sm:$0xf]
  %v94 = vld [vmem:[%s0 + $0x104] sm:$0x1]
  %v95 = vld [vmem:[%s0 + $0x108] sm:$0xf]
  %v96 = vld [vmem:[%s0 + $0x10c] sm:$0x1]
  %v97 = vld [vmem:[%s0 + $0x110] sm:$0xf]
  %v98 = vld [vmem:[%s0 + $0x114] sm:$0x1]
  %v99 = vld [vmem:[%s0 + $0x118] sm:$0xf]
  %v100 = vld [vmem:[%s0 + $0x11c] sm:$0x1]
  %v101 = vld [vmem:[%s0 + $0x120] sm:$0xf]
  %v102 = vld [vmem:[%s0 + $0x124] sm:$0x1]
  %v103 = vld [vmem:[%s0 + $0x128] sm:$0xf]
  %v104 = vld [vmem:[%s0 + $0x12c] sm:$0x1]
  %v105 = vld [vmem:[%s0 + $0x130] sm:$0xf]
  %v106 = vld [vmem:[%s0 + $0x134] sm:$0x1]
  %v107 = vld [vmem:[%s0 + $0x138] sm:$0xf]
  %v108 = vld [vmem:[%s0 + $0x13c] sm:$0x1]
  %v109 = vld [vmem:[%s0 + $0x140] sm:$0xf]
  %v110 = vld [vmem:[%s0 + $0x144] sm:$0x1]
  %v111 = vld [vmem:[%s0 + $0x148] sm:$0xf]
  %v112 = vld [vmem:[%s0 + $0x14c] sm:$0x1]
  %v113 = vld [vmem:[%s0 + $0x150] sm:$0xf]
  %v114 = vld [vmem:[%s0 + $0x154] sm:$0x1]
  %v115 = vld [vmem:[%s0 + $0x158] sm:$0xf]
  %v116 = vld [vmem:[%s0 + $0x15c] sm:$0x1]
  %v117 = vld [vmem:[%s0 + $0x160] sm:$0xf]
  %v118 = vld [vmem:[%s0 + $0x164] sm:$0x1]
  %v119 = vld [vmem:[%s0 + $0x168] sm:$0xf]
  %v120 = vld [vmem:[%s0 + $0x16c] sm:$0x1]
  %v121 = vld [vmem:[%s0 + $0x170] sm:$0xf]
  %v122 = vld [vmem:[%s0 + $0x174] sm:$0x1]
  %v123 = vld [vmem:[%s0 + $0x178] sm:$0xf]
  %v124 = vld [vmem:[%s0 + $0x17c] sm:$0x1]
  %v125 = vld [vmem:[%s0 + $0x180] sm:$0xf]
  %v126 = vld [vmem:[%s0 + $0x184] sm:$0x1]
  %v127 = vld [vmem:[%s0 + $0x188] sm:$0xf]
  %v128 = vld [vmem:[%s0 + $0x18c] sm:$0x1]
  %v129 = vld [vmem:[%s0 + $0x190] sm:$0xf]
  %v130 = vld [vmem:[%s0 + $0x194] sm:$0x1]
  %v131 = vld [vmem:[%s0 + $0x198] sm:$0xf]
  %v132 = vld [vmem:[%s0 + $0x19c] sm:$0x1]
  %v133 = vld [vmem:[%s0 + $0x1a0] sm:$0xf]
  %v134 = vld [vmem:[%s0 + $0x1a4] sm:$0x1]
  %v135 = vld [vmem:[%s0 + $0x1a8] sm:$0xf]
  %v136 = vld [vmem:[%s0 + $0x1ac] sm:$0x1]
  %v137 = vld [vmem:[%s0 + $0x1b0] sm:$0xf]
  %v138 = vld [vmem:[%s0 + $0x1b4] sm:$0x1]
  %v139 = vld [vmem:[%s0 + $0x1b8] sm:$0xf]
  %v140 = vld [vmem:[%s0 + $0x1bc] sm:$0x1]
  %v141 = vld [vmem:[%s0 + $0x1c0] sm:$0xf]
  %v142 = vld [vmem:[%s0 + $0x1c4] sm:$0x1]
  %v143 = vld [vmem:[%s0 + $0x1c8] sm:$0xf]
  %v144 = vld [vmem:[%s0 + $0x1cc] sm:$0x1]
  %v145 = vld [vmem:[%s0 + $0x1d0] sm:$0xf]
  %v146 = vld [vmem:[%s0 + $0x1d4] sm:$0x1]
  %v147 = vld [vmem:[%s0 + $0x1d8] sm:$0xf]
  %v148 = vld [vmem:[%s0 + $0x1dc] sm:$0x1]
  %v149 = vld [vmem:[%s0 + $0x1e0] sm:$0xf]
  %v150 = vld [vmem:[%s0 + $0x1e4] sm:$0x1]
  %v151 = vld [vmem:[%s0 + $0x1e8] sm:$0xf]
  %v152 = vld [vmem:[%s0 + $0x1ec] sm:$0x1]
  %v153 = vld [vmem:[%s0 + $0x1f0] sm:$0xf]
  %v154 = vld [vmem:[%s0 + $0x1f4] sm:$0x1]
  %v155 = vld [vmem:[%s0 + $0x1f8] sm:$0xf]
  %v156 = vld [vmem:[%s0 + $0x1fc] sm:$0x1]
  %v157 = vld [vmem:[%s0 + $0x200] sm:$0xf]
  %v158 = vld [vmem:[%s0 + $0x204] sm:$0x1]
  %v159 = vld [vmem:[%s0 + $0x208] sm:$0xf]
  %v160 = vld [vmem:[%s0 + $0x20c] sm:$0x1]
  %v161 = vld [vmem:[%s0 + $0x210] sm:$0xf]
  %v162 = vld [vmem:[%s0 + $0x214] sm:$0x1]
  %v163 = vld [vmem:[%s0 + $0x218] sm:$0xf]
  %v164 = vld [vmem:[%s0 + $0x21c] sm:$0x1]
  %v165 = vld [vmem:[%s0 + $0x220] sm:$0xf]
  %v166 = vld [vmem:[%s0 + $0x224] sm:$0x1]
  %v167 = vld [vmem:[%s0 + $0x228] sm:$0xf]
  %v168 = vld [vmem:[%s0 + $0x22c] sm:$0x1]
  %v169 = vld [vmem:[%s0 + $0x230] sm:$0xf]
  %v170 = vld [vmem:[%s0 + $0x234] sm:$0x1]
  %v171 = vld [vmem:[%s0 + $0x238] sm:$0xf]
  %v172 = vld [vmem:[%s0 + $0x23c] sm:$0x1]
  %vm173 = vcmask 93184
  %174 = vst.msk [vmem:[#allocation2] sm:$0xf] %vm173, %v29
  %175 = vst.msk [vmem:[#allocation2 + $0x4] sm:$0xf] %vm173, %v31
  %176 = vst.msk [vmem:[#allocation2 + $0x8] sm:$0xf] %vm173, %v33
  %177 = vst.msk [vmem:[#allocation2 + $0xc] sm:$0xf] %vm173, %v35
  %178 = vst.msk [vmem:[#allocation2 + $0x10] sm:$0xf] %vm173, %v37
  %179 = vst.msk [vmem:[#allocation2 + $0x14] sm:$0xf] %vm173, %v39
  %180 = vst.msk [vmem:[#allocation2 + $0x18] sm:$0xf] %vm173, %v41
  %181 = vst.msk [vmem:[#allocation2 + $0x1c] sm:$0xf] %vm173, %v43
  %182 = vst.msk [vmem:[#allocation2 + $0x20] sm:$0xf] %vm173, %v47
  %183 = vst.msk [vmem:[#allocation2 + $0x24] sm:$0xf] %vm173, %v49
  %184 = vst.msk [vmem:[#allocation2 + $0x28] sm:$0xf] %vm173, %v51
  %185 = vst.msk [vmem:[#allocation2 + $0x2c] sm:$0xf] %vm173, %v53
  %186 = vst.msk [vmem:[#allocation2 + $0x30] sm:$0xf] %vm173, %v55
  %187 = vst.msk [vmem:[#allocation2 + $0x34] sm:$0xf] %vm173, %v57
  %188 = vst.msk [vmem:[#allocation2 + $0x38] sm:$0xf] %vm173, %v59
  %189 = vst.msk [vmem:[#allocation2 + $0x3c] sm:$0xf] %vm173, %v61
  %190 = vst.msk [vmem:[#allocation2 + $0x40] sm:$0xf] %vm173, %v65
  %191 = vst.msk [vmem:[#allocation2 + $0x44] sm:$0xf] %vm173, %v67
  %192 = vst.msk [vmem:[#allocation2 + $0x48] sm:$0xf] %vm173, %v69
  %193 = vst.msk [vmem:[#allocation2 + $0x4c] sm:$0xf] %vm173, %v71
  %194 = vst.msk [vmem:[#allocation2 + $0x50] sm:$0xf] %vm173, %v73
  %195 = vst.msk [vmem:[#allocation2 + $0x54] sm:$0xf] %vm173, %v75
  %196 = vst.msk [vmem:[#allocation2 + $0x58] sm:$0xf] %vm173, %v77
  %197 = vst.msk [vmem:[#allocation2 + $0x5c] sm:$0xf] %vm173, %v79
  %198 = vst.msk [vmem:[#allocation2 + $0x60] sm:$0xf] %vm173, %v83
  %199 = vst.msk [vmem:[#allocation2 + $0x64] sm:$0xf] %vm173, %v85
  %200 = vst.msk [vmem:[#allocation2 + $0x68] sm:$0xf] %vm173, %v87
  %201 = vst.msk [vmem:[#allocation2 + $0x6c] sm:$0xf] %vm173, %v89
  %202 = vst.msk [vmem:[#allocation2 + $0x70] sm:$0xf] %vm173, %v91
  %203 = vst.msk [vmem:[#allocation2 + $0x74] sm:$0xf] %vm173, %v93
  %204 = vst.msk [vmem:[#allocation2 + $0x78] sm:$0xf] %vm173, %v95
  %205 = vst.msk [vmem:[#allocation2 + $0x7c] sm:$0xf] %vm173, %v97
  %206 = vst.msk [vmem:[#allocation2 + $0x80] sm:$0xf] %vm173, %v101
  %207 = vst.msk [vmem:[#allocation2 + $0x84] sm:$0xf] %vm173, %v103
  %208 = vst.msk [vmem:[#allocation2 + $0x88] sm:$0xf] %vm173, %v105
  %209 = vst.msk [vmem:[#allocation2 + $0x8c] sm:$0xf] %vm173, %v107
  %210 = vst.msk [vmem:[#allocation2 + $0x90] sm:$0xf] %vm173, %v109
  %211 = vst.msk [vmem:[#allocation2 + $0x94] sm:$0xf] %vm173, %v111
  %212 = vst.msk [vmem:[#allocation2 + $0x98] sm:$0xf] %vm173, %v113
  %213 = vst.msk [vmem:[#allocation2 + $0x9c] sm:$0xf] %vm173, %v115
  %214 = vst.msk [vmem:[#allocation2 + $0xa0] sm:$0xf] %vm173, %v119
  %215 = vst.msk [vmem:[#allocation2 + $0xa4] sm:$0xf] %vm173, %v121
  %216 = vst.msk [vmem:[#allocation2 + $0xa8] sm:$0xf] %vm173, %v123
  %217 = vst.msk [vmem:[#allocation2 + $0xac] sm:$0xf] %vm173, %v125
  %218 = vst.msk [vmem:[#allocation2 + $0xb0] sm:$0xf] %vm173, %v127
  %219 = vst.msk [vmem:[#allocation2 + $0xb4] sm:$0xf] %vm173, %v129
  %220 = vst.msk [vmem:[#allocation2 + $0xb8] sm:$0xf] %vm173, %v131
  %221 = vst.msk [vmem:[#allocation2 + $0xbc] sm:$0xf] %vm173, %v133
  %222 = vst.msk [vmem:[#allocation2 + $0xc0] sm:$0xf] %vm173, %v137
  %223 = vst.msk [vmem:[#allocation2 + $0xc4] sm:$0xf] %vm173, %v139
  %224 = vst.msk [vmem:[#allocation2 + $0xc8] sm:$0xf] %vm173, %v141
  %225 = vst.msk [vmem:[#allocation2 + $0xcc] sm:$0xf] %vm173, %v143
  %226 = vst.msk [vmem:[#allocation2 + $0xd0] sm:$0xf] %vm173, %v145
  %227 = vst.msk [vmem:[#allocation2 + $0xd4] sm:$0xf] %vm173, %v147
  %228 = vst.msk [vmem:[#allocation2 + $0xd8] sm:$0xf] %vm173, %v149
  %229 = vst.msk [vmem:[#allocation2 + $0xdc] sm:$0xf] %vm173, %v151
  %230 = vst.msk [vmem:[#allocation2 + $0xe0] sm:$0xf] %vm173, %v155
  %231 = vst.msk [vmem:[#allocation2 + $0xe4] sm:$0xf] %vm173, %v157
  %232 = vst.msk [vmem:[#allocation2 + $0xe8] sm:$0xf] %vm173, %v159
  %233 = vst.msk [vmem:[#allocation2 + $0xec] sm:$0xf] %vm173, %v161
  %234 = vst.msk [vmem:[#allocation2 + $0xf0] sm:$0xf] %vm173, %v163
  %235 = vst.msk [vmem:[#allocation2 + $0xf4] sm:$0xf] %vm173, %v165
  %236 = vst.msk [vmem:[#allocation2 + $0xf8] sm:$0xf] %vm173, %v167
  %237 = vst.msk [vmem:[#allocation2 + $0xfc] sm:$0xf] %vm173, %v169
  %vm238 = vsmask.f32 3328
  %vm239 = vsmask.f32 7440
  %vm240 = vmor %vm238, %vm239
  %v242 = vshrl.u32 %v29, 16
  %v244 = vrot.slane %v242, 4
  %v245 = vshll.u32 %v29, 16
  %v247 = vrot.slane %v245, 5
  %v248 = vor.u32 %v244, %v247
  %v249 = vrot.slane %v248, 4
  %v251 = vshll.u32 %v30, 16
  %v253 = vrot.slane %v251, 5
  %v254 = vsel %vm240, %v249, %v253
  %v256 = vshrl.u32 %v31, 16
  %v258 = vrot.slane %v256, 4
  %v259 = vshll.u32 %v31, 16
  %v261 = vrot.slane %v259, 5
  %v262 = vor.u32 %v258, %v261
  %v263 = vrot.slane %v262, 4
  %v265 = vshll.u32 %v32, 16
  %v267 = vrot.slane %v265, 5
  %v268 = vsel %vm240, %v263, %v267
  %v270 = vshrl.u32 %v33, 16
  %v272 = vrot.slane %v270, 4
  %v273 = vshll.u32 %v33, 16
  %v275 = vrot.slane %v273, 5
  %v276 = vor.u32 %v272, %v275
  %v277 = vrot.slane %v276, 4
  %v279 = vshll.u32 %v34, 16
  %v281 = vrot.slane %v279, 5
  %v282 = vsel %vm240, %v277, %v281
  %v284 = vshrl.u32 %v35, 16
  %v286 = vrot.slane %v284, 4
  %v287 = vshll.u32 %v35, 16
  %v289 = vrot.slane %v287, 5
  %v290 = vor.u32 %v286, %v289
  %v291 = vrot.slane %v290, 4
  %v293 = vshll.u32 %v36, 16
  %v295 = vrot.slane %v293, 5
  %v296 = vsel %vm240, %v291, %v295
  %v298 = vshrl.u32 %v37, 16
  %v300 = vrot.slane %v298, 4
  %v301 = vshll.u32 %v37, 16
  %v303 = vrot.slane %v301, 5
  %v304 = vor.u32 %v300, %v303
  %v305 = vrot.slane %v304, 4
  %v307 = vshll.u32 %v38, 16
  %v309 = vrot.slane %v307, 5
  %v310 = vsel %vm240, %v305, %v309
  %v312 = vshrl.u32 %v39, 16
  %v314 = vrot.slane %v312, 4
  %v315 = vshll.u32 %v39, 16
  %v317 = vrot.slane %v315, 5
  %v318 = vor.u32 %v314, %v317
  %v319 = vrot.slane %v318, 4
  %v321 = vshll.u32 %v40, 16
  %v323 = vrot.slane %v321, 5
  %v324 = vsel %vm240, %v319, %v323
  %v326 = vshrl.u32 %v41, 16
  %v328 = vrot.slane %v326, 4
  %v329 = vshll.u32 %v41, 16
  %v331 = vrot.slane %v329, 5
  %v332 = vor.u32 %v328, %v331
  %v333 = vrot.slane %v332, 4
  %v335 = vshll.u32 %v42, 16
  %v337 = vrot.slane %v335, 5
  %v338 = vsel %vm240, %v333, %v337
  %v340 = vshrl.u32 %v43, 16
  %v342 = vrot.slane %v340, 4
  %v343 = vshll.u32 %v43, 16
  %v345 = vrot.slane %v343, 5
  %v346 = vor.u32 %v342, %v345
  %v347 = vrot.slane %v346, 4
  %v349 = vshll.u32 %v44, 16
  %v351 = vrot.slane %v349, 5
  %v352 = vsel %vm240, %v347, %v351
  %v354 = vshrl.u32 %v47, 16
  %v356 = vrot.slane %v354, 4
  %v357 = vshll.u32 %v47, 16
  %v359 = vrot.slane %v357, 5
  %v360 = vor.u32 %v356, %v359
  %v361 = vrot.slane %v360, 4
  %v363 = vshll.u32 %v48, 16
  %v365 = vrot.slane %v363, 5
  %v366 = vsel %vm240, %v361, %v365
  %v368 = vshrl.u32 %v49, 16
  %v370 = vrot.slane %v368, 4
  %v371 = vshll.u32 %v49, 16
  %v373 = vrot.slane %v371, 5
  %v374 = vor.u32 %v370, %v373
  %v375 = vrot.slane %v374, 4
  %v377 = vshll.u32 %v50, 16
  %v379 = vrot.slane %v377, 5
  %v380 = vsel %vm240, %v375, %v379
  %v382 = vshrl.u32 %v51, 16
  %v384 = vrot.slane %v382, 4
  %v385 = vshll.u32 %v51, 16
  %v387 = vrot.slane %v385, 5
  %v388 = vor.u32 %v384, %v387
  %v389 = vrot.slane %v388, 4
  %v391 = vshll.u32 %v52, 16
  %v393 = vrot.slane %v391, 5
  %v394 = vsel %vm240, %v389, %v393
  %v396 = vshrl.u32 %v53, 16
  %v398 = vrot.slane %v396, 4
  %v399 = vshll.u32 %v53, 16
  %v401 = vrot.slane %v399, 5
  %v402 = vor.u32 %v398, %v401
  %v403 = vrot.slane %v402, 4
  %v405 = vshll.u32 %v54, 16
  %v407 = vrot.slane %v405, 5
  %v408 = vsel %vm240, %v403, %v407
  %v410 = vshrl.u32 %v55, 16
  %v412 = vrot.slane %v410, 4
  %v413 = vshll.u32 %v55, 16
  %v415 = vrot.slane %v413, 5
  %v416 = vor.u32 %v412, %v415
  %v417 = vrot.slane %v416, 4
  %v419 = vshll.u32 %v56, 16
  %v421 = vrot.slane %v419, 5
  %v422 = vsel %vm240, %v417, %v421
  %v424 = vshrl.u32 %v57, 16
  %v426 = vrot.slane %v424, 4
  %v427 = vshll.u32 %v57, 16
  %v429 = vrot.slane %v427, 5
  %v430 = vor.u32 %v426, %v429
  %v431 = vrot.slane %v430, 4
  %v433 = vshll.u32 %v58, 16
  %v435 = vrot.slane %v433, 5
  %v436 = vsel %vm240, %v431, %v435
  %v438 = vshrl.u32 %v59, 16
  %v440 = vrot.slane %v438, 4
  %v441 = vshll.u32 %v59, 16
  %v443 = vrot.slane %v441, 5
  %v444 = vor.u32 %v440, %v443
  %v445 = vrot.slane %v444, 4
  %v447 = vshll.u32 %v60, 16
  %v449 = vrot.slane %v447, 5
  %v450 = vsel %vm240, %v445, %v449
  %v452 = vshrl.u32 %v61, 16
  %v454 = vrot.slane %v452, 4
  %v455 = vshll.u32 %v61, 16
  %v457 = vrot.slane %v455, 5
  %v458 = vor.u32 %v454, %v457
  %v459 = vrot.slane %v458, 4
  %v461 = vshll.u32 %v62, 16
  %v463 = vrot.slane %v461, 5
  %v464 = vsel %vm240, %v459, %v463
  %v466 = vshrl.u32 %v65, 16
  %v468 = vrot.slane %v466, 4
  %v469 = vshll.u32 %v65, 16
  %v471 = vrot.slane %v469, 5
  %v472 = vor.u32 %v468, %v471
  %v473 = vrot.slane %v472, 4
  %v475 = vshll.u32 %v66, 16
  %v477 = vrot.slane %v475, 5
  %v478 = vsel %vm240, %v473, %v477
  %v480 = vshrl.u32 %v67, 16
  %v482 = vrot.slane %v480, 4
  %v483 = vshll.u32 %v67, 16
  %v485 = vrot.slane %v483, 5
  %v486 = vor.u32 %v482, %v485
  %v487 = vrot.slane %v486, 4
  %v489 = vshll.u32 %v68, 16
  %v491 = vrot.slane %v489, 5
  %v492 = vsel %vm240, %v487, %v491
  %v494 = vshrl.u32 %v69, 16
  %v496 = vrot.slane %v494, 4
  %v497 = vshll.u32 %v69, 16
  %v499 = vrot.slane %v497, 5
  %v500 = vor.u32 %v496, %v499
  %v501 = vrot.slane %v500, 4
  %v503 = vshll.u32 %v70, 16
  %v505 = vrot.slane %v503, 5
  %v506 = vsel %vm240, %v501, %v505
  %v508 = vshrl.u32 %v71, 16
  %v510 = vrot.slane %v508, 4
  %v511 = vshll.u32 %v71, 16
  %v513 = vrot.slane %v511, 5
  %v514 = vor.u32 %v510, %v513
  %v515 = vrot.slane %v514, 4
  %v517 = vshll.u32 %v72, 16
  %v519 = vrot.slane %v517, 5
  %v520 = vsel %vm240, %v515, %v519
  %v522 = vshrl.u32 %v73, 16
  %v524 = vrot.slane %v522, 4
  %v525 = vshll.u32 %v73, 16
  %v527 = vrot.slane %v525, 5
  %v528 = vor.u32 %v524, %v527
  %v529 = vrot.slane %v528, 4
  %v531 = vshll.u32 %v74, 16
  %v533 = vrot.slane %v531, 5
  %v534 = vsel %vm240, %v529, %v533
  %v536 = vshrl.u32 %v75, 16
  %v538 = vrot.slane %v536, 4
  %v539 = vshll.u32 %v75, 16
  %v541 = vrot.slane %v539, 5
  %v542 = vor.u32 %v538, %v541
  %v543 = vrot.slane %v542, 4
  %v545 = vshll.u32 %v76, 16
  %v547 = vrot.slane %v545, 5
  %v548 = vsel %vm240, %v543, %v547
  %v550 = vshrl.u32 %v77, 16
  %v552 = vrot.slane %v550, 4
  %v553 = vshll.u32 %v77, 16
  %v555 = vrot.slane %v553, 5
  %v556 = vor.u32 %v552, %v555
  %v557 = vrot.slane %v556, 4
  %v559 = vshll.u32 %v78, 16
  %v561 = vrot.slane %v559, 5
  %v562 = vsel %vm240, %v557, %v561
  %v564 = vshrl.u32 %v79, 16
  %v566 = vrot.slane %v564, 4
  %v567 = vshll.u32 %v79, 16
  %v569 = vrot.slane %v567, 5
  %v570 = vor.u32 %v566, %v569
  %v571 = vrot.slane %v570, 4
  %v573 = vshll.u32 %v80, 16
  %v575 = vrot.slane %v573, 5
  %v576 = vsel %vm240, %v571, %v575
  %v578 = vshrl.u32 %v83, 16
  %v580 = vrot.slane %v578, 4
  %v581 = vshll.u32 %v83, 16
  %v583 = vrot.slane %v581, 5
  %v584 = vor.u32 %v580, %v583
  %v585 = vrot.slane %v584, 4
  %v587 = vshll.u32 %v84, 16
  %v589 = vrot.slane %v587, 5
  %v590 = vsel %vm240, %v585, %v589
  %v592 = vshrl.u32 %v85, 16
  %v594 = vrot.slane %v592, 4
  %v595 = vshll.u32 %v85, 16
  %v597 = vrot.slane %v595, 5
  %v598 = vor.u32 %v594, %v597
  %v599 = vrot.slane %v598, 4
  %v601 = vshll.u32 %v86, 16
  %v603 = vrot.slane %v601, 5
  %v604 = vsel %vm240, %v599, %v603
  %v606 = vshrl.u32 %v87, 16
  %v608 = vrot.slane %v606, 4
  %v609 = vshll.u32 %v87, 16
  %v611 = vrot.slane %v609, 5
  %v612 = vor.u32 %v608, %v611
  %v613 = vrot.slane %v612, 4
  %v615 = vshll.u32 %v88, 16
  %v617 = vrot.slane %v615, 5
  %v618 = vsel %vm240, %v613, %v617
  %v620 = vshrl.u32 %v89, 16
  %v622 = vrot.slane %v620, 4
  %v623 = vshll.u32 %v89, 16
  %v625 = vrot.slane %v623, 5
  %v626 = vor.u32 %v622, %v625
  %v627 = vrot.slane %v626, 4
  %v629 = vshll.u32 %v90, 16
  %v631 = vrot.slane %v629, 5
  %v632 = vsel %vm240, %v627, %v631
  %v634 = vshrl.u32 %v91, 16
  %v636 = vrot.slane %v634, 4
  %v637 = vshll.u32 %v91, 16
  %v639 = vrot.slane %v637, 5
  %v640 = vor.u32 %v636, %v639
  %v641 = vrot.slane %v640, 4
  %v643 = vshll.u32 %v92, 16
  %v645 = vrot.slane %v643, 5
  %v646 = vsel %vm240, %v641, %v645
  %v648 = vshrl.u32 %v93, 16
  %v650 = vrot.slane %v648, 4
  %v651 = vshll.u32 %v93, 16
  %v653 = vrot.slane %v651, 5
  %v654 = vor.u32 %v650, %v653
  %v655 = vrot.slane %v654, 4
  %v657 = vshll.u32 %v94, 16
  %v659 = vrot.slane %v657, 5
  %v660 = vsel %vm240, %v655, %v659
  %v662 = vshrl.u32 %v95, 16
  %v664 = vrot.slane %v662, 4
  %v665 = vshll.u32 %v95, 16
  %v667 = vrot.slane %v665, 5
  %v668 = vor.u32 %v664, %v667
  %v669 = vrot.slane %v668, 4
  %v671 = vshll.u32 %v96, 16
  %v673 = vrot.slane %v671, 5
  %v674 = vsel %vm240, %v669, %v673
  %v676 = vshrl.u32 %v97, 16
  %v678 = vrot.slane %v676, 4
  %v679 = vshll.u32 %v97, 16
  %v681 = vrot.slane %v679, 5
  %v682 = vor.u32 %v678, %v681
  %v683 = vrot.slane %v682, 4
  %v685 = vshll.u32 %v98, 16
  %v687 = vrot.slane %v685, 5
  %v688 = vsel %vm240, %v683, %v687
  %v690 = vshrl.u32 %v101, 16
  %v692 = vrot.slane %v690, 4
  %v693 = vshll.u32 %v101, 16
  %v695 = vrot.slane %v693, 5
  %v696 = vor.u32 %v692, %v695
  %v697 = vrot.slane %v696, 4
  %v699 = vshll.u32 %v102, 16
  %v701 = vrot.slane %v699, 5
  %v702 = vsel %vm240, %v697, %v701
  %v704 = vshrl.u32 %v103, 16
  %v706 = vrot.slane %v704, 4
  %v707 = vshll.u32 %v103, 16
  %v709 = vrot.slane %v707, 5
  %v710 = vor.u32 %v706, %v709
  %v711 = vrot.slane %v710, 4
  %v713 = vshll.u32 %v104, 16
  %v715 = vrot.slane %v713, 5
  %v716 = vsel %vm240, %v711, %v715
  %v718 = vshrl.u32 %v105, 16
  %v720 = vrot.slane %v718, 4
  %v721 = vshll.u32 %v105, 16
  %v723 = vrot.slane %v721, 5
  %v724 = vor.u32 %v720, %v723
  %v725 = vrot.slane %v724, 4
  %v727 = vshll.u32 %v106, 16
  %v729 = vrot.slane %v727, 5
  %v730 = vsel %vm240, %v725, %v729
  %v732 = vshrl.u32 %v107, 16
  %v734 = vrot.slane %v732, 4
  %v735 = vshll.u32 %v107, 16
  %v737 = vrot.slane %v735, 5
  %v738 = vor.u32 %v734, %v737
  %v739 = vrot.slane %v738, 4
  %v741 = vshll.u32 %v108, 16
  %v743 = vrot.slane %v741, 5
  %v744 = vsel %vm240, %v739, %v743
  %v746 = vshrl.u32 %v109, 16
  %v748 = vrot.slane %v746, 4
  %v749 = vshll.u32 %v109, 16
  %v751 = vrot.slane %v749, 5
  %v752 = vor.u32 %v748, %v751
  %v753 = vrot.slane %v752, 4
  %v755 = vshll.u32 %v110, 16
  %v757 = vrot.slane %v755, 5
  %v758 = vsel %vm240, %v753, %v757
  %v760 = vshrl.u32 %v111, 16
  %v762 = vrot.slane %v760, 4
  %v763 = vshll.u32 %v111, 16
  %v765 = vrot.slane %v763, 5
  %v766 = vor.u32 %v762, %v765
  %v767 = vrot.slane %v766, 4
  %v769 = vshll.u32 %v112, 16
  %v771 = vrot.slane %v769, 5
  %v772 = vsel %vm240, %v767, %v771
  %v774 = vshrl.u32 %v113, 16
  %v776 = vrot.slane %v774, 4
  %v777 = vshll.u32 %v113, 16
  %v779 = vrot.slane %v777, 5
  %v780 = vor.u32 %v776, %v779
  %v781 = vrot.slane %v780, 4
  %v783 = vshll.u32 %v114, 16
  %v785 = vrot.slane %v783, 5
  %v786 = vsel %vm240, %v781, %v785
  %v788 = vshrl.u32 %v115, 16
  %v790 = vrot.slane %v788, 4
  %v791 = vshll.u32 %v115, 16
  %v793 = vrot.slane %v791, 5
  %v794 = vor.u32 %v790, %v793
  %v795 = vrot.slane %v794, 4
  %v797 = vshll.u32 %v116, 16
  %v799 = vrot.slane %v797, 5
  %v800 = vsel %vm240, %v795, %v799
  %v802 = vshrl.u32 %v119, 16
  %v804 = vrot.slane %v802, 4
  %v805 = vshll.u32 %v119, 16
  %v807 = vrot.slane %v805, 5
  %v808 = vor.u32 %v804, %v807
  %v809 = vrot.slane %v808, 4
  %v811 = vshll.u32 %v120, 16
  %v813 = vrot.slane %v811, 5
  %v814 = vsel %vm240, %v809, %v813
  %v816 = vshrl.u32 %v121, 16
  %v818 = vrot.slane %v816, 4
  %v819 = vshll.u32 %v121, 16
  %v821 = vrot.slane %v819, 5
  %v822 = vor.u32 %v818, %v821
  %v823 = vrot.slane %v822, 4
  %v825 = vshll.u32 %v122, 16
  %v827 = vrot.slane %v825, 5
  %v828 = vsel %vm240, %v823, %v827
  %v830 = vshrl.u32 %v123, 16
  %v832 = vrot.slane %v830, 4
  %v833 = vshll.u32 %v123, 16
  %v835 = vrot.slane %v833, 5
  %v836 = vor.u32 %v832, %v835
  %v837 = vrot.slane %v836, 4
  %v839 = vshll.u32 %v124, 16
  %v841 = vrot.slane %v839, 5
  %v842 = vsel %vm240, %v837, %v841
  %v844 = vshrl.u32 %v125, 16
  %v846 = vrot.slane %v844, 4
  %v847 = vshll.u32 %v125, 16
  %v849 = vrot.slane %v847, 5
  %v850 = vor.u32 %v846, %v849
  %v851 = vrot.slane %v850, 4
  %v853 = vshll.u32 %v126, 16
  %v855 = vrot.slane %v853, 5
  %v856 = vsel %vm240, %v851, %v855
  %v858 = vshrl.u32 %v127, 16
  %v860 = vrot.slane %v858, 4
  %v861 = vshll.u32 %v127, 16
  %v863 = vrot.slane %v861, 5
  %v864 = vor.u32 %v860, %v863
  %v865 = vrot.slane %v864, 4
  %v867 = vshll.u32 %v128, 16
  %v869 = vrot.slane %v867, 5
  %v870 = vsel %vm240, %v865, %v869
  %v872 = vshrl.u32 %v129, 16
  %v874 = vrot.slane %v872, 4
  %v875 = vshll.u32 %v129, 16
  %v877 = vrot.slane %v875, 5
  %v878 = vor.u32 %v874, %v877
  %v879 = vrot.slane %v878, 4
  %v881 = vshll.u32 %v130, 16
  %v883 = vrot.slane %v881, 5
  %v884 = vsel %vm240, %v879, %v883
  %v886 = vshrl.u32 %v131, 16
  %v888 = vrot.slane %v886, 4
  %v889 = vshll.u32 %v131, 16
  %v891 = vrot.slane %v889, 5
  %v892 = vor.u32 %v888, %v891
  %v893 = vrot.slane %v892, 4
  %v895 = vshll.u32 %v132, 16
  %v897 = vrot.slane %v895, 5
  %v898 = vsel %vm240, %v893, %v897
  %v900 = vshrl.u32 %v133, 16
  %v902 = vrot.slane %v900, 4
  %v903 = vshll.u32 %v133, 16
  %v905 = vrot.slane %v903, 5
  %v906 = vor.u32 %v902, %v905
  %v907 = vrot.slane %v906, 4
  %v909 = vshll.u32 %v134, 16
  %v911 = vrot.slane %v909, 5
  %v912 = vsel %vm240, %v907, %v911
  %v914 = vshrl.u32 %v137, 16
  %v916 = vrot.slane %v914, 4
  %v917 = vshll.u32 %v137, 16
  %v919 = vrot.slane %v917, 5
  %v920 = vor.u32 %v916, %v919
  %v921 = vrot.slane %v920, 4
  %v923 = vshll.u32 %v138, 16
  %v925 = vrot.slane %v923, 5
  %v926 = vsel %vm240, %v921, %v925
  %v928 = vshrl.u32 %v139, 16
  %v930 = vrot.slane %v928, 4
  %v931 = vshll.u32 %v139, 16
  %v933 = vrot.slane %v931, 5
  %v934 = vor.u32 %v930, %v933
  %v935 = vrot.slane %v934, 4
  %v937 = vshll.u32 %v140, 16
  %v939 = vrot.slane %v937, 5
  %v940 = vsel %vm240, %v935, %v939
  %v942 = vshrl.u32 %v141, 16
  %v944 = vrot.slane %v942, 4
  %v945 = vshll.u32 %v141, 16
  %v947 = vrot.slane %v945, 5
  %v948 = vor.u32 %v944, %v947
  %v949 = vrot.slane %v948, 4
  %v951 = vshll.u32 %v142, 16
  %v953 = vrot.slane %v951, 5
  %v954 = vsel %vm240, %v949, %v953
  %v956 = vshrl.u32 %v143, 16
  %v958 = vrot.slane %v956, 4
  %v959 = vshll.u32 %v143, 16
  %v961 = vrot.slane %v959, 5
  %v962 = vor.u32 %v958, %v961
  %v963 = vrot.slane %v962, 4
  %v965 = vshll.u32 %v144, 16
  %v967 = vrot.slane %v965, 5
  %v968 = vsel %vm240, %v963, %v967
  %v970 = vshrl.u32 %v145, 16
  %v972 = vrot.slane %v970, 4
  %v973 = vshll.u32 %v145, 16
  %v975 = vrot.slane %v973, 5
  %v976 = vor.u32 %v972, %v975
  %v977 = vrot.slane %v976, 4
  %v979 = vshll.u32 %v146, 16
  %v981 = vrot.slane %v979, 5
  %v982 = vsel %vm240, %v977, %v981
  %v984 = vshrl.u32 %v147, 16
  %v986 = vrot.slane %v984, 4
  %v987 = vshll.u32 %v147, 16
  %v989 = vrot.slane %v987, 5
  %v990 = vor.u32 %v986, %v989
  %v991 = vrot.slane %v990, 4
  %v993 = vshll.u32 %v148, 16
  %v995 = vrot.slane %v993, 5
  %v996 = vsel %vm240, %v991, %v995
  %v998 = vshrl.u32 %v149, 16
  %v1000 = vrot.slane %v998, 4
  %v1001 = vshll.u32 %v149, 16
  %v1003 = vrot.slane %v1001, 5
  %v1004 = vor.u32 %v1000, %v1003
  %v1005 = vrot.slane %v1004, 4
  %v1007 = vshll.u32 %v150, 16
  %v1009 = vrot.slane %v1007, 5
  %v1010 = vsel %vm240, %v1005, %v1009
  %v1012 = vshrl.u32 %v151, 16
  %v1014 = vrot.slane %v1012, 4
  %v1015 = vshll.u32 %v151, 16
  %v1017 = vrot.slane %v1015, 5
  %v1018 = vor.u32 %v1014, %v1017
  %v1019 = vrot.slane %v1018, 4
  %v1021 = vshll.u32 %v152, 16
  %v1023 = vrot.slane %v1021, 5
  %v1024 = vsel %vm240, %v1019, %v1023
  %v1026 = vshrl.u32 %v155, 16
  %v1028 = vrot.slane %v1026, 4
  %v1029 = vshll.u32 %v155, 16
  %v1031 = vrot.slane %v1029, 5
  %v1032 = vor.u32 %v1028, %v1031
  %v1033 = vrot.slane %v1032, 4
  %v1035 = vshll.u32 %v156, 16
  %v1037 = vrot.slane %v1035, 5
  %v1038 = vsel %vm240, %v1033, %v1037
  %v1040 = vshrl.u32 %v157, 16
  %v1042 = vrot.slane %v1040, 4
  %v1043 = vshll.u32 %v157, 16
  %v1045 = vrot.slane %v1043, 5
  %v1046 = vor.u32 %v1042, %v1045
  %v1047 = vrot.slane %v1046, 4
  %v1049 = vshll.u32 %v158, 16
  %v1051 = vrot.slane %v1049, 5
  %v1052 = vsel %vm240, %v1047, %v1051
  %v1054 = vshrl.u32 %v159, 16
  %v1056 = vrot.slane %v1054, 4
  %v1057 = vshll.u32 %v159, 16
  %v1059 = vrot.slane %v1057, 5
  %v1060 = vor.u32 %v1056, %v1059
  %v1061 = vrot.slane %v1060, 4
  %v1063 = vshll.u32 %v160, 16
  %v1065 = vrot.slane %v1063, 5
  %v1066 = vsel %vm240, %v1061, %v1065
  %v1068 = vshrl.u32 %v161, 16
  %v1070 = vrot.slane %v1068, 4
  %v1071 = vshll.u32 %v161, 16
  %v1073 = vrot.slane %v1071, 5
  %v1074 = vor.u32 %v1070, %v1073
  %v1075 = vrot.slane %v1074, 4
  %v1077 = vshll.u32 %v162, 16
  %v1079 = vrot.slane %v1077, 5
  %v1080 = vsel %vm240, %v1075, %v1079
  %v1082 = vshrl.u32 %v163, 16
  %v1084 = vrot.slane %v1082, 4
  %v1085 = vshll.u32 %v163, 16
  %v1087 = vrot.slane %v1085, 5
  %v1088 = vor.u32 %v1084, %v1087
  %v1089 = vrot.slane %v1088, 4
  %v1091 = vshll.u32 %v164, 16
  %v1093 = vrot.slane %v1091, 5
  %v1094 = vsel %vm240, %v1089, %v1093
  %v1096 = vshrl.u32 %v165, 16
  %v1098 = vrot.slane %v1096, 4
  %v1099 = vshll.u32 %v165, 16
  %v1101 = vrot.slane %v1099, 5
  %v1102 = vor.u32 %v1098, %v1101
  %v1103 = vrot.slane %v1102, 4
  %v1105 = vshll.u32 %v166, 16
  %v1107 = vrot.slane %v1105, 5
  %v1108 = vsel %vm240, %v1103, %v1107
  %v1110 = vshrl.u32 %v167, 16
  %v1112 = vrot.slane %v1110, 4
  %v1113 = vshll.u32 %v167, 16
  %v1115 = vrot.slane %v1113, 5
  %v1116 = vor.u32 %v1112, %v1115
  %v1117 = vrot.slane %v1116, 4
  %v1119 = vshll.u32 %v168, 16
  %v1121 = vrot.slane %v1119, 5
  %v1122 = vsel %vm240, %v1117, %v1121
  %v1124 = vshrl.u32 %v169, 16
  %v1126 = vrot.slane %v1124, 4
  %v1127 = vshll.u32 %v169, 16
  %v1129 = vrot.slane %v1127, 5
  %v1130 = vor.u32 %v1126, %v1129
  %v1131 = vrot.slane %v1130, 4
  %v1133 = vshll.u32 %v170, 16
  %v1135 = vrot.slane %v1133, 5
  %v1136 = vsel %vm240, %v1131, %v1135
  %1137 = vrot.lane.b32.xlu0 %v254, 12
  %v1138 = vpop.permute.xlu0 %1137
  %1139 = vrot.lane.b32.xlu0 %v268, 12
  %v1140 = vpop.permute.xlu0 %1139
  %1141 = vrot.lane.b32.xlu0 %v282, 12
  %v1142 = vpop.permute.xlu0 %1141
  %1143 = vrot.lane.b32.xlu0 %v296, 12
  %v1144 = vpop.permute.xlu0 %1143
  %1145 = vrot.lane.b32.xlu0 %v310, 12
  %v1146 = vpop.permute.xlu0 %1145
  %1147 = vrot.lane.b32.xlu0 %v324, 12
  %v1148 = vpop.permute.xlu0 %1147
  %1149 = vrot.lane.b32.xlu0 %v338, 12
  %v1150 = vpop.permute.xlu0 %1149
  %1151 = vrot.lane.b32.xlu0 %v352, 12
  %v1152 = vpop.permute.xlu0 %1151
  %1153 = vrot.lane.b32.xlu0 %v366, 12
  %v1154 = vpop.permute.xlu0 %1153
  %1155 = vrot.lane.b32.xlu0 %v380, 12
  %v1156 = vpop.permute.xlu0 %1155
  %1157 = vrot.lane.b32.xlu0 %v394, 12
  %v1158 = vpop.permute.xlu0 %1157
  %1159 = vrot.lane.b32.xlu0 %v408, 12
  %v1160 = vpop.permute.xlu0 %1159
  %1161 = vrot.lane.b32.xlu0 %v422, 12
  %v1162 = vpop.permute.xlu0 %1161
  %1163 = vrot.lane.b32.xlu0 %v436, 12
  %v1164 = vpop.permute.xlu0 %1163
  %1165 = vrot.lane.b32.xlu0 %v450, 12
  %v1166 = vpop.permute.xlu0 %1165
  %1167 = vrot.lane.b32.xlu0 %v464, 12
  %v1168 = vpop.permute.xlu0 %1167
  %1169 = vrot.lane.b32.xlu0 %v478, 12
  %v1170 = vpop.permute.xlu0 %1169
  %1171 = vrot.lane.b32.xlu0 %v492, 12
  %v1172 = vpop.permute.xlu0 %1171
  %1173 = vrot.lane.b32.xlu0 %v506, 12
  %v1174 = vpop.permute.xlu0 %1173
  %1175 = vrot.lane.b32.xlu0 %v520, 12
  %v1176 = vpop.permute.xlu0 %1175
  %1177 = vrot.lane.b32.xlu0 %v534, 12
  %v1178 = vpop.permute.xlu0 %1177
  %1179 = vrot.lane.b32.xlu0 %v548, 12
  %v1180 = vpop.permute.xlu0 %1179
  %1181 = vrot.lane.b32.xlu0 %v562, 12
  %v1182 = vpop.permute.xlu0 %1181
  %1183 = vrot.lane.b32.xlu0 %v576, 12
  %v1184 = vpop.permute.xlu0 %1183
  %1185 = vrot.lane.b32.xlu0 %v590, 12
  %v1186 = vpop.permute.xlu0 %1185
  %1187 = vrot.lane.b32.xlu0 %v604, 12
  %v1188 = vpop.permute.xlu0 %1187
  %1189 = vrot.lane.b32.xlu0 %v618, 12
  %v1190 = vpop.permute.xlu0 %1189
  %1191 = vrot.lane.b32.xlu0 %v632, 12
  %v1192 = vpop.permute.xlu0 %1191
  %1193 = vrot.lane.b32.xlu0 %v646, 12
  %v1194 = vpop.permute.xlu0 %1193
  %1195 = vrot.lane.b32.xlu0 %v660, 12
  %v1196 = vpop.permute.xlu0 %1195
  %1197 = vrot.lane.b32.xlu0 %v674, 12
  %v1198 = vpop.permute.xlu0 %1197
  %1199 = vrot.lane.b32.xlu0 %v688, 12
  %v1200 = vpop.permute.xlu0 %1199
  %1201 = vrot.lane.b32.xlu0 %v702, 12
  %v1202 = vpop.permute.xlu0 %1201
  %1203 = vrot.lane.b32.xlu0 %v716, 12
  %v1204 = vpop.permute.xlu0 %1203
  %1205 = vrot.lane.b32.xlu0 %v730, 12
  %v1206 = vpop.permute.xlu0 %1205
  %1207 = vrot.lane.b32.xlu0 %v744, 12
  %v1208 = vpop.permute.xlu0 %1207
  %1209 = vrot.lane.b32.xlu0 %v758, 12
  %v1210 = vpop.permute.xlu0 %1209
  %1211 = vrot.lane.b32.xlu0 %v772, 12
  %v1212 = vpop.permute.xlu0 %1211
  %1213 = vrot.lane.b32.xlu0 %v786, 12
  %v1214 = vpop.permute.xlu0 %1213
  %1215 = vrot.lane.b32.xlu0 %v800, 12
  %v1216 = vpop.permute.xlu0 %1215
  %1217 = vrot.lane.b32.xlu0 %v814, 12
  %v1218 = vpop.permute.xlu0 %1217
  %1219 = vrot.lane.b32.xlu0 %v828, 12
  %v1220 = vpop.permute.xlu0 %1219
  %1221 = vrot.lane.b32.xlu0 %v842, 12
  %v1222 = vpop.permute.xlu0 %1221
  %1223 = vrot.lane.b32.xlu0 %v856, 12
  %v1224 = vpop.permute.xlu0 %1223
  %1225 = vrot.lane.b32.xlu0 %v870, 12
  %v1226 = vpop.permute.xlu0 %1225
  %1227 = vrot.lane.b32.xlu0 %v884, 12
  %v1228 = vpop.permute.xlu0 %1227
  %1229 = vrot.lane.b32.xlu0 %v898, 12
  %v1230 = vpop.permute.xlu0 %1229
  %1231 = vrot.lane.b32.xlu0 %v912, 12
  %v1232 = vpop.permute.xlu0 %1231
  %1233 = vrot.lane.b32.xlu0 %v926, 12
  %v1234 = vpop.permute.xlu0 %1233
  %1235 = vrot.lane.b32.xlu0 %v940, 12
  %v1236 = vpop.permute.xlu0 %1235
  %1237 = vrot.lane.b32.xlu0 %v954, 12
  %v1238 = vpop.permute.xlu0 %1237
  %1239 = vrot.lane.b32.xlu0 %v968, 12
  %v1240 = vpop.permute.xlu0 %1239
  %1241 = vrot.lane.b32.xlu0 %v982, 12
  %v1242 = vpop.permute.xlu0 %1241
  %1243 = vrot.lane.b32.xlu0 %v996, 12
  %v1244 = vpop.permute.xlu0 %1243
  %1245 = vrot.lane.b32.xlu0 %v1010, 12
  %v1246 = vpop.permute.xlu0 %1245
  %1247 = vrot.lane.b32.xlu0 %v1024, 12
  %v1248 = vpop.permute.xlu0 %1247
  %1249 = vrot.lane.b32.xlu0 %v1038, 12
  %v1250 = vpop.permute.xlu0 %1249
  %1251 = vrot.lane.b32.xlu0 %v1052, 12
  %v1252 = vpop.permute.xlu0 %1251
  %1253 = vrot.lane.b32.xlu0 %v1066, 12
  %v1254 = vpop.permute.xlu0 %1253
  %1255 = vrot.lane.b32.xlu0 %v1080, 12
  %v1256 = vpop.permute.xlu0 %1255
  %1257 = vrot.lane.b32.xlu0 %v1094, 12
  %v1258 = vpop.permute.xlu0 %1257
  %1259 = vrot.lane.b32.xlu0 %v1108, 12
  %v1260 = vpop.permute.xlu0 %1259
  %1261 = vrot.lane.b32.xlu0 %v1122, 12
  %v1262 = vpop.permute.xlu0 %1261
  %1263 = vrot.lane.b32.xlu0 %v1136, 12
  %v1264 = vpop.permute.xlu0 %1263
  %vm1329 = vcmask 191584
  %1330 = vst.msk [vmem:[#allocation2] sm:$0xf] %vm1329, %v1138
  %1331 = vst.msk [vmem:[#allocation2 + $0x4] sm:$0xf] %vm1329, %v1140
  %1332 = vst.msk [vmem:[#allocation2 + $0x8] sm:$0xf] %vm1329, %v1142
  %1333 = vst.msk [vmem:[#allocation2 + $0xc] sm:$0xf] %vm1329, %v1144
  %1334 = vst.msk [vmem:[#allocation2 + $0x10] sm:$0xf] %vm1329, %v1146
  %1335 = vst.msk [vmem:[#allocation2 + $0x14] sm:$0xf] %vm1329, %v1148
  %1336 = vst.msk [vmem:[#allocation2 + $0x18] sm:$0xf] %vm1329, %v1150
  %1337 = vst.msk [vmem:[#allocation2 + $0x1c] sm:$0xf] %vm1329, %v1152
  %1338 = vst.msk [vmem:[#allocation2 + $0x20] sm:$0xf] %vm1329, %v1154
  %1339 = vst.msk [vmem:[#allocation2 + $0x24] sm:$0xf] %vm1329, %v1156
  %1340 = vst.msk [vmem:[#allocation2 + $0x28] sm:$0xf] %vm1329, %v1158
  %1341 = vst.msk [vmem:[#allocation2 + $0x2c] sm:$0xf] %vm1329, %v1160
  %1342 = vst.msk [vmem:[#allocation2 + $0x30] sm:$0xf] %vm1329, %v1162
  %1343 = vst.msk [vmem:[#allocation2 + $0x34] sm:$0xf] %vm1329, %v1164
  %1344 = vst.msk [vmem:[#allocation2 + $0x38] sm:$0xf] %vm1329, %v1166
  %1345 = vst.msk [vmem:[#allocation2 + $0x3c] sm:$0xf] %vm1329, %v1168
  %1346 = vst.msk [vmem:[#allocation2 + $0x40] sm:$0xf] %vm1329, %v1170
  %1347 = vst.msk [vmem:[#allocation2 + $0x44] sm:$0xf] %vm1329, %v1172
  %1348 = vst.msk [vmem:[#allocation2 + $0x48] sm:$0xf] %vm1329, %v1174
  %1349 = vst.msk [vmem:[#allocation2 + $0x4c] sm:$0xf] %vm1329, %v1176
  %1350 = vst.msk [vmem:[#allocation2 + $0x50] sm:$0xf] %vm1329, %v1178
  %1351 = vst.msk [vmem:[#allocation2 + $0x54] sm:$0xf] %vm1329, %v1180
  %1352 = vst.msk [vmem:[#allocation2 + $0x58] sm:$0xf] %vm1329, %v1182
  %1353 = vst.msk [vmem:[#allocation2 + $0x5c] sm:$0xf] %vm1329, %v1184
  %1354 = vst.msk [vmem:[#allocation2 + $0x60] sm:$0xf] %vm1329, %v1186
  %1355 = vst.msk [vmem:[#allocation2 + $0x64] sm:$0xf] %vm1329, %v1188
  %1356 = vst.msk [vmem:[#allocation2 + $0x68] sm:$0xf] %vm1329, %v1190
  %1357 = vst.msk [vmem:[#allocation2 + $0x6c] sm:$0xf] %vm1329, %v1192
  %1358 = vst.msk [vmem:[#allocation2 + $0x70] sm:$0xf] %vm1329, %v1194
  %1359 = vst.msk [vmem:[#allocation2 + $0x74] sm:$0xf] %vm1329, %v1196
  %1360 = vst.msk [vmem:[#allocation2 + $0x78] sm:$0xf] %vm1329, %v1198
  %1361 = vst.msk [vmem:[#allocation2 + $0x7c] sm:$0xf] %vm1329, %v1200
  %1362 = vst.msk [vmem:[#allocation2 + $0x80] sm:$0xf] %vm1329, %v1202
  %1363 = vst.msk [vmem:[#allocation2 + $0x84] sm:$0xf] %vm1329, %v1204
  %1364 = vst.msk [vmem:[#allocation2 + $0x88] sm:$0xf] %vm1329, %v1206
  %1365 = vst.msk [vmem:[#allocation2 + $0x8c] sm:$0xf] %vm1329, %v1208
  %1366 = vst.msk [vmem:[#allocation2 + $0x90] sm:$0xf] %vm1329, %v1210
  %1367 = vst.msk [vmem:[#allocation2 + $0x94] sm:$0xf] %vm1329, %v1212
  %1368 = vst.msk [vmem:[#allocation2 + $0x98] sm:$0xf] %vm1329, %v1214
  %1369 = vst.msk [vmem:[#allocation2 + $0x9c] sm:$0xf] %vm1329, %v1216
  %1370 = vst.msk [vmem:[#allocation2 + $0xa0] sm:$0xf] %vm1329, %v1218
  %1371 = vst.msk [vmem:[#allocation2 + $0xa4] sm:$0xf] %vm1329, %v1220
  %1372 = vst.msk [vmem:[#allocation2 + $0xa8] sm:$0xf] %vm1329, %v1222
  %1373 = vst.msk [vmem:[#allocation2 + $0xac] sm:$0xf] %vm1329, %v1224
  %1374 = vst.msk [vmem:[#allocation2 + $0xb0] sm:$0xf] %vm1329, %v1226
  %1375 = vst.msk [vmem:[#allocation2 + $0xb4] sm:$0xf] %vm1329, %v1228
  %1376 = vst.msk [vmem:[#allocation2 + $0xb8] sm:$0xf] %vm1329, %v1230
  %1377 = vst.msk [vmem:[#allocation2 + $0xbc] sm:$0xf] %vm1329, %v1232
  %1378 = vst.msk [vmem:[#allocation2 + $0xc0] sm:$0xf] %vm1329, %v1234
  %1379 = vst.msk [vmem:[#allocation2 + $0xc4] sm:$0xf] %vm1329, %v1236
  %1380 = vst.msk [vmem:[#allocation2 + $0xc8] sm:$0xf] %vm1329, %v1238
  %1381 = vst.msk [vmem:[#allocation2 + $0xcc] sm:$0xf] %vm1329, %v1240
  %1382 = vst.msk [vmem:[#allocation2 + $0xd0] sm:$0xf] %vm1329, %v1242
  %1383 = vst.msk [vmem:[#allocation2 + $0xd4] sm:$0xf] %vm1329, %v1244
  %1384 = vst.msk [vmem:[#allocation2 + $0xd8] sm:$0xf] %vm1329, %v1246
  %1385 = vst.msk [vmem:[#allocation2 + $0xdc] sm:$0xf] %vm1329, %v1248
  %1386 = vst.msk [vmem:[#allocation2 + $0xe0] sm:$0xf] %vm1329, %v1250
  %1387 = vst.msk [vmem:[#allocation2 + $0xe4] sm:$0xf] %vm1329, %v1252
  %1388 = vst.msk [vmem:[#allocation2 + $0xe8] sm:$0xf] %vm1329, %v1254
  %1389 = vst.msk [vmem:[#allocation2 + $0xec] sm:$0xf] %vm1329, %v1256
  %1390 = vst.msk [vmem:[#allocation2 + $0xf0] sm:$0xf] %vm1329, %v1258
  %1391 = vst.msk [vmem:[#allocation2 + $0xf4] sm:$0xf] %vm1329, %v1260
  %1392 = vst.msk [vmem:[#allocation2 + $0xf8] sm:$0xf] %vm1329, %v1262
  %1393 = vst.msk [vmem:[#allocation2 + $0xfc] sm:$0xf] %vm1329, %v1264
  %1458 = vrot.lane.b32.xlu0 %v31, 24
  %v1459 = vpop.permute.xlu0 %1458
  %1460 = vrot.lane.b32.xlu0 %v33, 24
  %v1461 = vpop.permute.xlu0 %1460
  %1462 = vrot.lane.b32.xlu0 %v35, 24
  %v1463 = vpop.permute.xlu0 %1462
  %1464 = vrot.lane.b32.xlu0 %v37, 24
  %v1465 = vpop.permute.xlu0 %1464
  %1466 = vrot.lane.b32.xlu0 %v39, 24
  %v1467 = vpop.permute.xlu0 %1466
  %1468 = vrot.lane.b32.xlu0 %v41, 24
  %v1469 = vpop.permute.xlu0 %1468
  %1470 = vrot.lane.b32.xlu0 %v43, 24
  %v1471 = vpop.permute.xlu0 %1470
  %1472 = vrot.lane.b32.xlu0 %v45, 24
  %v1473 = vpop.permute.xlu0 %1472
  %1474 = vrot.lane.b32.xlu0 %v49, 24
  %v1475 = vpop.permute.xlu0 %1474
  %1476 = vrot.lane.b32.xlu0 %v51, 24
  %v1477 = vpop.permute.xlu0 %1476
  %1478 = vrot.lane.b32.xlu0 %v53, 24
  %v1479 = vpop.permute.xlu0 %1478
  %1480 = vrot.lane.b32.xlu0 %v55, 24
  %v1481 = vpop.permute.xlu0 %1480
  %1482 = vrot.lane.b32.xlu0 %v57, 24
  %v1483 = vpop.permute.xlu0 %1482
  %1484 = vrot.lane.b32.xlu0 %v59, 24
  %v1485 = vpop.permute.xlu0 %1484
  %1486 = vrot.lane.b32.xlu0 %v61, 24
  %v1487 = vpop.permute.xlu0 %1486
  %1488 = vrot.lane.b32.xlu0 %v63, 24
  %v1489 = vpop.permute.xlu0 %1488
  %1490 = vrot.lane.b32.xlu0 %v67, 24
  %v1491 = vpop.permute.xlu0 %1490
  %1492 = vrot.lane.b32.xlu0 %v69, 24
  %v1493 = vpop.permute.xlu0 %1492
  %1494 = vrot.lane.b32.xlu0 %v71, 24
  %v1495 = vpop.permute.xlu0 %1494
  %1496 = vrot.lane.b32.xlu0 %v73, 24
  %v1497 = vpop.permute.xlu0 %1496
  %1498 = vrot.lane.b32.xlu0 %v75, 24
  %v1499 = vpop.permute.xlu0 %1498
  %1500 = vrot.lane.b32.xlu0 %v77, 24
  %v1501 = vpop.permute.xlu0 %1500
  %1502 = vrot.lane.b32.xlu0 %v79, 24
  %v1503 = vpop.permute.xlu0 %1502
  %1504 = vrot.lane.b32.xlu0 %v81, 24
  %v1505 = vpop.permute.xlu0 %1504
  %1506 = vrot.lane.b32.xlu0 %v85, 24
  %v1507 = vpop.permute.xlu0 %1506
  %1508 = vrot.lane.b32.xlu0 %v87, 24
  %v1509 = vpop.permute.xlu0 %1508
  %1510 = vrot.lane.b32.xlu0 %v89, 24
  %v1511 = vpop.permute.xlu0 %1510
  %1512 = vrot.lane.b32.xlu0 %v91, 24
  %v1513 = vpop.permute.xlu0 %1512
  %1514 = vrot.lane.b32.xlu0 %v93, 24
  %v1515 = vpop.permute.xlu0 %1514
  %1516 = vrot.lane.b32.xlu0 %v95, 24
  %v1517 = vpop.permute.xlu0 %1516
  %1518 = vrot.lane.b32.xlu0 %v97, 24
  %v1519 = vpop.permute.xlu0 %1518
  %1520 = vrot.lane.b32.xlu0 %v99, 24
  %v1521 = vpop.permute.xlu0 %1520
  %1522 = vrot.lane.b32.xlu0 %v103, 24
  %v1523 = vpop.permute.xlu0 %1522
  %1524 = vrot.lane.b32.xlu0 %v105, 24
  %v1525 = vpop.permute.xlu0 %1524
  %1526 = vrot.lane.b32.xlu0 %v107, 24
  %v1527 = vpop.permute.xlu0 %1526
  %1528 = vrot.lane.b32.xlu0 %v109, 24
  %v1529 = vpop.permute.xlu0 %1528
  %1530 = vrot.lane.b32.xlu0 %v111, 24
  %v1531 = vpop.permute.xlu0 %1530
  %1532 = vrot.lane.b32.xlu0 %v113, 24
  %v1533 = vpop.permute.xlu0 %1532
  %1534 = vrot.lane.b32.xlu0 %v115, 24
  %v1535 = vpop.permute.xlu0 %1534
  %1536 = vrot.lane.b32.xlu0 %v117, 24
  %v1537 = vpop.permute.xlu0 %1536
  %1538 = vrot.lane.b32.xlu0 %v121, 24
  %v1539 = vpop.permute.xlu0 %1538
  %1540 = vrot.lane.b32.xlu0 %v123, 24
  %v1541 = vpop.permute.xlu0 %1540
  %1542 = vrot.lane.b32.xlu0 %v125, 24
  %v1543 = vpop.permute.xlu0 %1542
  %1544 = vrot.lane.b32.xlu0 %v127, 24
  %v1545 = vpop.permute.xlu0 %1544
  %1546 = vrot.lane.b32.xlu0 %v129, 24
  %v1547 = vpop.permute.xlu0 %1546
  %1548 = vrot.lane.b32.xlu0 %v131, 24
  %v1549 = vpop.permute.xlu0 %1548
  %1550 = vrot.lane.b32.xlu0 %v133, 24
  %v1551 = vpop.permute.xlu0 %1550
  %1552 = vrot.lane.b32.xlu0 %v135, 24
  %v1553 = vpop.permute.xlu0 %1552
  %1554 = vrot.lane.b32.xlu0 %v139, 24
  %v1555 = vpop.permute.xlu0 %1554
  %1556 = vrot.lane.b32.xlu0 %v141, 24
  %v1557 = vpop.permute.xlu0 %1556
  %1558 = vrot.lane.b32.xlu0 %v143, 24
  %v1559 = vpop.permute.xlu0 %1558
  %1560 = vrot.lane.b32.xlu0 %v145, 24
  %v1561 = vpop.permute.xlu0 %1560
  %1562 = vrot.lane.b32.xlu0 %v147, 24
  %v1563 = vpop.permute.xlu0 %1562
  %1564 = vrot.lane.b32.xlu0 %v149, 24
  %v1565 = vpop.permute.xlu0 %1564
  %1566 = vrot.lane.b32.xlu0 %v151, 24
  %v1567 = vpop.permute.xlu0 %1566
  %1568 = vrot.lane.b32.xlu0 %v153, 24
  %v1569 = vpop.permute.xlu0 %1568
  %1570 = vrot.lane.b32.xlu0 %v157, 24
  %v1571 = vpop.permute.xlu0 %1570
  %1572 = vrot.lane.b32.xlu0 %v159, 24
  %v1573 = vpop.permute.xlu0 %1572
  %1574 = vrot.lane.b32.xlu0 %v161, 24
  %v1575 = vpop.permute.xlu0 %1574
  %1576 = vrot.lane.b32.xlu0 %v163, 24
  %v1577 = vpop.permute.xlu0 %1576
  %1578 = vrot.lane.b32.xlu0 %v165, 24
  %v1579 = vpop.permute.xlu0 %1578
  %1580 = vrot.lane.b32.xlu0 %v167, 24
  %v1581 = vpop.permute.xlu0 %1580
  %1582 = vrot.lane.b32.xlu0 %v169, 24
  %v1583 = vpop.permute.xlu0 %1582
  %1584 = vrot.lane.b32.xlu0 %v171, 24
  %v1585 = vpop.permute.xlu0 %1584
  %vm1650 = vcmask 289984
  %1651 = vst.msk [vmem:[#allocation2] sm:$0xf] %vm1650, %v1459
  %1652 = vst.msk [vmem:[#allocation2 + $0x4] sm:$0xf] %vm1650, %v1461
  %1653 = vst.msk [vmem:[#allocation2 + $0x8] sm:$0xf] %vm1650, %v1463
  %1654 = vst.msk [vmem:[#allocation2 + $0xc] sm:$0xf] %vm1650, %v1465
  %1655 = vst.msk [vmem:[#allocation2 + $0x10] sm:$0xf] %vm1650, %v1467
  %1656 = vst.msk [vmem:[#allocation2 + $0x14] sm:$0xf] %vm1650, %v1469
  %1657 = vst.msk [vmem:[#allocation2 + $0x18] sm:$0xf] %vm1650, %v1471
  %1658 = vst.msk [vmem:[#allocation2 + $0x1c] sm:$0xf] %vm1650, %v1473
  %1659 = vst.msk [vmem:[#allocation2 + $0x20] sm:$0xf] %vm1650, %v1475
  %1660 = vst.msk [vmem:[#allocation2 + $0x24] sm:$0xf] %vm1650, %v1477
  %1661 = vst.msk [vmem:[#allocation2 + $0x28] sm:$0xf] %vm1650, %v1479
  %1662 = vst.msk [vmem:[#allocation2 + $0x2c] sm:$0xf] %vm1650, %v1481
  %1663 = vst.msk [vmem:[#allocation2 + $0x30] sm:$0xf] %vm1650, %v1483
  %1664 = vst.msk [vmem:[#allocation2 + $0x34] sm:$0xf] %vm1650, %v1485
  %1665 = vst.msk [vmem:[#allocation2 + $0x38] sm:$0xf] %vm1650, %v1487
  %1666 = vst.msk [vmem:[#allocation2 + $0x3c] sm:$0xf] %vm1650, %v1489
  %1667 = vst.msk [vmem:[#allocation2 + $0x40] sm:$0xf] %vm1650, %v1491
  %1668 = vst.msk [vmem:[#allocation2 + $0x44] sm:$0xf] %vm1650, %v1493
  %1669 = vst.msk [vmem:[#allocation2 + $0x48] sm:$0xf] %vm1650, %v1495
  %1670 = vst.msk [vmem:[#allocation2 + $0x4c] sm:$0xf] %vm1650, %v1497
  %1671 = vst.msk [vmem:[#allocation2 + $0x50] sm:$0xf] %vm1650, %v1499
  %1672 = vst.msk [vmem:[#allocation2 + $0x54] sm:$0xf] %vm1650, %v1501
  %1673 = vst.msk [vmem:[#allocation2 + $0x58] sm:$0xf] %vm1650, %v1503
  %1674 = vst.msk [vmem:[#allocation2 + $0x5c] sm:$0xf] %vm1650, %v1505
  %1675 = vst.msk [vmem:[#allocation2 + $0x60] sm:$0xf] %vm1650, %v1507
  %1676 = vst.msk [vmem:[#allocation2 + $0x64] sm:$0xf] %vm1650, %v1509
  %1677 = vst.msk [vmem:[#allocation2 + $0x68] sm:$0xf] %vm1650, %v1511
  %1678 = vst.msk [vmem:[#allocation2 + $0x6c] sm:$0xf] %vm1650, %v1513
  %1679 = vst.msk [vmem:[#allocation2 + $0x70] sm:$0xf] %vm1650, %v1515
  %1680 = vst.msk [vmem:[#allocation2 + $0x74] sm:$0xf] %vm1650, %v1517
  %1681 = vst.msk [vmem:[#allocation2 + $0x78] sm:$0xf] %vm1650, %v1519
  %1682 = vst.msk [vmem:[#allocation2 + $0x7c] sm:$0xf] %vm1650, %v1521
  %1683 = vst.msk [vmem:[#allocation2 + $0x80] sm:$0xf] %vm1650, %v1523
  %1684 = vst.msk [vmem:[#allocation2 + $0x84] sm:$0xf] %vm1650, %v1525
  %1685 = vst.msk [vmem:[#allocation2 + $0x88] sm:$0xf] %vm1650, %v1527
  %1686 = vst.msk [vmem:[#allocation2 + $0x8c] sm:$0xf] %vm1650, %v1529
  %1687 = vst.msk [vmem:[#allocation2 + $0x90] sm:$0xf] %vm1650, %v1531
  %1688 = vst.msk [vmem:[#allocation2 + $0x94] sm:$0xf] %vm1650, %v1533
  %1689 = vst.msk [vmem:[#allocation2 + $0x98] sm:$0xf] %vm1650, %v1535
  %1690 = vst.msk [vmem:[#allocation2 + $0x9c] sm:$0xf] %vm1650, %v1537
  %1691 = vst.msk [vmem:[#allocation2 + $0xa0] sm:$0xf] %vm1650, %v1539
  %1692 = vst.msk [vmem:[#allocation2 + $0xa4] sm:$0xf] %vm1650, %v1541
  %1693 = vst.msk [vmem:[#allocation2 + $0xa8] sm:$0xf] %vm1650, %v1543
  %1694 = vst.msk [vmem:[#allocation2 + $0xac] sm:$0xf] %vm1650, %v1545
  %1695 = vst.msk [vmem:[#allocation2 + $0xb0] sm:$0xf] %vm1650, %v1547
  %1696 = vst.msk [vmem:[#allocation2 + $0xb4] sm:$0xf] %vm1650, %v1549
  %1697 = vst.msk [vmem:[#allocation2 + $0xb8] sm:$0xf] %vm1650, %v1551
  %1698 = vst.msk [vmem:[#allocation2 + $0xbc] sm:$0xf] %vm1650, %v1553
  %1699 = vst.msk [vmem:[#allocation2 + $0xc0] sm:$0xf] %vm1650, %v1555
  %1700 = vst.msk [vmem:[#allocation2 + $0xc4] sm:$0xf] %vm1650, %v1557
  %1701 = vst.msk [vmem:[#allocation2 + $0xc8] sm:$0xf] %vm1650, %v1559
  %1702 = vst.msk [vmem:[#allocation2 + $0xcc] sm:$0xf] %vm1650, %v1561
  %1703 = vst.msk [vmem:[#allocation2 + $0xd0] sm:$0xf] %vm1650, %v1563
  %1704 = vst.msk [vmem:[#allocation2 + $0xd4] sm:$0xf] %vm1650, %v1565
  %1705 = vst.msk [vmem:[#allocation2 + $0xd8] sm:$0xf] %vm1650, %v1567
  %1706 = vst.msk [vmem:[#allocation2 + $0xdc] sm:$0xf] %vm1650, %v1569
  %1707 = vst.msk [vmem:[#allocation2 + $0xe0] sm:$0xf] %vm1650, %v1571
  %1708 = vst.msk [vmem:[#allocation2 + $0xe4] sm:$0xf] %vm1650, %v1573
  %1709 = vst.msk [vmem:[#allocation2 + $0xe8] sm:$0xf] %vm1650, %v1575
  %1710 = vst.msk [vmem:[#allocation2 + $0xec] sm:$0xf] %vm1650, %v1577
  %1711 = vst.msk [vmem:[#allocation2 + $0xf0] sm:$0xf] %vm1650, %v1579
  %1712 = vst.msk [vmem:[#allocation2 + $0xf4] sm:$0xf] %vm1650, %v1581
  %1713 = vst.msk [vmem:[#allocation2 + $0xf8] sm:$0xf] %vm1650, %v1583
  %1714 = vst.msk [vmem:[#allocation2 + $0xfc] sm:$0xf] %vm1650, %v1585
  %v1716 = vshrl.u32 %v45, 16
  %v1718 = vrot.slane %v1716, 4
  %v1719 = vshll.u32 %v45, 16
  %v1721 = vrot.slane %v1719, 5
  %v1722 = vor.u32 %v1718, %v1721
  %v1723 = vrot.slane %v1722, 4
  %v1725 = vshll.u32 %v46, 16
  %v1727 = vrot.slane %v1725, 5
  %v1728 = vsel %vm240, %v1723, %v1727
  %v1730 = vshrl.u32 %v63, 16
  %v1732 = vrot.slane %v1730, 4
  %v1733 = vshll.u32 %v63, 16
  %v1735 = vrot.slane %v1733, 5
  %v1736 = vor.u32 %v1732, %v1735
  %v1737 = vrot.slane %v1736, 4
  %v1739 = vshll.u32 %v64, 16
  %v1741 = vrot.slane %v1739, 5
  %v1742 = vsel %vm240, %v1737, %v1741
  %v1744 = vshrl.u32 %v81, 16
  %v1746 = vrot.slane %v1744, 4
  %v1747 = vshll.u32 %v81, 16
  %v1749 = vrot.slane %v1747, 5
  %v1750 = vor.u32 %v1746, %v1749
  %v1751 = vrot.slane %v1750, 4
  %v1753 = vshll.u32 %v82, 16
  %v1755 = vrot.slane %v1753, 5
  %v1756 = vsel %vm240, %v1751, %v1755
  %v1758 = vshrl.u32 %v99, 16
  %v1760 = vrot.slane %v1758, 4
  %v1761 = vshll.u32 %v99, 16
  %v1763 = vrot.slane %v1761, 5
  %v1764 = vor.u32 %v1760, %v1763
  %v1765 = vrot.slane %v1764, 4
  %v1767 = vshll.u32 %v100, 16
  %v1769 = vrot.slane %v1767, 5
  %v1770 = vsel %vm240, %v1765, %v1769
  %v1772 = vshrl.u32 %v117, 16
  %v1774 = vrot.slane %v1772, 4
  %v1775 = vshll.u32 %v117, 16
  %v1777 = vrot.slane %v1775, 5
  %v1778 = vor.u32 %v1774, %v1777
  %v1779 = vrot.slane %v1778, 4
  %v1781 = vshll.u32 %v118, 16
  %v1783 = vrot.slane %v1781, 5
  %v1784 = vsel %vm240, %v1779, %v1783
  %v1786 = vshrl.u32 %v135, 16
  %v1788 = vrot.slane %v1786, 4
  %v1789 = vshll.u32 %v135, 16
  %v1791 = vrot.slane %v1789, 5
  %v1792 = vor.u32 %v1788, %v1791
  %v1793 = vrot.slane %v1792, 4
  %v1795 = vshll.u32 %v136, 16
  %v1797 = vrot.slane %v1795, 5
  %v1798 = vsel %vm240, %v1793, %v1797
  %v1800 = vshrl.u32 %v153, 16
  %v1802 = vrot.slane %v1800, 4
  %v1803 = vshll.u32 %v153, 16
  %v1805 = vrot.slane %v1803, 5
  %v1806 = vor.u32 %v1802, %v1805
  %v1807 = vrot.slane %v1806, 4
  %v1809 = vshll.u32 %v154, 16
  %v1811 = vrot.slane %v1809, 5
  %v1812 = vsel %vm240, %v1807, %v1811
  %v1814 = vshrl.u32 %v171, 16
  %v1816 = vrot.slane %v1814, 4
  %v1817 = vshll.u32 %v171, 16
  %v1819 = vrot.slane %v1817, 5
  %v1820 = vor.u32 %v1816, %v1819
  %v1821 = vrot.slane %v1820, 4
  %v1823 = vshll.u32 %v172, 16
  %v1825 = vrot.slane %v1823, 5
  %v1826 = vsel %vm240, %v1821, %v1825
  %1827 = vrot.lane.b32.xlu0 %v268, 36
  %v1828 = vpop.permute.xlu0 %1827
  %1829 = vrot.lane.b32.xlu0 %v282, 36
  %v1830 = vpop.permute.xlu0 %1829
  %1831 = vrot.lane.b32.xlu0 %v296, 36
  %v1832 = vpop.permute.xlu0 %1831
  %1833 = vrot.lane.b32.xlu0 %v310, 36
  %v1834 = vpop.permute.xlu0 %1833
  %1835 = vrot.lane.b32.xlu0 %v324, 36
  %v1836 = vpop.permute.xlu0 %1835
  %1837 = vrot.lane.b32.xlu0 %v338, 36
  %v1838 = vpop.permute.xlu0 %1837
  %1839 = vrot.lane.b32.xlu0 %v352, 36
  %v1840 = vpop.permute.xlu0 %1839
  %1841 = vrot.lane.b32.xlu0 %v1728, 36
  %v1842 = vpop.permute.xlu0 %1841
  %1843 = vrot.lane.b32.xlu0 %v380, 36
  %v1844 = vpop.permute.xlu0 %1843
  %1845 = vrot.lane.b32.xlu0 %v394, 36
  %v1846 = vpop.permute.xlu0 %1845
  %1847 = vrot.lane.b32.xlu0 %v408, 36
  %v1848 = vpop.permute.xlu0 %1847
  %1849 = vrot.lane.b32.xlu0 %v422, 36
  %v1850 = vpop.permute.xlu0 %1849
  %1851 = vrot.lane.b32.xlu0 %v436, 36
  %v1852 = vpop.permute.xlu0 %1851
  %1853 = vrot.lane.b32.xlu0 %v450, 36
  %v1854 = vpop.permute.xlu0 %1853
  %1855 = vrot.lane.b32.xlu0 %v464, 36
  %v1856 = vpop.permute.xlu0 %1855
  %1857 = vrot.lane.b32.xlu0 %v1742, 36
  %v1858 = vpop.permute.xlu0 %1857
  %1859 = vrot.lane.b32.xlu0 %v492, 36
  %v1860 = vpop.permute.xlu0 %1859
  %1861 = vrot.lane.b32.xlu0 %v506, 36
  %v1862 = vpop.permute.xlu0 %1861
  %1863 = vrot.lane.b32.xlu0 %v520, 36
  %v1864 = vpop.permute.xlu0 %1863
  %1865 = vrot.lane.b32.xlu0 %v534, 36
  %v1866 = vpop.permute.xlu0 %1865
  %1867 = vrot.lane.b32.xlu0 %v548, 36
  %v1868 = vpop.permute.xlu0 %1867
  %1869 = vrot.lane.b32.xlu0 %v562, 36
  %v1870 = vpop.permute.xlu0 %1869
  %1871 = vrot.lane.b32.xlu0 %v576, 36
  %v1872 = vpop.permute.xlu0 %1871
  %1873 = vrot.lane.b32.xlu0 %v1756, 36
  %v1874 = vpop.permute.xlu0 %1873
  %1875 = vrot.lane.b32.xlu0 %v604, 36
  %v1876 = vpop.permute.xlu0 %1875
  %1877 = vrot.lane.b32.xlu0 %v618, 36
  %v1878 = vpop.permute.xlu0 %1877
  %1879 = vrot.lane.b32.xlu0 %v632, 36
  %v1880 = vpop.permute.xlu0 %1879
  %1881 = vrot.lane.b32.xlu0 %v646, 36
  %v1882 = vpop.permute.xlu0 %1881
  %1883 = vrot.lane.b32.xlu0 %v660, 36
  %v1884 = vpop.permute.xlu0 %1883
  %1885 = vrot.lane.b32.xlu0 %v674, 36
  %v1886 = vpop.permute.xlu0 %1885
  %1887 = vrot.lane.b32.xlu0 %v688, 36
  %v1888 = vpop.permute.xlu0 %1887
  %1889 = vrot.lane.b32.xlu0 %v1770, 36
  %v1890 = vpop.permute.xlu0 %1889
  %1891 = vrot.lane.b32.xlu0 %v716, 36
  %v1892 = vpop.permute.xlu0 %1891
  %1893 = vrot.lane.b32.xlu0 %v730, 36
  %v1894 = vpop.permute.xlu0 %1893
  %1895 = vrot.lane.b32.xlu0 %v744, 36
  %v1896 = vpop.permute.xlu0 %1895
  %1897 = vrot.lane.b32.xlu0 %v758, 36
  %v1898 = vpop.permute.xlu0 %1897
  %1899 = vrot.lane.b32.xlu0 %v772, 36
  %v1900 = vpop.permute.xlu0 %1899
  %1901 = vrot.lane.b32.xlu0 %v786, 36
  %v1902 = vpop.permute.xlu0 %1901
  %1903 = vrot.lane.b32.xlu0 %v800, 36
  %v1904 = vpop.permute.xlu0 %1903
  %1905 = vrot.lane.b32.xlu0 %v1784, 36
  %v1906 = vpop.permute.xlu0 %1905
  %1907 = vrot.lane.b32.xlu0 %v828, 36
  %v1908 = vpop.permute.xlu0 %1907
  %1909 = vrot.lane.b32.xlu0 %v842, 36
  %v1910 = vpop.permute.xlu0 %1909
  %1911 = vrot.lane.b32.xlu0 %v856, 36
  %v1912 = vpop.permute.xlu0 %1911
  %1913 = vrot.lane.b32.xlu0 %v870, 36
  %v1914 = vpop.permute.xlu0 %1913
  %1915 = vrot.lane.b32.xlu0 %v884, 36
  %v1916 = vpop.permute.xlu0 %1915
  %1917 = vrot.lane.b32.xlu0 %v898, 36
  %v1918 = vpop.permute.xlu0 %1917
  %1919 = vrot.lane.b32.xlu0 %v912, 36
  %v1920 = vpop.permute.xlu0 %1919
  %1921 = vrot.lane.b32.xlu0 %v1798, 36
  %v1922 = vpop.permute.xlu0 %1921
  %1923 = vrot.lane.b32.xlu0 %v940, 36
  %v1924 = vpop.permute.xlu0 %1923
  %1925 = vrot.lane.b32.xlu0 %v954, 36
  %v1926 = vpop.permute.xlu0 %1925
  %1927 = vrot.lane.b32.xlu0 %v968, 36
  %v1928 = vpop.permute.xlu0 %1927
  %1929 = vrot.lane.b32.xlu0 %v982, 36
  %v1930 = vpop.permute.xlu0 %1929
  %1931 = vrot.lane.b32.xlu0 %v996, 36
  %v1932 = vpop.permute.xlu0 %1931
  %1933 = vrot.lane.b32.xlu0 %v1010, 36
  %v1934 = vpop.permute.xlu0 %1933
  %1935 = vrot.lane.b32.xlu0 %v1024, 36
  %v1936 = vpop.permute.xlu0 %1935
  %1937 = vrot.lane.b32.xlu0 %v1812, 36
  %v1938 = vpop.permute.xlu0 %1937
  %1939 = vrot.lane.b32.xlu0 %v1052, 36
  %v1940 = vpop.permute.xlu0 %1939
  %1941 = vrot.lane.b32.xlu0 %v1066, 36
  %v1942 = vpop.permute.xlu0 %1941
  %1943 = vrot.lane.b32.xlu0 %v1080, 36
  %v1944 = vpop.permute.xlu0 %1943
  %1945 = vrot.lane.b32.xlu0 %v1094, 36
  %v1946 = vpop.permute.xlu0 %1945
  %1947 = vrot.lane.b32.xlu0 %v1108, 36
  %v1948 = vpop.permute.xlu0 %1947
  %1949 = vrot.lane.b32.xlu0 %v1122, 36
  %v1950 = vpop.permute.xlu0 %1949
  %1951 = vrot.lane.b32.xlu0 %v1136, 36
  %v1952 = vpop.permute.xlu0 %1951
  %1953 = vrot.lane.b32.xlu0 %v1826, 36
  %v1954 = vpop.permute.xlu0 %1953
  %vm2019 = vcmask 388384
  %2020 = vst.msk [vmem:[#allocation2] sm:$0xf] %vm2019, %v1828
  %2021 = vst.msk [vmem:[#allocation2 + $0x4] sm:$0xf] %vm2019, %v1830
  %2022 = vst.msk [vmem:[#allocation2 + $0x8] sm:$0xf] %vm2019, %v1832
  %2023 = vst.msk [vmem:[#allocation2 + $0xc] sm:$0xf] %vm2019, %v1834
  %2024 = vst.msk [vmem:[#allocation2 + $0x10] sm:$0xf] %vm2019, %v1836
  %2025 = vst.msk [vmem:[#allocation2 + $0x14] sm:$0xf] %vm2019, %v1838
  %2026 = vst.msk [vmem:[#allocation2 + $0x18] sm:$0xf] %vm2019, %v1840
  %2027 = vst.msk [vmem:[#allocation2 + $0x1c] sm:$0xf] %vm2019, %v1842
  %2028 = vst.msk [vmem:[#allocation2 + $0x20] sm:$0xf] %vm2019, %v1844
  %2029 = vst.msk [vmem:[#allocation2 + $0x24] sm:$0xf] %vm2019, %v1846
  %2030 = vst.msk [vmem:[#allocation2 + $0x28] sm:$0xf] %vm2019, %v1848
  %2031 = vst.msk [vmem:[#allocation2 + $0x2c] sm:$0xf] %vm2019, %v1850
  %2032 = vst.msk [vmem:[#allocation2 + $0x30] sm:$0xf] %vm2019, %v1852
  %2033 = vst.msk [vmem:[#allocation2 + $0x34] sm:$0xf] %vm2019, %v1854
  %2034 = vst.msk [vmem:[#allocation2 + $0x38] sm:$0xf] %vm2019, %v1856
  %2035 = vst.msk [vmem:[#allocation2 + $0x3c] sm:$0xf] %vm2019, %v1858
  %2036 = vst.msk [vmem:[#allocation2 + $0x40] sm:$0xf] %vm2019, %v1860
  %2037 = vst.msk [vmem:[#allocation2 + $0x44] sm:$0xf] %vm2019, %v1862
  %2038 = vst.msk [vmem:[#allocation2 + $0x48] sm:$0xf] %vm2019, %v1864
  %2039 = vst.msk [vmem:[#allocation2 + $0x4c] sm:$0xf] %vm2019, %v1866
  %2040 = vst.msk [vmem:[#allocation2 + $0x50] sm:$0xf] %vm2019, %v1868
  %2041 = vst.msk [vmem:[#allocation2 + $0x54] sm:$0xf] %vm2019, %v1870
  %2042 = vst.msk [vmem:[#allocation2 + $0x58] sm:$0xf] %vm2019, %v1872
  %2043 = vst.msk [vmem:[#allocation2 + $0x5c] sm:$0xf] %vm2019, %v1874
  %2044 = vst.msk [vmem:[#allocation2 + $0x60] sm:$0xf] %vm2019, %v1876
  %2045 = vst.msk [vmem:[#allocation2 + $0x64] sm:$0xf] %vm2019, %v1878
  %2046 = vst.msk [vmem:[#allocation2 + $0x68] sm:$0xf] %vm2019, %v1880
  %2047 = vst.msk [vmem:[#allocation2 + $0x6c] sm:$0xf] %vm2019, %v1882
  %2048 = vst.msk [vmem:[#allocation2 + $0x70] sm:$0xf] %vm2019, %v1884
  %2049 = vst.msk [vmem:[#allocation2 + $0x74] sm:$0xf] %vm2019, %v1886
  %2050 = vst.msk [vmem:[#allocation2 + $0x78] sm:$0xf] %vm2019, %v1888
  %2051 = vst.msk [vmem:[#allocation2 + $0x7c] sm:$0xf] %vm2019, %v1890
  %2052 = vst.msk [vmem:[#allocation2 + $0x80] sm:$0xf] %vm2019, %v1892
  %2053 = vst.msk [vmem:[#allocation2 + $0x84] sm:$0xf] %vm2019, %v1894
  %2054 = vst.msk [vmem:[#allocation2 + $0x88] sm:$0xf] %vm2019, %v1896
  %2055 = vst.msk [vmem:[#allocation2 + $0x8c] sm:$0xf] %vm2019, %v1898
  %2056 = vst.msk [vmem:[#allocation2 + $0x90] sm:$0xf] %vm2019, %v1900
  %2057 = vst.msk [vmem:[#allocation2 + $0x94] sm:$0xf] %vm2019, %v1902
  %2058 = vst.msk [vmem:[#allocation2 + $0x98] sm:$0xf] %vm2019, %v1904
  %2059 = vst.msk [vmem:[#allocation2 + $0x9c] sm:$0xf] %vm2019, %v1906
  %2060 = vst.msk [vmem:[#allocation2 + $0xa0] sm:$0xf] %vm2019, %v1908
  %2061 = vst.msk [vmem:[#allocation2 + $0xa4] sm:$0xf] %vm2019, %v1910
  %2062 = vst.msk [vmem:[#allocation2 + $0xa8] sm:$0xf] %vm2019, %v1912
  %2063 = vst.msk [vmem:[#allocation2 + $0xac] sm:$0xf] %vm2019, %v1914
  %2064 = vst.msk [vmem:[#allocation2 + $0xb0] sm:$0xf] %vm2019, %v1916
  %2065 = vst.msk [vmem:[#allocation2 + $0xb4] sm:$0xf] %vm2019, %v1918
  %2066 = vst.msk [vmem:[#allocation2 + $0xb8] sm:$0xf] %vm2019, %v1920
  %2067 = vst.msk [vmem:[#allocation2 + $0xbc] sm:$0xf] %vm2019, %v1922
  %2068 = vst.msk [vmem:[#allocation2 + $0xc0] sm:$0xf] %vm2019, %v1924
  %2069 = vst.msk [vmem:[#allocation2 + $0xc4] sm:$0xf] %vm2019, %v1926
  %2070 = vst.msk [vmem:[#allocation2 + $0xc8] sm:$0xf] %vm2019, %v1928
  %2071 = vst.msk [vmem:[#allocation2 + $0xcc] sm:$0xf] %vm2019, %v1930
  %2072 = vst.msk [vmem:[#allocation2 + $0xd0] sm:$0xf] %vm2019, %v1932
  %2073 = vst.msk [vmem:[#allocation2 + $0xd4] sm:$0xf] %vm2019, %v1934
  %2074 = vst.msk [vmem:[#allocation2 + $0xd8] sm:$0xf] %vm2019, %v1936
  %2075 = vst.msk [vmem:[#allocation2 + $0xdc] sm:$0xf] %vm2019, %v1938
  %2076 = vst.msk [vmem:[#allocation2 + $0xe0] sm:$0xf] %vm2019, %v1940
  %2077 = vst.msk [vmem:[#allocation2 + $0xe4] sm:$0xf] %vm2019, %v1942
  %2078 = vst.msk [vmem:[#allocation2 + $0xe8] sm:$0xf] %vm2019, %v1944
  %2079 = vst.msk [vmem:[#allocation2 + $0xec] sm:$0xf] %vm2019, %v1946
  %2080 = vst.msk [vmem:[#allocation2 + $0xf0] sm:$0xf] %vm2019, %v1948
  %2081 = vst.msk [vmem:[#allocation2 + $0xf4] sm:$0xf] %vm2019, %v1950
  %2082 = vst.msk [vmem:[#allocation2 + $0xf8] sm:$0xf] %vm2019, %v1952
  %2083 = vst.msk [vmem:[#allocation2 + $0xfc] sm:$0xf] %vm2019, %v1954
  %v2084 = vld [vmem:[#allocation2] sm:$0xf]
  %v2085 = vld [vmem:[#allocation2 + $0x4] sm:$0xf]
  %v2086 = vld [vmem:[#allocation2 + $0x8] sm:$0xf]
  %v2087 = vld [vmem:[#allocation2 + $0xc] sm:$0xf]
  %v2088 = vld [vmem:[#allocation2 + $0x10] sm:$0xf]
  %v2089 = vld [vmem:[#allocation2 + $0x14] sm:$0xf]
  %v2090 = vld [vmem:[#allocation2 + $0x18] sm:$0xf]
  %v2091 = vld [vmem:[#allocation2 + $0x1c] sm:$0xf]
  %v2092 = vld [vmem:[#allocation2 + $0x20] sm:$0xf]
  %v2093 = vld [vmem:[#allocation2 + $0x24] sm:$0xf]
  %v2094 = vld [vmem:[#allocation2 + $0x28] sm:$0xf]
  %v2095 = vld [vmem:[#allocation2 + $0x2c] sm:$0xf]
  %v2096 = vld [vmem:[#allocation2 + $0x30] sm:$0xf]
  %v2097 = vld [vmem:[#allocation2 + $0x34] sm:$0xf]
  %v2098 = vld [vmem:[#allocation2 + $0x38] sm:$0xf]
  %v2099 = vld [vmem:[#allocation2 + $0x3c] sm:$0xf]
  %v2100 = vld [vmem:[#allocation2 + $0x40] sm:$0xf]
  %v2101 = vld [vmem:[#allocation2 + $0x44] sm:$0xf]
  %v2102 = vld [vmem:[#allocation2 + $0x48] sm:$0xf]
  %v2103 = vld [vmem:[#allocation2 + $0x4c] sm:$0xf]
  %v2104 = vld [vmem:[#allocation2 + $0x50] sm:$0xf]
  %v2105 = vld [vmem:[#allocation2 + $0x54] sm:$0xf]
  %v2106 = vld [vmem:[#allocation2 + $0x58] sm:$0xf]
  %v2107 = vld [vmem:[#allocation2 + $0x5c] sm:$0xf]
  %v2108 = vld [vmem:[#allocation2 + $0x60] sm:$0xf]
  %v2109 = vld [vmem:[#allocation2 + $0x64] sm:$0xf]
  %v2110 = vld [vmem:[#allocation2 + $0x68] sm:$0xf]
  %v2111 = vld [vmem:[#allocation2 + $0x6c] sm:$0xf]
  %v2112 = vld [vmem:[#allocation2 + $0x70] sm:$0xf]
  %v2113 = vld [vmem:[#allocation2 + $0x74] sm:$0xf]
  %v2114 = vld [vmem:[#allocation2 + $0x78] sm:$0xf]
  %v2115 = vld [vmem:[#allocation2 + $0x7c] sm:$0xf]
  %v2116 = vld [vmem:[#allocation2 + $0x80] sm:$0xf]
  %v2117 = vld [vmem:[#allocation2 + $0x84] sm:$0xf]
  %v2118 = vld [vmem:[#allocation2 + $0x88] sm:$0xf]
  %v2119 = vld [vmem:[#allocation2 + $0x8c] sm:$0xf]
  %v2120 = vld [vmem:[#allocation2 + $0x90] sm:$0xf]
  %v2121 = vld [vmem:[#allocation2 + $0x94] sm:$0xf]
  %v2122 = vld [vmem:[#allocation2 + $0x98] sm:$0xf]
  %v2123 = vld [vmem:[#allocation2 + $0x9c] sm:$0xf]
  %v2124 = vld [vmem:[#allocation2 + $0xa0] sm:$0xf]
  %v2125 = vld [vmem:[#allocation2 + $0xa4] sm:$0xf]
  %v2126 = vld [vmem:[#allocation2 + $0xa8] sm:$0xf]
  %v2127 = vld [vmem:[#allocation2 + $0xac] sm:$0xf]
  %v2128 = vld [vmem:[#allocation2 + $0xb0] sm:$0xf]
  %v2129 = vld [vmem:[#allocation2 + $0xb4] sm:$0xf]
  %v2130 = vld [vmem:[#allocation2 + $0xb8] sm:$0xf]
  %v2131 = vld [vmem:[#allocation2 + $0xbc] sm:$0xf]
  %v2132 = vld [vmem:[#allocation2 + $0xc0] sm:$0xf]
  %v2133 = vld [vmem:[#allocation2 + $0xc4] sm:$0xf]
  %v2134 = vld [vmem:[#allocation2 + $0xc8] sm:$0xf]
  %v2135 = vld [vmem:[#allocation2 + $0xcc] sm:$0xf]
  %v2136 = vld [vmem:[#allocation2 + $0xd0] sm:$0xf]
  %v2137 = vld [vmem:[#allocation2 + $0xd4] sm:$0xf]
  %v2138 = vld [vmem:[#allocation2 + $0xd8] sm:$0xf]
  %v2139 = vld [vmem:[#allocation2 + $0xdc] sm:$0xf]
  %v2140 = vld [vmem:[#allocation2 + $0xe0] sm:$0xf]
  %v2141 = vld [vmem:[#allocation2 + $0xe4] sm:$0xf]
  %v2142 = vld [vmem:[#allocation2 + $0xe8] sm:$0xf]
  %v2143 = vld [vmem:[#allocation2 + $0xec] sm:$0xf]
  %v2144 = vld [vmem:[#allocation2 + $0xf0] sm:$0xf]
  %v2145 = vld [vmem:[#allocation2 + $0xf4] sm:$0xf]
  %v2146 = vld [vmem:[#allocation2 + $0xf8] sm:$0xf]
  %v2147 = vld [vmem:[#allocation2 + $0xfc] sm:$0xf]
  %v2148 = vld [vmem:[%s1] sm:$0xf]
  %v2149 = vld [vmem:[%s1 + $0x4] sm:$0xf]
  %v2150 = vld [vmem:[%s1 + $0x8] sm:$0xf]
  %v2151 = vld [vmem:[%s1 + $0xc] sm:$0xf]
  %v2152 = vld [vmem:[%s1 + $0x10] sm:$0xf]
  %v2153 = vld [vmem:[%s1 + $0x14] sm:$0xf]
  %v2154 = vld [vmem:[%s2] sm:$0x1]
  %v2156 = vperm.slane %v2154, 0
  %v2222 = vunpack.c.l.b16 %v2084
  %v2223 = vunpack.c.l.b16 %v2085
  %v2224 = vunpack.c.l.b16 %v2086
  %v2225 = vunpack.c.l.b16 %v2087
  %v2226 = vunpack.c.l.b16 %v2088
  %v2227 = vunpack.c.l.b16 %v2089
  %v2228 = vunpack.c.l.b16 %v2090
  %v2229 = vunpack.c.l.b16 %v2091
  %v2230 = vunpack.c.l.b16 %v2092
  %v2231 = vunpack.c.l.b16 %v2093
  %v2232 = vunpack.c.l.b16 %v2094
  %v2233 = vunpack.c.l.b16 %v2095
  %v2234 = vunpack.c.l.b16 %v2096
  %v2235 = vunpack.c.l.b16 %v2097
  %v2236 = vunpack.c.l.b16 %v2098
  %v2237 = vunpack.c.l.b16 %v2099
  %v2238 = vunpack.c.l.b16 %v2100
  %v2239 = vunpack.c.l.b16 %v2101
  %v2240 = vunpack.c.l.b16 %v2102
  %v2241 = vunpack.c.l.b16 %v2103
  %v2242 = vunpack.c.l.b16 %v2104
  %v2243 = vunpack.c.l.b16 %v2105
  %v2244 = vunpack.c.l.b16 %v2106
  %v2245 = vunpack.c.l.b16 %v2107
  %v2246 = vunpack.c.l.b16 %v2108
  %v2247 = vunpack.c.l.b16 %v2109
  %v2248 = vunpack.c.l.b16 %v2110
  %v2249 = vunpack.c.l.b16 %v2111
  %v2250 = vunpack.c.l.b16 %v2112
  %v2251 = vunpack.c.l.b16 %v2113
  %v2252 = vunpack.c.l.b16 %v2114
  %v2253 = vunpack.c.l.b16 %v2115
  %v2254 = vunpack.c.l.b16 %v2116
  %v2255 = vunpack.c.l.b16 %v2117
  %v2256 = vunpack.c.l.b16 %v2118
  %v2257 = vunpack.c.l.b16 %v2119
  %v2258 = vunpack.c.l.b16 %v2120
  %v2259 = vunpack.c.l.b16 %v2121
  %v2260 = vunpack.c.l.b16 %v2122
  %v2261 = vunpack.c.l.b16 %v2123
  %v2262 = vunpack.c.l.b16 %v2124
  %v2263 = vunpack.c.l.b16 %v2125
  %v2264 = vunpack.c.l.b16 %v2126
  %v2265 = vunpack.c.l.b16 %v2127
  %v2266 = vunpack.c.l.b16 %v2128
  %v2267 = vunpack.c.l.b16 %v2129
  %v2268 = vunpack.c.l.b16 %v2130
  %v2269 = vunpack.c.l.b16 %v2131
  %v2270 = vunpack.c.l.b16 %v2132
  %v2271 = vunpack.c.l.b16 %v2133
  %v2272 = vunpack.c.l.b16 %v2134
  %v2273 = vunpack.c.l.b16 %v2135
  %v2274 = vunpack.c.l.b16 %v2136
  %v2275 = vunpack.c.l.b16 %v2137
  %v2276 = vunpack.c.l.b16 %v2138
  %v2277 = vunpack.c.l.b16 %v2139
  %v2278 = vunpack.c.l.b16 %v2140
  %v2279 = vunpack.c.l.b16 %v2141
  %v2280 = vunpack.c.l.b16 %v2142
  %v2281 = vunpack.c.l.b16 %v2143
  %v2282 = vunpack.c.l.b16 %v2144
  %v2283 = vunpack.c.l.b16 %v2145
  %v2284 = vunpack.c.l.b16 %v2146
  %v2285 = vunpack.c.l.b16 %v2147
  %v2286 = vpack.c.b16 %v2223, %v2222
  %v2287 = vpack.c.b16 %v2225, %v2224
  %v2288 = vpack.c.b16 %v2227, %v2226
  %v2289 = vpack.c.b16 %v2229, %v2228
  %v2290 = vpack.c.b16 %v2231, %v2230
  %v2291 = vpack.c.b16 %v2233, %v2232
  %v2292 = vpack.c.b16 %v2235, %v2234
  %v2293 = vpack.c.b16 %v2237, %v2236
  %v2294 = vpack.c.b16 %v2239, %v2238
  %v2295 = vpack.c.b16 %v2241, %v2240
  %v2296 = vpack.c.b16 %v2243, %v2242
  %v2297 = vpack.c.b16 %v2245, %v2244
  %v2298 = vpack.c.b16 %v2247, %v2246
  %v2299 = vpack.c.b16 %v2249, %v2248
  %v2300 = vpack.c.b16 %v2251, %v2250
  %v2301 = vpack.c.b16 %v2253, %v2252
  %v2302 = vpack.c.b16 %v2255, %v2254
  %v2303 = vpack.c.b16 %v2257, %v2256
  %v2304 = vpack.c.b16 %v2259, %v2258
  %v2305 = vpack.c.b16 %v2261, %v2260
  %v2306 = vpack.c.b16 %v2263, %v2262
  %v2307 = vpack.c.b16 %v2265, %v2264
  %v2308 = vpack.c.b16 %v2267, %v2266
  %v2309 = vpack.c.b16 %v2269, %v2268
  %v2310 = vpack.c.b16 %v2271, %v2270
  %v2311 = vpack.c.b16 %v2273, %v2272
  %v2312 = vpack.c.b16 %v2275, %v2274
  %v2313 = vpack.c.b16 %v2277, %v2276
  %v2314 = vpack.c.b16 %v2279, %v2278
  %v2315 = vpack.c.b16 %v2281, %v2280
  %v2316 = vpack.c.b16 %v2283, %v2282
  %v2317 = vpack.c.b16 %v2285, %v2284
  %v2324 = vunpack.c.l.b16 %v2148
  %v2325 = vunpack.c.l.b16 %v2149
  %v2326 = vunpack.c.l.b16 %v2150
  %v2327 = vunpack.c.l.b16 %v2151
  %v2328 = vunpack.c.l.b16 %v2152
  %v2329 = vunpack.c.l.b16 %v2153
  %v2330 = vpack.c.b16 %v2325, %v2324
  %v2331 = vpack.c.b16 %v2327, %v2326
  %v2332 = vpack.c.b16 %v2329, %v2328
  %vm2336 = vcmask 392192
  %v2338 = vsel %vm2336, %v2286, 0
  %v2341 = vsel %vm2336, %v2287, 0
  %v2344 = vsel %vm2336, %v2288, 0
  %v2347 = vsel %vm2336, %v2289, 0
  %v2350 = vsel %vm2336, %v2290, 0
  %v2353 = vsel %vm2336, %v2291, 0
  %v2356 = vsel %vm2336, %v2292, 0
  %v2359 = vsel %vm2336, %v2293, 0
  %v2362 = vsel %vm2336, %v2294, 0
  %v2365 = vsel %vm2336, %v2295, 0
  %v2368 = vsel %vm2336, %v2296, 0
  %v2371 = vsel %vm2336, %v2297, 0
  %v2374 = vsel %vm2336, %v2298, 0
  %v2377 = vsel %vm2336, %v2299, 0
  %v2380 = vsel %vm2336, %v2300, 0
  %v2383 = vsel %vm2336, %v2301, 0
  %v2386 = vsel %vm2336, %v2302, 0
  %v2389 = vsel %vm2336, %v2303, 0
  %v2392 = vsel %vm2336, %v2304, 0
  %v2395 = vsel %vm2336, %v2305, 0
  %v2398 = vsel %vm2336, %v2306, 0
  %v2401 = vsel %vm2336, %v2307, 0
  %v2404 = vsel %vm2336, %v2308, 0
  %v2407 = vsel %vm2336, %v2309, 0
  %v2410 = vsel %vm2336, %v2310, 0
  %v2413 = vsel %vm2336, %v2311, 0
  %v2416 = vsel %vm2336, %v2312, 0
  %v2419 = vsel %vm2336, %v2313, 0
  %v2422 = vsel %vm2336, %v2314, 0
  %v2425 = vsel %vm2336, %v2315, 0
  %v2428 = vsel %vm2336, %v2316, 0
  %v2431 = vsel %vm2336, %v2317, 0
  %2433 = vmatpush.bf16.msra.mxu0 0
  %2434 = vmatpush.bf16.msra.mxu0 0
  %2435 = vmatpush.bf16.msra.mxu0 0
  %2436 = vmatpush.bf16.msra.mxu0 0
  %2437 = vmatpush.bf16.msra.mxu0 0
  %2438 = vmatpush.bf16.msra.mxu0 %v2332
  %2439 = vmatpush.bf16.msra.mxu0 %v2331
  %2440 = vmatpush.bf16.msra.mxu0 %v2330
  %2441 = vmatmul.bf16.gmra.mxu0 %v2338
  %v2442 = vpop.f32.mrf.mxu0
  %v2443 = vadd.f32 %v2156, %v2442
  %v2444 = vpop.f32.mrf.mxu0
  %v2445 = vadd.f32 %v2156, %v2444
  %2446 = vmatmul.bf16.gmra.mxu0 %v2341
  %v2447 = vpop.f32.mrf.mxu0
  %v2448 = vadd.f32 %v2156, %v2447
  %v2449 = vpop.f32.mrf.mxu0
  %v2450 = vadd.f32 %v2156, %v2449
  %2451 = vmatmul.bf16.gmra.mxu0 %v2344
  %v2452 = vpop.f32.mrf.mxu0
  %v2453 = vadd.f32 %v2156, %v2452
  %v2454 = vpop.f32.mrf.mxu0
  %v2455 = vadd.f32 %v2156, %v2454
  %2456 = vmatmul.bf16.gmra.mxu0 %v2347
  %v2457 = vpop.f32.mrf.mxu0
  %v2458 = vadd.f32 %v2156, %v2457
  %v2459 = vpop.f32.mrf.mxu0
  %v2460 = vadd.f32 %v2156, %v2459
  %2461 = vmatmul.bf16.gmra.mxu0 %v2350
  %v2462 = vpop.f32.mrf.mxu0
  %v2463 = vadd.f32 %v2156, %v2462
  %v2464 = vpop.f32.mrf.mxu0
  %v2465 = vadd.f32 %v2156, %v2464
  %2466 = vmatmul.bf16.gmra.mxu0 %v2353
  %v2467 = vpop.f32.mrf.mxu0
  %v2468 = vadd.f32 %v2156, %v2467
  %v2469 = vpop.f32.mrf.mxu0
  %v2470 = vadd.f32 %v2156, %v2469
  %2471 = vmatmul.bf16.gmra.mxu0 %v2356
  %v2472 = vpop.f32.mrf.mxu0
  %v2473 = vadd.f32 %v2156, %v2472
  %v2474 = vpop.f32.mrf.mxu0
  %v2475 = vadd.f32 %v2156, %v2474
  %2476 = vmatmul.bf16.gmra.mxu0 %v2359
  %v2477 = vpop.f32.mrf.mxu0
  %v2478 = vadd.f32 %v2156, %v2477
  %v2479 = vpop.f32.mrf.mxu0
  %v2480 = vadd.f32 %v2156, %v2479
  %2481 = vmatmul.bf16.gmra.mxu0 %v2362
  %v2482 = vpop.f32.mrf.mxu0
  %v2483 = vadd.f32 %v2156, %v2482
  %v2484 = vpop.f32.mrf.mxu0
  %v2485 = vadd.f32 %v2156, %v2484
  %2486 = vmatmul.bf16.gmra.mxu0 %v2365
  %v2487 = vpop.f32.mrf.mxu0
  %v2488 = vadd.f32 %v2156, %v2487
  %v2489 = vpop.f32.mrf.mxu0
  %v2490 = vadd.f32 %v2156, %v2489
  %2491 = vmatmul.bf16.gmra.mxu0 %v2368
  %v2492 = vpop.f32.mrf.mxu0
  %v2493 = vadd.f32 %v2156, %v2492
  %v2494 = vpop.f32.mrf.mxu0
  %v2495 = vadd.f32 %v2156, %v2494
  %2496 = vmatmul.bf16.gmra.mxu0 %v2371
  %v2497 = vpop.f32.mrf.mxu0
  %v2498 = vadd.f32 %v2156, %v2497
  %v2499 = vpop.f32.mrf.mxu0
  %v2500 = vadd.f32 %v2156, %v2499
  %2501 = vmatmul.bf16.gmra.mxu0 %v2374
  %v2502 = vpop.f32.mrf.mxu0
  %v2503 = vadd.f32 %v2156, %v2502
  %v2504 = vpop.f32.mrf.mxu0
  %v2505 = vadd.f32 %v2156, %v2504
  %2506 = vmatmul.bf16.gmra.mxu0 %v2377
  %v2507 = vpop.f32.mrf.mxu0
  %v2508 = vadd.f32 %v2156, %v2507
  %v2509 = vpop.f32.mrf.mxu0
  %v2510 = vadd.f32 %v2156, %v2509
  %2511 = vmatmul.bf16.gmra.mxu0 %v2380
  %v2512 = vpop.f32.mrf.mxu0
  %v2513 = vadd.f32 %v2156, %v2512
  %v2514 = vpop.f32.mrf.mxu0
  %v2515 = vadd.f32 %v2156, %v2514
  %2516 = vmatmul.bf16.gmra.mxu0 %v2383
  %v2517 = vpop.f32.mrf.mxu0
  %v2518 = vadd.f32 %v2156, %v2517
  %v2519 = vpop.f32.mrf.mxu0
  %v2520 = vadd.f32 %v2156, %v2519
  %2521 = vmatmul.bf16.gmra.mxu0 %v2386
  %v2522 = vpop.f32.mrf.mxu0
  %v2523 = vadd.f32 %v2156, %v2522
  %v2524 = vpop.f32.mrf.mxu0
  %v2525 = vadd.f32 %v2156, %v2524
  %2526 = vmatmul.bf16.gmra.mxu0 %v2389
  %v2527 = vpop.f32.mrf.mxu0
  %v2528 = vadd.f32 %v2156, %v2527
  %v2529 = vpop.f32.mrf.mxu0
  %v2530 = vadd.f32 %v2156, %v2529
  %2531 = vmatmul.bf16.gmra.mxu0 %v2392
  %v2532 = vpop.f32.mrf.mxu0
  %v2533 = vadd.f32 %v2156, %v2532
  %v2534 = vpop.f32.mrf.mxu0
  %v2535 = vadd.f32 %v2156, %v2534
  %2536 = vmatmul.bf16.gmra.mxu0 %v2395
  %v2537 = vpop.f32.mrf.mxu0
  %v2538 = vadd.f32 %v2156, %v2537
  %v2539 = vpop.f32.mrf.mxu0
  %v2540 = vadd.f32 %v2156, %v2539
  %2541 = vmatmul.bf16.gmra.mxu0 %v2398
  %v2542 = vpop.f32.mrf.mxu0
  %v2543 = vadd.f32 %v2156, %v2542
  %v2544 = vpop.f32.mrf.mxu0
  %v2545 = vadd.f32 %v2156, %v2544
  %2546 = vmatmul.bf16.gmra.mxu0 %v2401
  %v2547 = vpop.f32.mrf.mxu0
  %v2548 = vadd.f32 %v2156, %v2547
  %v2549 = vpop.f32.mrf.mxu0
  %v2550 = vadd.f32 %v2156, %v2549
  %2551 = vmatmul.bf16.gmra.mxu0 %v2404
  %v2552 = vpop.f32.mrf.mxu0
  %v2553 = vadd.f32 %v2156, %v2552
  %v2554 = vpop.f32.mrf.mxu0
  %v2555 = vadd.f32 %v2156, %v2554
  %2556 = vmatmul.bf16.gmra.mxu0 %v2407
  %v2557 = vpop.f32.mrf.mxu0
  %v2558 = vadd.f32 %v2156, %v2557
  %v2559 = vpop.f32.mrf.mxu0
  %v2560 = vadd.f32 %v2156, %v2559
  %2561 = vmatmul.bf16.gmra.mxu0 %v2410
  %v2562 = vpop.f32.mrf.mxu0
  %v2563 = vadd.f32 %v2156, %v2562
  %v2564 = vpop.f32.mrf.mxu0
  %v2565 = vadd.f32 %v2156, %v2564
  %2566 = vmatmul.bf16.gmra.mxu0 %v2413
  %v2567 = vpop.f32.mrf.mxu0
  %v2568 = vadd.f32 %v2156, %v2567
  %v2569 = vpop.f32.mrf.mxu0
  %v2570 = vadd.f32 %v2156, %v2569
  %2571 = vmatmul.bf16.gmra.mxu0 %v2416
  %v2572 = vpop.f32.mrf.mxu0
  %v2573 = vadd.f32 %v2156, %v2572
  %v2574 = vpop.f32.mrf.mxu0
  %v2575 = vadd.f32 %v2156, %v2574
  %2576 = vmatmul.bf16.gmra.mxu0 %v2419
  %v2577 = vpop.f32.mrf.mxu0
  %v2578 = vadd.f32 %v2156, %v2577
  %v2579 = vpop.f32.mrf.mxu0
  %v2580 = vadd.f32 %v2156, %v2579
  %2581 = vmatmul.bf16.gmra.mxu0 %v2422
  %v2582 = vpop.f32.mrf.mxu0
  %v2583 = vadd.f32 %v2156, %v2582
  %v2584 = vpop.f32.mrf.mxu0
  %v2585 = vadd.f32 %v2156, %v2584
  %2586 = vmatmul.bf16.gmra.mxu0 %v2425
  %v2587 = vpop.f32.mrf.mxu0
  %v2588 = vadd.f32 %v2156, %v2587
  %v2589 = vpop.f32.mrf.mxu0
  %v2590 = vadd.f32 %v2156, %v2589
  %2591 = vmatmul.bf16.gmra.mxu0 %v2428
  %v2592 = vpop.f32.mrf.mxu0
  %v2593 = vadd.f32 %v2156, %v2592
  %v2594 = vpop.f32.mrf.mxu0
  %v2595 = vadd.f32 %v2156, %v2594
  %2596 = vmatmul.bf16.gmra.mxu0 %v2431
  %v2597 = vpop.f32.mrf.mxu0
  %v2598 = vadd.f32 %v2156, %v2597
  %v2599 = vpop.f32.mrf.mxu0
  %v2600 = vadd.f32 %v2156, %v2599
  %2601 = vdwg.mxu0
  %v2602 = vadd.f32 %v2443, 3.0
  %v2603 = vadd.f32 %v2445, 3.0
  %v2604 = vadd.f32 %v2448, 3.0
  %v2605 = vadd.f32 %v2450, 3.0
  %v2606 = vadd.f32 %v2453, 3.0
  %v2607 = vadd.f32 %v2455, 3.0
  %v2608 = vadd.f32 %v2458, 3.0
  %v2609 = vadd.f32 %v2460, 3.0
  %v2610 = vadd.f32 %v2463, 3.0
  %v2611 = vadd.f32 %v2465, 3.0
  %v2612 = vadd.f32 %v2468, 3.0
  %v2613 = vadd.f32 %v2470, 3.0
  %v2614 = vadd.f32 %v2473, 3.0
  %v2615 = vadd.f32 %v2475, 3.0
  %v2616 = vadd.f32 %v2478, 3.0
  %v2617 = vadd.f32 %v2480, 3.0
  %v2618 = vadd.f32 %v2483, 3.0
  %v2619 = vadd.f32 %v2485, 3.0
  %v2620 = vadd.f32 %v2488, 3.0
  %v2621 = vadd.f32 %v2490, 3.0
  %v2622 = vadd.f32 %v2493, 3.0
  %v2623 = vadd.f32 %v2495, 3.0
  %v2624 = vadd.f32 %v2498, 3.0
  %v2625 = vadd.f32 %v2500, 3.0
  %v2626 = vadd.f32 %v2503, 3.0
  %v2627 = vadd.f32 %v2505, 3.0
  %v2628 = vadd.f32 %v2508, 3.0
  %v2629 = vadd.f32 %v2510, 3.0
  %v2630 = vadd.f32 %v2513, 3.0
  %v2631 = vadd.f32 %v2515, 3.0
  %v2632 = vadd.f32 %v2518, 3.0
  %v2633 = vadd.f32 %v2520, 3.0
  %v2634 = vadd.f32 %v2523, 3.0
  %v2635 = vadd.f32 %v2525, 3.0
  %v2636 = vadd.f32 %v2528, 3.0
  %v2637 = vadd.f32 %v2530, 3.0
  %v2638 = vadd.f32 %v2533, 3.0
  %v2639 = vadd.f32 %v2535, 3.0
  %v2640 = vadd.f32 %v2538, 3.0
  %v2641 = vadd.f32 %v2540, 3.0
  %v2642 = vadd.f32 %v2543, 3.0
  %v2643 = vadd.f32 %v2545, 3.0
  %v2644 = vadd.f32 %v2548, 3.0
  %v2645 = vadd.f32 %v2550, 3.0
  %v2646 = vadd.f32 %v2553, 3.0
  %v2647 = vadd.f32 %v2555, 3.0
  %v2648 = vadd.f32 %v2558, 3.0
  %v2649 = vadd.f32 %v2560, 3.0
  %v2650 = vadd.f32 %v2563, 3.0
  %v2651 = vadd.f32 %v2565, 3.0
  %v2652 = vadd.f32 %v2568, 3.0
  %v2653 = vadd.f32 %v2570, 3.0
  %v2654 = vadd.f32 %v2573, 3.0
  %v2655 = vadd.f32 %v2575, 3.0
  %v2656 = vadd.f32 %v2578, 3.0
  %v2657 = vadd.f32 %v2580, 3.0
  %v2658 = vadd.f32 %v2583, 3.0
  %v2659 = vadd.f32 %v2585, 3.0
  %v2660 = vadd.f32 %v2588, 3.0
  %v2661 = vadd.f32 %v2590, 3.0
  %v2662 = vadd.f32 %v2593, 3.0
  %v2663 = vadd.f32 %v2595, 3.0
  %v2664 = vadd.f32 %v2598, 3.0
  %v2665 = vadd.f32 %v2600, 3.0
  %v2666 = vmax.f32 %v2602, 0.0
  %v2667 = vmax.f32 %v2603, 0.0
  %v2668 = vmax.f32 %v2604, 0.0
  %v2669 = vmax.f32 %v2605, 0.0
  %v2670 = vmax.f32 %v2606, 0.0
  %v2671 = vmax.f32 %v2607, 0.0
  %v2672 = vmax.f32 %v2608, 0.0
  %v2673 = vmax.f32 %v2609, 0.0
  %v2674 = vmax.f32 %v2610, 0.0
  %v2675 = vmax.f32 %v2611, 0.0
  %v2676 = vmax.f32 %v2612, 0.0
  %v2677 = vmax.f32 %v2613, 0.0
  %v2678 = vmax.f32 %v2614, 0.0
  %v2679 = vmax.f32 %v2615, 0.0
  %v2680 = vmax.f32 %v2616, 0.0
  %v2681 = vmax.f32 %v2617, 0.0
  %v2682 = vmax.f32 %v2618, 0.0
  %v2683 = vmax.f32 %v2619, 0.0
  %v2684 = vmax.f32 %v2620, 0.0
  %v2685 = vmax.f32 %v2621, 0.0
  %v2686 = vmax.f32 %v2622, 0.0
  %v2687 = vmax.f32 %v2623, 0.0
  %v2688 = vmax.f32 %v2624, 0.0
  %v2689 = vmax.f32 %v2625, 0.0
  %v2690 = vmax.f32 %v2626, 0.0
  %v2691 = vmax.f32 %v2627, 0.0
  %v2692 = vmax.f32 %v2628, 0.0
  %v2693 = vmax.f32 %v2629, 0.0
  %v2694 = vmax.f32 %v2630, 0.0
  %v2695 = vmax.f32 %v2631, 0.0
  %v2696 = vmax.f32 %v2632, 0.0
  %v2697 = vmax.f32 %v2633, 0.0
  %v2698 = vmax.f32 %v2634, 0.0
  %v2699 = vmax.f32 %v2635, 0.0
  %v2700 = vmax.f32 %v2636, 0.0
  %v2701 = vmax.f32 %v2637, 0.0
  %v2702 = vmax.f32 %v2638, 0.0
  %v2703 = vmax.f32 %v2639, 0.0
  %v2704 = vmax.f32 %v2640, 0.0
  %v2705 = vmax.f32 %v2641, 0.0
  %v2706 = vmax.f32 %v2642, 0.0
  %v2707 = vmax.f32 %v2643, 0.0
  %v2708 = vmax.f32 %v2644, 0.0
  %v2709 = vmax.f32 %v2645, 0.0
  %v2710 = vmax.f32 %v2646, 0.0
  %v2711 = vmax.f32 %v2647, 0.0
  %v2712 = vmax.f32 %v2648, 0.0
  %v2713 = vmax.f32 %v2649, 0.0
  %v2714 = vmax.f32 %v2650, 0.0
  %v2715 = vmax.f32 %v2651, 0.0
  %v2716 = vmax.f32 %v2652, 0.0
  %v2717 = vmax.f32 %v2653, 0.0
  %v2718 = vmax.f32 %v2654, 0.0
  %v2719 = vmax.f32 %v2655, 0.0
  %v2720 = vmax.f32 %v2656, 0.0
  %v2721 = vmax.f32 %v2657, 0.0
  %v2722 = vmax.f32 %v2658, 0.0
  %v2723 = vmax.f32 %v2659, 0.0
  %v2724 = vmax.f32 %v2660, 0.0
  %v2725 = vmax.f32 %v2661, 0.0
  %v2726 = vmax.f32 %v2662, 0.0
  %v2727 = vmax.f32 %v2663, 0.0
  %v2728 = vmax.f32 %v2664, 0.0
  %v2729 = vmax.f32 %v2665, 0.0
  %v2730 = vmin.f32 %v2666, 6.0
  %v2731 = vmin.f32 %v2667, 6.0
  %v2732 = vmin.f32 %v2668, 6.0
  %v2733 = vmin.f32 %v2669, 6.0
  %v2734 = vmin.f32 %v2670, 6.0
  %v2735 = vmin.f32 %v2671, 6.0
  %v2736 = vmin.f32 %v2672, 6.0
  %v2737 = vmin.f32 %v2673, 6.0
  %v2738 = vmin.f32 %v2674, 6.0
  %v2739 = vmin.f32 %v2675, 6.0
  %v2740 = vmin.f32 %v2676, 6.0
  %v2741 = vmin.f32 %v2677, 6.0
  %v2742 = vmin.f32 %v2678, 6.0
  %v2743 = vmin.f32 %v2679, 6.0
  %v2744 = vmin.f32 %v2680, 6.0
  %v2745 = vmin.f32 %v2681, 6.0
  %v2746 = vmin.f32 %v2682, 6.0
  %v2747 = vmin.f32 %v2683, 6.0
  %v2748 = vmin.f32 %v2684, 6.0
  %v2749 = vmin.f32 %v2685, 6.0
  %v2750 = vmin.f32 %v2686, 6.0
  %v2751 = vmin.f32 %v2687, 6.0
  %v2752 = vmin.f32 %v2688, 6.0
  %v2753 = vmin.f32 %v2689, 6.0
  %v2754 = vmin.f32 %v2690, 6.0
  %v2755 = vmin.f32 %v2691, 6.0
  %v2756 = vmin.f32 %v2692, 6.0
  %v2757 = vmin.f32 %v2693, 6.0
  %v2758 = vmin.f32 %v2694, 6.0
  %v2759 = vmin.f32 %v2695, 6.0
  %v2760 = vmin.f32 %v2696, 6.0
  %v2761 = vmin.f32 %v2697, 6.0
  %v2762 = vmin.f32 %v2698, 6.0
  %v2763 = vmin.f32 %v2699, 6.0
  %v2764 = vmin.f32 %v2700, 6.0
  %v2765 = vmin.f32 %v2701, 6.0
  %v2766 = vmin.f32 %v2702, 6.0
  %v2767 = vmin.f32 %v2703, 6.0
  %v2768 = vmin.f32 %v2704, 6.0
  %v2769 = vmin.f32 %v2705, 6.0
  %v2770 = vmin.f32 %v2706, 6.0
  %v2771 = vmin.f32 %v2707, 6.0
  %v2772 = vmin.f32 %v2708, 6.0
  %v2773 = vmin.f32 %v2709, 6.0
  %v2774 = vmin.f32 %v2710, 6.0
  %v2775 = vmin.f32 %v2711, 6.0
  %v2776 = vmin.f32 %v2712, 6.0
  %v2777 = vmin.f32 %v2713, 6.0
  %v2778 = vmin.f32 %v2714, 6.0
  %v2779 = vmin.f32 %v2715, 6.0
  %v2780 = vmin.f32 %v2716, 6.0
  %v2781 = vmin.f32 %v2717, 6.0
  %v2782 = vmin.f32 %v2718, 6.0
  %v2783 = vmin.f32 %v2719, 6.0
  %v2784 = vmin.f32 %v2720, 6.0
  %v2785 = vmin.f32 %v2721, 6.0
  %v2786 = vmin.f32 %v2722, 6.0
  %v2787 = vmin.f32 %v2723, 6.0
  %v2788 = vmin.f32 %v2724, 6.0
  %v2789 = vmin.f32 %v2725, 6.0
  %v2790 = vmin.f32 %v2726, 6.0
  %v2791 = vmin.f32 %v2727, 6.0
  %v2792 = vmin.f32 %v2728, 6.0
  %v2793 = vmin.f32 %v2729, 6.0
  %v2794 = vmul.f32 %v2443, %v2730
  %v2795 = vmul.f32 %v2445, %v2731
  %v2796 = vmul.f32 %v2448, %v2732
  %v2797 = vmul.f32 %v2450, %v2733
  %v2798 = vmul.f32 %v2453, %v2734
  %v2799 = vmul.f32 %v2455, %v2735
  %v2800 = vmul.f32 %v2458, %v2736
  %v2801 = vmul.f32 %v2460, %v2737
  %v2802 = vmul.f32 %v2463, %v2738
  %v2803 = vmul.f32 %v2465, %v2739
  %v2804 = vmul.f32 %v2468, %v2740
  %v2805 = vmul.f32 %v2470, %v2741
  %v2806 = vmul.f32 %v2473, %v2742
  %v2807 = vmul.f32 %v2475, %v2743
  %v2808 = vmul.f32 %v2478, %v2744
  %v2809 = vmul.f32 %v2480, %v2745
  %v2810 = vmul.f32 %v2483, %v2746
  %v2811 = vmul.f32 %v2485, %v2747
  %v2812 = vmul.f32 %v2488, %v2748
  %v2813 = vmul.f32 %v2490, %v2749
  %v2814 = vmul.f32 %v2493, %v2750
  %v2815 = vmul.f32 %v2495, %v2751
  %v2816 = vmul.f32 %v2498, %v2752
  %v2817 = vmul.f32 %v2500, %v2753
  %v2818 = vmul.f32 %v2503, %v2754
  %v2819 = vmul.f32 %v2505, %v2755
  %v2820 = vmul.f32 %v2508, %v2756
  %v2821 = vmul.f32 %v2510, %v2757
  %v2822 = vmul.f32 %v2513, %v2758
  %v2823 = vmul.f32 %v2515, %v2759
  %v2824 = vmul.f32 %v2518, %v2760
  %v2825 = vmul.f32 %v2520, %v2761
  %v2826 = vmul.f32 %v2523, %v2762
  %v2827 = vmul.f32 %v2525, %v2763
  %v2828 = vmul.f32 %v2528, %v2764
  %v2829 = vmul.f32 %v2530, %v2765
  %v2830 = vmul.f32 %v2533, %v2766
  %v2831 = vmul.f32 %v2535, %v2767
  %v2832 = vmul.f32 %v2538, %v2768
  %v2833 = vmul.f32 %v2540, %v2769
  %v2834 = vmul.f32 %v2543, %v2770
  %v2835 = vmul.f32 %v2545, %v2771
  %v2836 = vmul.f32 %v2548, %v2772
  %v2837 = vmul.f32 %v2550, %v2773
  %v2838 = vmul.f32 %v2553, %v2774
  %v2839 = vmul.f32 %v2555, %v2775
  %v2840 = vmul.f32 %v2558, %v2776
  %v2841 = vmul.f32 %v2560, %v2777
  %v2842 = vmul.f32 %v2563, %v2778
  %v2843 = vmul.f32 %v2565, %v2779
  %v2844 = vmul.f32 %v2568, %v2780
  %v2845 = vmul.f32 %v2570, %v2781
  %v2846 = vmul.f32 %v2573, %v2782
  %v2847 = vmul.f32 %v2575, %v2783
  %v2848 = vmul.f32 %v2578, %v2784
  %v2849 = vmul.f32 %v2580, %v2785
  %v2850 = vmul.f32 %v2583, %v2786
  %v2851 = vmul.f32 %v2585, %v2787
  %v2852 = vmul.f32 %v2588, %v2788
  %v2853 = vmul.f32 %v2590, %v2789
  %v2854 = vmul.f32 %v2593, %v2790
  %v2855 = vmul.f32 %v2595, %v2791
  %v2856 = vmul.f32 %v2598, %v2792
  %v2857 = vmul.f32 %v2600, %v2793
  %v2858 = vmul.f32 %v2794, 0.16666667
  %v2859 = vmul.f32 %v2795, 0.16666667
  %v2860 = vmul.f32 %v2796, 0.16666667
  %v2861 = vmul.f32 %v2797, 0.16666667
  %v2862 = vmul.f32 %v2798, 0.16666667
  %v2863 = vmul.f32 %v2799, 0.16666667
  %v2864 = vmul.f32 %v2800, 0.16666667
  %v2865 = vmul.f32 %v2801, 0.16666667
  %v2866 = vmul.f32 %v2802, 0.16666667
  %v2867 = vmul.f32 %v2803, 0.16666667
  %v2868 = vmul.f32 %v2804, 0.16666667
  %v2869 = vmul.f32 %v2805, 0.16666667
  %v2870 = vmul.f32 %v2806, 0.16666667
  %v2871 = vmul.f32 %v2807, 0.16666667
  %v2872 = vmul.f32 %v2808, 0.16666667
  %v2873 = vmul.f32 %v2809, 0.16666667
  %v2874 = vmul.f32 %v2810, 0.16666667
  %v2875 = vmul.f32 %v2811, 0.16666667
  %v2876 = vmul.f32 %v2812, 0.16666667
  %v2877 = vmul.f32 %v2813, 0.16666667
  %v2878 = vmul.f32 %v2814, 0.16666667
  %v2879 = vmul.f32 %v2815, 0.16666667
  %v2880 = vmul.f32 %v2816, 0.16666667
  %v2881 = vmul.f32 %v2817, 0.16666667
  %v2882 = vmul.f32 %v2818, 0.16666667
  %v2883 = vmul.f32 %v2819, 0.16666667
  %v2884 = vmul.f32 %v2820, 0.16666667
  %v2885 = vmul.f32 %v2821, 0.16666667
  %v2886 = vmul.f32 %v2822, 0.16666667
  %v2887 = vmul.f32 %v2823, 0.16666667
  %v2888 = vmul.f32 %v2824, 0.16666667
  %v2889 = vmul.f32 %v2825, 0.16666667
  %v2890 = vmul.f32 %v2826, 0.16666667
  %v2891 = vmul.f32 %v2827, 0.16666667
  %v2892 = vmul.f32 %v2828, 0.16666667
  %v2893 = vmul.f32 %v2829, 0.16666667
  %v2894 = vmul.f32 %v2830, 0.16666667
  %v2895 = vmul.f32 %v2831, 0.16666667
  %v2896 = vmul.f32 %v2832, 0.16666667
  %v2897 = vmul.f32 %v2833, 0.16666667
  %v2898 = vmul.f32 %v2834, 0.16666667
  %v2899 = vmul.f32 %v2835, 0.16666667
  %v2900 = vmul.f32 %v2836, 0.16666667
  %v2901 = vmul.f32 %v2837, 0.16666667
  %v2902 = vmul.f32 %v2838, 0.16666667
  %v2903 = vmul.f32 %v2839, 0.16666667
  %v2904 = vmul.f32 %v2840, 0.16666667
  %v2905 = vmul.f32 %v2841, 0.16666667
  %v2906 = vmul.f32 %v2842, 0.16666667
  %v2907 = vmul.f32 %v2843, 0.16666667
  %v2908 = vmul.f32 %v2844, 0.16666667
  %v2909 = vmul.f32 %v2845, 0.16666667
  %v2910 = vmul.f32 %v2846, 0.16666667
  %v2911 = vmul.f32 %v2847, 0.16666667
  %v2912 = vmul.f32 %v2848, 0.16666667
  %v2913 = vmul.f32 %v2849, 0.16666667
  %v2914 = vmul.f32 %v2850, 0.16666667
  %v2915 = vmul.f32 %v2851, 0.16666667
  %v2916 = vmul.f32 %v2852, 0.16666667
  %v2917 = vmul.f32 %v2853, 0.16666667
  %v2918 = vmul.f32 %v2854, 0.16666667
  %v2919 = vmul.f32 %v2855, 0.16666667
  %v2920 = vmul.f32 %v2856, 0.16666667
  %v2921 = vmul.f32 %v2857, 0.16666667
  %vm2922 = vcmask 130048
  %v2923 = vsel %vm2922, %v2858, 0.0
  %v2924 = vsel %vm2922, %v2859, 0.0
  %v2925 = vadd.f32 %v2923, %v2924
  %v2926 = vsel %vm2922, %v2860, 0.0
  %v2927 = vadd.f32 %v2925, %v2926
  %v2928 = vsel %vm2922, %v2861, 0.0
  %v2929 = vadd.f32 %v2927, %v2928
  %v2930 = vsel %vm2922, %v2862, 0.0
  %v2931 = vadd.f32 %v2929, %v2930
  %v2932 = vsel %vm2922, %v2863, 0.0
  %v2933 = vadd.f32 %v2931, %v2932
  %v2934 = vsel %vm2922, %v2864, 0.0
  %v2935 = vadd.f32 %v2933, %v2934
  %v2936 = vsel %vm2922, %v2865, 0.0
  %v2937 = vadd.f32 %v2935, %v2936
  %v2938 = vrot.slane %v2937, 4
  %v2939 = vadd.f32 %v2937, %v2938
  %v2940 = vrot.slane %v2939, 2
  %v2941 = vadd.f32 %v2939, %v2940
  %v2942 = vrot.slane %v2941, 1
  %v2943 = vadd.f32 %v2941, %v2942
  %vm2944 = vcmask 122880
  %2945 = vst.msk [vmem:[#allocation3] sm:$0x1] %vm2944, %v2943
  %v2946 = vsel %vm2922, %v2866, 0.0
  %v2947 = vsel %vm2922, %v2867, 0.0
  %v2948 = vadd.f32 %v2946, %v2947
  %v2949 = vsel %vm2922, %v2868, 0.0
  %v2950 = vadd.f32 %v2948, %v2949
  %v2951 = vsel %vm2922, %v2869, 0.0
  %v2952 = vadd.f32 %v2950, %v2951
  %v2953 = vsel %vm2922, %v2870, 0.0
  %v2954 = vadd.f32 %v2952, %v2953
  %v2955 = vsel %vm2922, %v2871, 0.0
  %v2956 = vadd.f32 %v2954, %v2955
  %v2957 = vsel %vm2922, %v2872, 0.0
  %v2958 = vadd.f32 %v2956, %v2957
  %v2959 = vsel %vm2922, %v2873, 0.0
  %v2960 = vadd.f32 %v2958, %v2959
  %v2961 = vrot.slane %v2960, 4
  %v2962 = vadd.f32 %v2960, %v2961
  %v2963 = vrot.slane %v2962, 2
  %v2964 = vadd.f32 %v2962, %v2963
  %v2965 = vrot.slane %v2964, 1
  %v2966 = vadd.f32 %v2964, %v2965
  %2967 = vst.msk [vmem:[#allocation3 + $0x1] sm:$0x1] %vm2944, %v2966
  %v2968 = vsel %vm2922, %v2874, 0.0
  %v2969 = vsel %vm2922, %v2875, 0.0
  %v2970 = vadd.f32 %v2968, %v2969
  %v2971 = vsel %vm2922, %v2876, 0.0
  %v2972 = vadd.f32 %v2970, %v2971
  %v2973 = vsel %vm2922, %v2877, 0.0
  %v2974 = vadd.f32 %v2972, %v2973
  %v2975 = vsel %vm2922, %v2878, 0.0
  %v2976 = vadd.f32 %v2974, %v2975
  %v2977 = vsel %vm2922, %v2879, 0.0
  %v2978 = vadd.f32 %v2976, %v2977
  %v2979 = vsel %vm2922, %v2880, 0.0
  %v2980 = vadd.f32 %v2978, %v2979
  %v2981 = vsel %vm2922, %v2881, 0.0
  %v2982 = vadd.f32 %v2980, %v2981
  %v2983 = vrot.slane %v2982, 4
  %v2984 = vadd.f32 %v2982, %v2983
  %v2985 = vrot.slane %v2984, 2
  %v2986 = vadd.f32 %v2984, %v2985
  %v2987 = vrot.slane %v2986, 1
  %v2988 = vadd.f32 %v2986, %v2987
  %2989 = vst.msk [vmem:[#allocation3 + $0x2] sm:$0x1] %vm2944, %v2988
  %v2990 = vsel %vm2922, %v2882, 0.0
  %v2991 = vsel %vm2922, %v2883, 0.0
  %v2992 = vadd.f32 %v2990, %v2991
  %v2993 = vsel %vm2922, %v2884, 0.0
  %v2994 = vadd.f32 %v2992, %v2993
  %v2995 = vsel %vm2922, %v2885, 0.0
  %v2996 = vadd.f32 %v2994, %v2995
  %v2997 = vsel %vm2922, %v2886, 0.0
  %v2998 = vadd.f32 %v2996, %v2997
  %v2999 = vsel %vm2922, %v2887, 0.0
  %v3000 = vadd.f32 %v2998, %v2999
  %v3001 = vsel %vm2922, %v2888, 0.0
  %v3002 = vadd.f32 %v3000, %v3001
  %v3003 = vsel %vm2922, %v2889, 0.0
  %v3004 = vadd.f32 %v3002, %v3003
  %v3005 = vrot.slane %v3004, 4
  %v3006 = vadd.f32 %v3004, %v3005
  %v3007 = vrot.slane %v3006, 2
  %v3008 = vadd.f32 %v3006, %v3007
  %v3009 = vrot.slane %v3008, 1
  %v3010 = vadd.f32 %v3008, %v3009
  %3011 = vst.msk [vmem:[#allocation3 + $0x3] sm:$0x1] %vm2944, %v3010
  %v3012 = vsel %vm2922, %v2890, 0.0
  %v3013 = vsel %vm2922, %v2891, 0.0
  %v3014 = vadd.f32 %v3012, %v3013
  %v3015 = vsel %vm2922, %v2892, 0.0
  %v3016 = vadd.f32 %v3014, %v3015
  %v3017 = vsel %vm2922, %v2893, 0.0
  %v3018 = vadd.f32 %v3016, %v3017
  %v3019 = vsel %vm2922, %v2894, 0.0
  %v3020 = vadd.f32 %v3018, %v3019
  %v3021 = vsel %vm2922, %v2895, 0.0
  %v3022 = vadd.f32 %v3020, %v3021
  %v3023 = vsel %vm2922, %v2896, 0.0
  %v3024 = vadd.f32 %v3022, %v3023
  %v3025 = vsel %vm2922, %v2897, 0.0
  %v3026 = vadd.f32 %v3024, %v3025
  %v3027 = vrot.slane %v3026, 4
  %v3028 = vadd.f32 %v3026, %v3027
  %v3029 = vrot.slane %v3028, 2
  %v3030 = vadd.f32 %v3028, %v3029
  %v3031 = vrot.slane %v3030, 1
  %v3032 = vadd.f32 %v3030, %v3031
  %3033 = vst.msk [vmem:[#allocation3 + $0x4] sm:$0x1] %vm2944, %v3032
  %v3034 = vsel %vm2922, %v2898, 0.0
  %v3035 = vsel %vm2922, %v2899, 0.0
  %v3036 = vadd.f32 %v3034, %v3035
  %v3037 = vsel %vm2922, %v2900, 0.0
  %v3038 = vadd.f32 %v3036, %v3037
  %v3039 = vsel %vm2922, %v2901, 0.0
  %v3040 = vadd.f32 %v3038, %v3039
  %v3041 = vsel %vm2922, %v2902, 0.0
  %v3042 = vadd.f32 %v3040, %v3041
  %v3043 = vsel %vm2922, %v2903, 0.0
  %v3044 = vadd.f32 %v3042, %v3043
  %v3045 = vsel %vm2922, %v2904, 0.0
  %v3046 = vadd.f32 %v3044, %v3045
  %v3047 = vsel %vm2922, %v2905, 0.0
  %v3048 = vadd.f32 %v3046, %v3047
  %v3049 = vrot.slane %v3048, 4
  %v3050 = vadd.f32 %v3048, %v3049
  %v3051 = vrot.slane %v3050, 2
  %v3052 = vadd.f32 %v3050, %v3051
  %v3053 = vrot.slane %v3052, 1
  %v3054 = vadd.f32 %v3052, %v3053
  %3055 = vst.msk [vmem:[#allocation3 + $0x5] sm:$0x1] %vm2944, %v3054
  %v3056 = vsel %vm2922, %v2906, 0.0
  %v3057 = vsel %vm2922, %v2907, 0.0
  %v3058 = vadd.f32 %v3056, %v3057
  %v3059 = vsel %vm2922, %v2908, 0.0
  %v3060 = vadd.f32 %v3058, %v3059
  %v3061 = vsel %vm2922, %v2909, 0.0
  %v3062 = vadd.f32 %v3060, %v3061
  %v3063 = vsel %vm2922, %v2910, 0.0
  %v3064 = vadd.f32 %v3062, %v3063
  %v3065 = vsel %vm2922, %v2911, 0.0
  %v3066 = vadd.f32 %v3064, %v3065
  %v3067 = vsel %vm2922, %v2912, 0.0
  %v3068 = vadd.f32 %v3066, %v3067
  %v3069 = vsel %vm2922, %v2913, 0.0
  %v3070 = vadd.f32 %v3068, %v3069
  %v3071 = vrot.slane %v3070, 4
  %v3072 = vadd.f32 %v3070, %v3071
  %v3073 = vrot.slane %v3072, 2
  %v3074 = vadd.f32 %v3072, %v3073
  %v3075 = vrot.slane %v3074, 1
  %v3076 = vadd.f32 %v3074, %v3075
  %3077 = vst.msk [vmem:[#allocation3 + $0x6] sm:$0x1] %vm2944, %v3076
  %v3078 = vsel %vm2922, %v2914, 0.0
  %v3079 = vsel %vm2922, %v2915, 0.0
  %v3080 = vadd.f32 %v3078, %v3079
  %v3081 = vsel %vm2922, %v2916, 0.0
  %v3082 = vadd.f32 %v3080, %v3081
  %v3083 = vsel %vm2922, %v2917, 0.0
  %v3084 = vadd.f32 %v3082, %v3083
  %v3085 = vsel %vm2922, %v2918, 0.0
  %v3086 = vadd.f32 %v3084, %v3085
  %v3087 = vsel %vm2922, %v2919, 0.0
  %v3088 = vadd.f32 %v3086, %v3087
  %v3089 = vsel %vm2922, %v2920, 0.0
  %v3090 = vadd.f32 %v3088, %v3089
  %v3091 = vsel %vm2922, %v2921, 0.0
  %v3092 = vadd.f32 %v3090, %v3091
  %v3093 = vrot.slane %v3092, 4
  %v3094 = vadd.f32 %v3092, %v3093
  %v3095 = vrot.slane %v3094, 2
  %v3096 = vadd.f32 %v3094, %v3095
  %v3097 = vrot.slane %v3096, 1
  %v3098 = vadd.f32 %v3096, %v3097
  %3099 = vst.msk [vmem:[#allocation3 + $0x7] sm:$0x1] %vm2944, %v3098
  %v3100 = vld [vmem:[#allocation3] sm:$0xff]
  %v3101 = vld [vmem:[%s3] sm:$0xff]
  %v3102 = vld [vmem:[%s3 + $0x8] sm:$0xff]
  %v3103 = vld [vmem:[%s3 + $0x10] sm:$0xff]
  %v3104 = vld [vmem:[%s3 + $0x18] sm:$0xff]
  %v3105 = vld [vmem:[%s3 + $0x20] sm:$0xff]
  %v3106 = vld [vmem:[%s3 + $0x28] sm:$0xff]
  %v3107 = vld [vmem:[%s3 + $0x30] sm:$0xff]
  %v3108 = vld [vmem:[%s3 + $0x38] sm:$0xff]
  %v3109 = vld [vmem:[%s3 + $0x40] sm:$0xff]
  %v3110 = vld [vmem:[%s3 + $0x48] sm:$0xff]
  %v3111 = vld [vmem:[%s3 + $0x50] sm:$0xff]
  %v3112 = vld [vmem:[%s3 + $0x58] sm:$0xff]
  %v3113 = vld [vmem:[%s3 + $0x60] sm:$0xff]
  %v3114 = vld [vmem:[%s3 + $0x68] sm:$0xff]
  %v3115 = vld [vmem:[%s3 + $0x70] sm:$0xff]
  %v3116 = vld [vmem:[%s3 + $0x78] sm:$0xff]
  %v3117 = vld [vmem:[%s3 + $0x80] sm:$0xff]
  %v3118 = vld [vmem:[%s3 + $0x88] sm:$0xff]
  %v3119 = vld [vmem:[%s3 + $0x90] sm:$0xff]
  %v3120 = vld [vmem:[%s3 + $0x98] sm:$0xff]
  %v3121 = vld [vmem:[%s4] sm:$0xff]
  %v3122 = vld [vmem:[%s4 + $0x8] sm:$0x3]
  %v3125 = vperm.slane %v3121, 0
  %v3126 = vperm.slane %v3121, 1
  %v3127 = vperm.slane %v3121, 2
  %v3128 = vperm.slane %v3121, 3
  %v3129 = vperm.slane %v3121, 4
  %v3130 = vperm.slane %v3121, 5
  %v3131 = vperm.slane %v3121, 6
  %v3132 = vperm.slane %v3121, 7
  %v3133 = vperm.slane %v3122, 0
  %v3134 = vperm.slane %v3122, 1
  %v3146 = vsel %vm2922, %v3100, 0
  %3148 = vmatpush.msra.mxu0 0.0
  %3149 = vmatpush.msra.mxu0 0.0
  %3150 = vmatpush.msra.mxu0 0.0
  %3151 = vmatpush.msra.mxu0 0.0
  %3152 = vmatpush.msra.mxu0 0.0
  %3153 = vmatpush.msra.mxu0 0.0
  %3154 = vmatpush.msra.mxu0 0.0
  %3155 = vmatpush.msra.mxu0 0.0
  %3156 = vmatpush.msra.mxu0 0.0
  %3157 = vmatpush.msra.mxu0 0.0
  %3158 = vmatpush.msra.mxu0 0.0
  %3159 = vmatpush.msra.mxu0 0.0
  %3160 = vmatpush.msra.mxu0 0.0
  %3161 = vmatpush.msra.mxu0 0.0
  %3162 = vmatpush.msra.mxu0 %v3111
  %3163 = vmatpush.msra.mxu0 %v3101
  %3164 = vmatmul.f32.gmra.mxu0 %v3146
  %v3165 = vpop.f32.mrf.mxu0
  %v3166 = vadd.f32 %v3125, %v3165
  %3167 = vdwg.mxu0
  %3168 = vmatpush.msra.mxu0 0.0
  %3169 = vmatpush.msra.mxu0 0.0
  %3170 = vmatpush.msra.mxu0 0.0
  %3171 = vmatpush.msra.mxu0 0.0
  %3172 = vmatpush.msra.mxu0 0.0
  %3173 = vmatpush.msra.mxu0 0.0
  %3174 = vmatpush.msra.mxu0 0.0
  %3175 = vmatpush.msra.mxu0 0.0
  %3176 = vmatpush.msra.mxu0 0.0
  %3177 = vmatpush.msra.mxu0 0.0
  %3178 = vmatpush.msra.mxu0 0.0
  %3179 = vmatpush.msra.mxu0 0.0
  %3180 = vmatpush.msra.mxu0 0.0
  %3181 = vmatpush.msra.mxu0 0.0
  %3182 = vmatpush.msra.mxu0 %v3112
  %3183 = vmatpush.msra.mxu0 %v3102
  %3184 = vmatmul.f32.gmra.mxu0 %v3146
  %v3185 = vpop.f32.mrf.mxu0
  %v3186 = vadd.f32 %v3126, %v3185
  %3187 = vdwg.mxu0
  %3188 = vmatpush.msra.mxu0 0.0
  %3189 = vmatpush.msra.mxu0 0.0
  %3190 = vmatpush.msra.mxu0 0.0
  %3191 = vmatpush.msra.mxu0 0.0
  %3192 = vmatpush.msra.mxu0 0.0
  %3193 = vmatpush.msra.mxu0 0.0
  %3194 = vmatpush.msra.mxu0 0.0
  %3195 = vmatpush.msra.mxu0 0.0
  %3196 = vmatpush.msra.mxu0 0.0
  %3197 = vmatpush.msra.mxu0 0.0
  %3198 = vmatpush.msra.mxu0 0.0
  %3199 = vmatpush.msra.mxu0 0.0
  %3200 = vmatpush.msra.mxu0 0.0
  %3201 = vmatpush.msra.mxu0 0.0
  %3202 = vmatpush.msra.mxu0 %v3113
  %3203 = vmatpush.msra.mxu0 %v3103
  %3204 = vmatmul.f32.gmra.mxu0 %v3146
  %v3205 = vpop.f32.mrf.mxu0
  %v3206 = vadd.f32 %v3127, %v3205
  %3207 = vdwg.mxu0
  %3208 = vmatpush.msra.mxu0 0.0
  %3209 = vmatpush.msra.mxu0 0.0
  %3210 = vmatpush.msra.mxu0 0.0
  %3211 = vmatpush.msra.mxu0 0.0
  %3212 = vmatpush.msra.mxu0 0.0
  %3213 = vmatpush.msra.mxu0 0.0
  %3214 = vmatpush.msra.mxu0 0.0
  %3215 = vmatpush.msra.mxu0 0.0
  %3216 = vmatpush.msra.mxu0 0.0
  %3217 = vmatpush.msra.mxu0 0.0
  %3218 = vmatpush.msra.mxu0 0.0
  %3219 = vmatpush.msra.mxu0 0.0
  %3220 = vmatpush.msra.mxu0 0.0
  %3221 = vmatpush.msra.mxu0 0.0
  %3222 = vmatpush.msra.mxu0 %v3114
  %3223 = vmatpush.msra.mxu0 %v3104
  %3224 = vmatmul.f32.gmra.mxu0 %v3146
  %v3225 = vpop.f32.mrf.mxu0
  %v3226 = vadd.f32 %v3128, %v3225
  %3227 = vdwg.mxu0
  %3228 = vmatpush.msra.mxu0 0.0
  %3229 = vmatpush.msra.mxu0 0.0
  %3230 = vmatpush.msra.mxu0 0.0
  %3231 = vmatpush.msra.mxu0 0.0
  %3232 = vmatpush.msra.mxu0 0.0
  %3233 = vmatpush.msra.mxu0 0.0
  %3234 = vmatpush.msra.mxu0 0.0
  %3235 = vmatpush.msra.mxu0 0.0
  %3236 = vmatpush.msra.mxu0 0.0
  %3237 = vmatpush.msra.mxu0 0.0
  %3238 = vmatpush.msra.mxu0 0.0
  %3239 = vmatpush.msra.mxu0 0.0
  %3240 = vmatpush.msra.mxu0 0.0
  %3241 = vmatpush.msra.mxu0 0.0
  %3242 = vmatpush.msra.mxu0 %v3115
  %3243 = vmatpush.msra.mxu0 %v3105
  %3244 = vmatmul.f32.gmra.mxu0 %v3146
  %v3245 = vpop.f32.mrf.mxu0
  %v3246 = vadd.f32 %v3129, %v3245
  %3247 = vdwg.mxu0
  %3248 = vmatpush.msra.mxu0 0.0
  %3249 = vmatpush.msra.mxu0 0.0
  %3250 = vmatpush.msra.mxu0 0.0
  %3251 = vmatpush.msra.mxu0 0.0
  %3252 = vmatpush.msra.mxu0 0.0
  %3253 = vmatpush.msra.mxu0 0.0
  %3254 = vmatpush.msra.mxu0 0.0
  %3255 = vmatpush.msra.mxu0 0.0
  %3256 = vmatpush.msra.mxu0 0.0
  %3257 = vmatpush.msra.mxu0 0.0
  %3258 = vmatpush.msra.mxu0 0.0
  %3259 = vmatpush.msra.mxu0 0.0
  %3260 = vmatpush.msra.mxu0 0.0
  %3261 = vmatpush.msra.mxu0 0.0
  %3262 = vmatpush.msra.mxu0 %v3116
  %3263 = vmatpush.msra.mxu0 %v3106
  %3264 = vmatmul.f32.gmra.mxu0 %v3146
  %v3265 = vpop.f32.mrf.mxu0
  %v3266 = vadd.f32 %v3130, %v3265
  %3267 = vdwg.mxu0
  %3268 = vmatpush.msra.mxu0 0.0
  %3269 = vmatpush.msra.mxu0 0.0
  %3270 = vmatpush.msra.mxu0 0.0
  %3271 = vmatpush.msra.mxu0 0.0
  %3272 = vmatpush.msra.mxu0 0.0
  %3273 = vmatpush.msra.mxu0 0.0
  %3274 = vmatpush.msra.mxu0 0.0
  %3275 = vmatpush.msra.mxu0 0.0
  %3276 = vmatpush.msra.mxu0 0.0
  %3277 = vmatpush.msra.mxu0 0.0
  %3278 = vmatpush.msra.mxu0 0.0
  %3279 = vmatpush.msra.mxu0 0.0
  %3280 = vmatpush.msra.mxu0 0.0
  %3281 = vmatpush.msra.mxu0 0.0
  %3282 = vmatpush.msra.mxu0 %v3117
  %3283 = vmatpush.msra.mxu0 %v3107
  %3284 = vmatmul.f32.gmra.mxu0 %v3146
  %v3285 = vpop.f32.mrf.mxu0
  %v3286 = vadd.f32 %v3131, %v3285
  %3287 = vdwg.mxu0
  %3288 = vmatpush.msra.mxu0 0.0
  %3289 = vmatpush.msra.mxu0 0.0
  %3290 = vmatpush.msra.mxu0 0.0
  %3291 = vmatpush.msra.mxu0 0.0
  %3292 = vmatpush.msra.mxu0 0.0
  %3293 = vmatpush.msra.mxu0 0.0
  %3294 = vmatpush.msra.mxu0 0.0
  %3295 = vmatpush.msra.mxu0 0.0
  %3296 = vmatpush.msra.mxu0 0.0
  %3297 = vmatpush.msra.mxu0 0.0
  %3298 = vmatpush.msra.mxu0 0.0
  %3299 = vmatpush.msra.mxu0 0.0
  %3300 = vmatpush.msra.mxu0 0.0
  %3301 = vmatpush.msra.mxu0 0.0
  %3302 = vmatpush.msra.mxu0 %v3118
  %3303 = vmatpush.msra.mxu0 %v3108
  %3304 = vmatmul.f32.gmra.mxu0 %v3146
  %v3305 = vpop.f32.mrf.mxu0
  %v3306 = vadd.f32 %v3132, %v3305
  %3307 = vdwg.mxu0
  %3308 = vmatpush.msra.mxu0 0.0
  %3309 = vmatpush.msra.mxu0 0.0
  %3310 = vmatpush.msra.mxu0 0.0
  %3311 = vmatpush.msra.mxu0 0.0
  %3312 = vmatpush.msra.mxu0 0.0
  %3313 = vmatpush.msra.mxu0 0.0
  %3314 = vmatpush.msra.mxu0 0.0
  %3315 = vmatpush.msra.mxu0 0.0
  %3316 = vmatpush.msra.mxu0 0.0
  %3317 = vmatpush.msra.mxu0 0.0
  %3318 = vmatpush.msra.mxu0 0.0
  %3319 = vmatpush.msra.mxu0 0.0
  %3320 = vmatpush.msra.mxu0 0.0
  %3321 = vmatpush.msra.mxu0 0.0
  %3322 = vmatpush.msra.mxu0 %v3119
  %3323 = vmatpush.msra.mxu0 %v3109
  %3324 = vmatmul.f32.gmra.mxu0 %v3146
  %v3325 = vpop.f32.mrf.mxu0
  %v3326 = vadd.f32 %v3133, %v3325
  %3327 = vdwg.mxu0
  %3328 = vmatpush.msra.mxu0 0.0
  %3329 = vmatpush.msra.mxu0 0.0
  %3330 = vmatpush.msra.mxu0 0.0
  %3331 = vmatpush.msra.mxu0 0.0
  %3332 = vmatpush.msra.mxu0 0.0
  %3333 = vmatpush.msra.mxu0 0.0
  %3334 = vmatpush.msra.mxu0 0.0
  %3335 = vmatpush.msra.mxu0 0.0
  %3336 = vmatpush.msra.mxu0 0.0
  %3337 = vmatpush.msra.mxu0 0.0
  %3338 = vmatpush.msra.mxu0 0.0
  %3339 = vmatpush.msra.mxu0 0.0
  %3340 = vmatpush.msra.mxu0 0.0
  %3341 = vmatpush.msra.mxu0 0.0
  %3342 = vmatpush.msra.mxu0 %v3120
  %3343 = vmatpush.msra.mxu0 %v3110
  %3344 = vmatmul.f32.gmra.mxu0 %v3146
  %v3345 = vpop.f32.mrf.mxu0
  %v3346 = vadd.f32 %v3134, %v3345
  %3347 = vdwg.mxu0
  %v3348 = vadd.f32 %v3166, 3.0
  %v3349 = vadd.f32 %v3186, 3.0
  %v3350 = vadd.f32 %v3206, 3.0
  %v3351 = vadd.f32 %v3226, 3.0
  %v3352 = vadd.f32 %v3246, 3.0
  %v3353 = vadd.f32 %v3266, 3.0
  %v3354 = vadd.f32 %v3286, 3.0
  %v3355 = vadd.f32 %v3306, 3.0
  %v3356 = vadd.f32 %v3326, 3.0
  %v3357 = vadd.f32 %v3346, 3.0
  %v3358 = vmax.f32 %v3348, 0.0
  %v3359 = vmax.f32 %v3349, 0.0
  %v3360 = vmax.f32 %v3350, 0.0
  %v3361 = vmax.f32 %v3351, 0.0
  %v3362 = vmax.f32 %v3352, 0.0
  %v3363 = vmax.f32 %v3353, 0.0
  %v3364 = vmax.f32 %v3354, 0.0
  %v3365 = vmax.f32 %v3355, 0.0
  %v3366 = vmax.f32 %v3356, 0.0
  %v3367 = vmax.f32 %v3357, 0.0
  %v3368 = vmin.f32 %v3358, 6.0
  %v3369 = vmin.f32 %v3359, 6.0
  %v3370 = vmin.f32 %v3360, 6.0
  %v3371 = vmin.f32 %v3361, 6.0
  %v3372 = vmin.f32 %v3362, 6.0
  %v3373 = vmin.f32 %v3363, 6.0
  %v3374 = vmin.f32 %v3364, 6.0
  %v3375 = vmin.f32 %v3365, 6.0
  %v3376 = vmin.f32 %v3366, 6.0
  %v3377 = vmin.f32 %v3367, 6.0
  %v3378 = vmul.f32 %v3166, %v3368
  %v3379 = vmul.f32 %v3186, %v3369
  %v3380 = vmul.f32 %v3206, %v3370
  %v3381 = vmul.f32 %v3226, %v3371
  %v3382 = vmul.f32 %v3246, %v3372
  %v3383 = vmul.f32 %v3266, %v3373
  %v3384 = vmul.f32 %v3286, %v3374
  %v3385 = vmul.f32 %v3306, %v3375
  %v3386 = vmul.f32 %v3326, %v3376
  %v3387 = vmul.f32 %v3346, %v3377
  %v3388 = vmul.f32 %v3378, 0.16666667
  %v3389 = vmul.f32 %v3379, 0.16666667
  %v3390 = vmul.f32 %v3380, 0.16666667
  %v3391 = vmul.f32 %v3381, 0.16666667
  %v3392 = vmul.f32 %v3382, 0.16666667
  %v3393 = vmul.f32 %v3383, 0.16666667
  %v3394 = vmul.f32 %v3384, 0.16666667
  %v3395 = vmul.f32 %v3385, 0.16666667
  %v3396 = vmul.f32 %v3386, 0.16666667
  %v3397 = vmul.f32 %v3387, 0.16666667
  %3398 = vst [vmem:[%s7] sm:$0xff] %v3388
  %3399 = vst [vmem:[%s7 + $0x8] sm:$0xff] %v3389
  %3400 = vst [vmem:[%s7 + $0x10] sm:$0xff] %v3390
  %3401 = vst [vmem:[%s7 + $0x18] sm:$0xff] %v3391
  %3402 = vst [vmem:[%s7 + $0x20] sm:$0xff] %v3392
  %3403 = vst [vmem:[%s7 + $0x28] sm:$0xff] %v3393
  %3404 = vst [vmem:[%s7 + $0x30] sm:$0xff] %v3394
  %3405 = vst [vmem:[%s7 + $0x38] sm:$0xff] %v3395
  %3406 = vst [vmem:[%s7 + $0x40] sm:$0xff] %v3396
  %3407 = vst [vmem:[%s7 + $0x48] sm:$0xff] %v3397
  %v3408 = vld [vmem:[%s5] sm:$0xff]
  %v3409 = vld [vmem:[%s5 + $0x8] sm:$0xff]
  %v3410 = vld [vmem:[%s5 + $0x10] sm:$0xff]
  %v3411 = vld [vmem:[%s5 + $0x18] sm:$0xff]
  %v3412 = vld [vmem:[%s5 + $0x20] sm:$0xff]
  %v3413 = vld [vmem:[%s5 + $0x28] sm:$0xff]
  %v3414 = vld [vmem:[%s5 + $0x30] sm:$0xff]
  %v3415 = vld [vmem:[%s5 + $0x38] sm:$0xff]
  %v3416 = vld [vmem:[%s5 + $0x40] sm:$0xff]
  %v3417 = vld [vmem:[%s5 + $0x48] sm:$0xff]
  %v3418 = vld [vmem:[%s5 + $0x50] sm:$0xff]
  %v3419 = vld [vmem:[%s5 + $0x58] sm:$0xff]
  %v3420 = vld [vmem:[%s5 + $0x60] sm:$0xff]
  %v3421 = vld [vmem:[%s5 + $0x68] sm:$0xff]
  %v3422 = vld [vmem:[%s5 + $0x70] sm:$0xff]
  %v3423 = vld [vmem:[%s5 + $0x78] sm:$0xff]
  %v3424 = vld [vmem:[%s5 + $0x80] sm:$0xff]
  %v3425 = vld [vmem:[%s5 + $0x88] sm:$0xff]
  %v3426 = vld [vmem:[%s5 + $0x90] sm:$0xff]
  %v3427 = vld [vmem:[%s5 + $0x98] sm:$0xff]
  %v3428 = vld [vmem:[%s5 + $0xa0] sm:$0xff]
  %v3429 = vld [vmem:[%s5 + $0xa8] sm:$0xff]
  %v3430 = vld [vmem:[%s5 + $0xb0] sm:$0xff]
  %v3431 = vld [vmem:[%s5 + $0xb8] sm:$0xff]
  %v3432 = vld [vmem:[%s5 + $0xc0] sm:$0xff]
  %v3433 = vld [vmem:[%s5 + $0xc8] sm:$0xff]
  %v3434 = vld [vmem:[%s5 + $0xd0] sm:$0xff]
  %v3435 = vld [vmem:[%s5 + $0xd8] sm:$0xff]
  %v3436 = vld [vmem:[%s5 + $0xe0] sm:$0xff]
  %v3437 = vld [vmem:[%s5 + $0xe8] sm:$0xff]
  %v3438 = vld [vmem:[%s5 + $0xf0] sm:$0xff]
  %v3439 = vld [vmem:[%s5 + $0xf8] sm:$0xff]
  %v3440 = vld [vmem:[%s5 + $0x100] sm:$0xff]
  %v3441 = vld [vmem:[%s5 + $0x108] sm:$0xff]
  %v3442 = vld [vmem:[%s5 + $0x110] sm:$0xff]
  %v3443 = vld [vmem:[%s5 + $0x118] sm:$0xff]
  %v3444 = vld [vmem:[%s5 + $0x120] sm:$0xff]
  %v3445 = vld [vmem:[%s5 + $0x128] sm:$0xff]
  %v3446 = vld [vmem:[%s5 + $0x130] sm:$0xff]
  %v3447 = vld [vmem:[%s5 + $0x138] sm:$0xff]
  %v3448 = vld [vmem:[%s5 + $0x140] sm:$0xff]
  %v3449 = vld [vmem:[%s5 + $0x148] sm:$0xff]
  %v3450 = vld [vmem:[%s5 + $0x150] sm:$0xff]
  %v3451 = vld [vmem:[%s5 + $0x158] sm:$0xff]
  %v3452 = vld [vmem:[%s5 + $0x160] sm:$0xff]
  %v3453 = vld [vmem:[%s5 + $0x168] sm:$0xff]
  %v3454 = vld [vmem:[%s5 + $0x170] sm:$0xff]
  %v3455 = vld [vmem:[%s5 + $0x178] sm:$0xff]
  %v3456 = vld [vmem:[%s5 + $0x180] sm:$0xff]
  %v3457 = vld [vmem:[%s5 + $0x188] sm:$0xff]
  %v3458 = vld [vmem:[%s5 + $0x190] sm:$0xff]
  %v3459 = vld [vmem:[%s5 + $0x198] sm:$0xff]
  %v3460 = vld [vmem:[%s5 + $0x1a0] sm:$0xff]
  %v3461 = vld [vmem:[%s5 + $0x1a8] sm:$0xff]
  %v3462 = vld [vmem:[%s5 + $0x1b0] sm:$0xff]
  %v3463 = vld [vmem:[%s5 + $0x1b8] sm:$0xff]
  %v3464 = vld [vmem:[%s5 + $0x1c0] sm:$0xff]
  %v3465 = vld [vmem:[%s5 + $0x1c8] sm:$0xff]
  %v3466 = vld [vmem:[%s5 + $0x1d0] sm:$0xff]
  %v3467 = vld [vmem:[%s5 + $0x1d8] sm:$0xff]
  %v3468 = vld [vmem:[%s5 + $0x1e0] sm:$0xff]
  %v3469 = vld [vmem:[%s5 + $0x1e8] sm:$0xff]
  %v3470 = vld [vmem:[%s5 + $0x1f0] sm:$0xff]
  %v3471 = vld [vmem:[%s5 + $0x1f8] sm:$0xff]
  %v3472 = vld [vmem:[%s5 + $0x200] sm:$0xff]
  %v3473 = vld [vmem:[%s5 + $0x208] sm:$0xff]
  %v3474 = vld [vmem:[%s5 + $0x210] sm:$0xff]
  %v3475 = vld [vmem:[%s5 + $0x218] sm:$0xff]
  %v3476 = vld [vmem:[%s5 + $0x220] sm:$0xff]
  %v3477 = vld [vmem:[%s5 + $0x228] sm:$0xff]
  %v3478 = vld [vmem:[%s5 + $0x230] sm:$0xff]
  %v3479 = vld [vmem:[%s5 + $0x238] sm:$0xff]
  %v3480 = vld [vmem:[%s5 + $0x240] sm:$0xff]
  %v3481 = vld [vmem:[%s5 + $0x248] sm:$0xff]
  %v3482 = vld [vmem:[%s5 + $0x250] sm:$0xff]
  %v3483 = vld [vmem:[%s5 + $0x258] sm:$0xff]
  %v3484 = vld [vmem:[%s5 + $0x260] sm:$0xff]
  %v3485 = vld [vmem:[%s5 + $0x268] sm:$0xff]
  %v3486 = vld [vmem:[%s5 + $0x270] sm:$0xff]
  %v3487 = vld [vmem:[%s5 + $0x278] sm:$0xff]
  %v3488 = vld [vmem:[%s5 + $0x280] sm:$0xff]
  %v3489 = vld [vmem:[%s5 + $0x288] sm:$0xff]
  %v3490 = vld [vmem:[%s5 + $0x290] sm:$0xff]
  %v3491 = vld [vmem:[%s5 + $0x298] sm:$0xff]
  %v3492 = vld [vmem:[%s5 + $0x2a0] sm:$0xff]
  %v3493 = vld [vmem:[%s5 + $0x2a8] sm:$0xff]
  %v3494 = vld [vmem:[%s5 + $0x2b0] sm:$0xff]
  %v3495 = vld [vmem:[%s5 + $0x2b8] sm:$0xff]
  %v3496 = vld [vmem:[%s5 + $0x2c0] sm:$0xff]
  %v3497 = vld [vmem:[%s5 + $0x2c8] sm:$0xff]
  %v3498 = vld [vmem:[%s5 + $0x2d0] sm:$0xff]
  %v3499 = vld [vmem:[%s5 + $0x2d8] sm:$0xff]
  %v3500 = vld [vmem:[%s5 + $0x2e0] sm:$0xff]
  %v3501 = vld [vmem:[%s5 + $0x2e8] sm:$0xff]
  %v3502 = vld [vmem:[%s5 + $0x2f0] sm:$0xff]
  %v3503 = vld [vmem:[%s5 + $0x2f8] sm:$0xff]
  %v3504 = vld [vmem:[%s5 + $0x300] sm:$0xff]
  %v3505 = vld [vmem:[%s5 + $0x308] sm:$0xff]
  %v3506 = vld [vmem:[%s5 + $0x310] sm:$0xff]
  %v3507 = vld [vmem:[%s5 + $0x318] sm:$0xff]
  %v3508 = vld [vmem:[%s5 + $0x320] sm:$0xff]
  %v3509 = vld [vmem:[%s5 + $0x328] sm:$0xff]
  %v3510 = vld [vmem:[%s5 + $0x330] sm:$0xff]
  %v3511 = vld [vmem:[%s5 + $0x338] sm:$0xff]
  %v3512 = vld [vmem:[%s5 + $0x340] sm:$0xff]
  %v3513 = vld [vmem:[%s5 + $0x348] sm:$0xff]
  %v3514 = vld [vmem:[%s5 + $0x350] sm:$0xff]
  %v3515 = vld [vmem:[%s5 + $0x358] sm:$0xff]
  %v3516 = vld [vmem:[%s5 + $0x360] sm:$0xff]
  %v3517 = vld [vmem:[%s5 + $0x368] sm:$0xff]
  %v3518 = vld [vmem:[%s5 + $0x370] sm:$0xff]
  %v3519 = vld [vmem:[%s5 + $0x378] sm:$0xff]
  %v3520 = vld [vmem:[%s5 + $0x380] sm:$0xff]
  %v3521 = vld [vmem:[%s5 + $0x388] sm:$0xff]
  %v3522 = vld [vmem:[%s5 + $0x390] sm:$0xff]
  %v3523 = vld [vmem:[%s5 + $0x398] sm:$0xff]
  %v3524 = vld [vmem:[%s5 + $0x3a0] sm:$0xff]
  %v3525 = vld [vmem:[%s5 + $0x3a8] sm:$0xff]
  %v3526 = vld [vmem:[%s5 + $0x3b0] sm:$0xff]
  %v3527 = vld [vmem:[%s5 + $0x3b8] sm:$0xff]
  %v3528 = vld [vmem:[%s5 + $0x3c0] sm:$0xff]
  %v3529 = vld [vmem:[%s5 + $0x3c8] sm:$0xff]
  %v3530 = vld [vmem:[%s5 + $0x3d0] sm:$0xff]
  %v3531 = vld [vmem:[%s5 + $0x3d8] sm:$0xff]
  %v3532 = vld [vmem:[%s5 + $0x3e0] sm:$0xff]
  %v3533 = vld [vmem:[%s5 + $0x3e8] sm:$0xff]
  %v3534 = vld [vmem:[%s5 + $0x3f0] sm:$0xff]
  %v3535 = vld [vmem:[%s5 + $0x3f8] sm:$0xff]
  %v3536 = vld [vmem:[%s5 + $0x400] sm:$0xff]
  %v3537 = vld [vmem:[%s5 + $0x408] sm:$0xff]
  %v3538 = vld [vmem:[%s5 + $0x410] sm:$0xff]
  %v3539 = vld [vmem:[%s5 + $0x418] sm:$0xff]
  %v3540 = vld [vmem:[%s5 + $0x420] sm:$0xff]
  %v3541 = vld [vmem:[%s5 + $0x428] sm:$0xff]
  %v3542 = vld [vmem:[%s5 + $0x430] sm:$0xff]
  %v3543 = vld [vmem:[%s5 + $0x438] sm:$0xff]
  %v3544 = vld [vmem:[%s5 + $0x440] sm:$0xff]
  %v3545 = vld [vmem:[%s5 + $0x448] sm:$0xff]
  %v3546 = vld [vmem:[%s5 + $0x450] sm:$0xff]
  %v3547 = vld [vmem:[%s5 + $0x458] sm:$0xff]
  %v3548 = vld [vmem:[%s5 + $0x460] sm:$0xff]
  %v3549 = vld [vmem:[%s5 + $0x468] sm:$0xff]
  %v3550 = vld [vmem:[%s5 + $0x470] sm:$0xff]
  %v3551 = vld [vmem:[%s5 + $0x478] sm:$0xff]
  %v3552 = vld [vmem:[%s5 + $0x480] sm:$0xff]
  %v3553 = vld [vmem:[%s5 + $0x488] sm:$0xff]
  %v3554 = vld [vmem:[%s5 + $0x490] sm:$0xff]
  %v3555 = vld [vmem:[%s5 + $0x498] sm:$0xff]
  %v3556 = vld [vmem:[%s5 + $0x4a0] sm:$0xff]
  %v3557 = vld [vmem:[%s5 + $0x4a8] sm:$0xff]
  %v3558 = vld [vmem:[%s5 + $0x4b0] sm:$0xff]
  %v3559 = vld [vmem:[%s5 + $0x4b8] sm:$0xff]
  %v3560 = vld [vmem:[%s5 + $0x4c0] sm:$0xff]
  %v3561 = vld [vmem:[%s5 + $0x4c8] sm:$0xff]
  %v3562 = vld [vmem:[%s5 + $0x4d0] sm:$0xff]
  %v3563 = vld [vmem:[%s5 + $0x4d8] sm:$0xff]
  %v3564 = vld [vmem:[%s5 + $0x4e0] sm:$0xff]
  %v3565 = vld [vmem:[%s5 + $0x4e8] sm:$0xff]
  %v3566 = vld [vmem:[%s5 + $0x4f0] sm:$0xff]
  %v3567 = vld [vmem:[%s5 + $0x4f8] sm:$0xff]
  %v3568 = vld [vmem:[%s6] sm:$0x1]
  %v3570 = vperm.slane %v3568, 0
  %3572 = vmatpush.msra.mxu0 %v3423
  %3573 = vmatpush.msra.mxu0 %v3422
  %3574 = vmatpush.msra.mxu0 %v3421
  %3575 = vmatpush.msra.mxu0 %v3420
  %3576 = vmatpush.msra.mxu0 %v3419
  %3577 = vmatpush.msra.mxu0 %v3418
  %3578 = vmatpush.msra.mxu0 %v3417
  %3579 = vmatpush.msra.mxu0 %v3416
  %3580 = vmatpush.msra.mxu0 %v3415
  %3581 = vmatpush.msra.mxu0 %v3414
  %3582 = vmatpush.msra.mxu0 %v3413
  %3583 = vmatpush.msra.mxu0 %v3412
  %3584 = vmatpush.msra.mxu0 %v3411
  %3585 = vmatpush.msra.mxu0 %v3410
  %3586 = vmatpush.msra.mxu0 %v3409
  %3587 = vmatpush.msra.mxu0 %v3408
  %3588 = vmatmul.f32.gmra.mxu0 %v3388
  %v3589 = vpop.f32.mrf.mxu0
  %v3590 = vadd.f32 %v3570, %v3589
  %3591 = vdwg.mxu0
  %3592 = vmatpush.msra.mxu0 %v3439
  %3593 = vmatpush.msra.mxu0 %v3438
  %3594 = vmatpush.msra.mxu0 %v3437
  %3595 = vmatpush.msra.mxu0 %v3436
  %3596 = vmatpush.msra.mxu0 %v3435
  %3597 = vmatpush.msra.mxu0 %v3434
  %3598 = vmatpush.msra.mxu0 %v3433
  %3599 = vmatpush.msra.mxu0 %v3432
  %3600 = vmatpush.msra.mxu0 %v3431
  %3601 = vmatpush.msra.mxu0 %v3430
  %3602 = vmatpush.msra.mxu0 %v3429
  %3603 = vmatpush.msra.mxu0 %v3428
  %3604 = vmatpush.msra.mxu0 %v3427
  %3605 = vmatpush.msra.mxu0 %v3426
  %3606 = vmatpush.msra.mxu0 %v3425
  %3607 = vmatpush.msra.mxu0 %v3424
  %3608 = vmatmul.f32.gmra.mxu0 %v3389
  %v3609 = vpop.f32.mrf.mxu0
  %v3610 = vadd.f32 %v3590, %v3609
  %3611 = vdwg.mxu0
  %3612 = vmatpush.msra.mxu0 %v3455
  %3613 = vmatpush.msra.mxu0 %v3454
  %3614 = vmatpush.msra.mxu0 %v3453
  %3615 = vmatpush.msra.mxu0 %v3452
  %3616 = vmatpush.msra.mxu0 %v3451
  %3617 = vmatpush.msra.mxu0 %v3450
  %3618 = vmatpush.msra.mxu0 %v3449
  %3619 = vmatpush.msra.mxu0 %v3448
  %3620 = vmatpush.msra.mxu0 %v3447
  %3621 = vmatpush.msra.mxu0 %v3446
  %3622 = vmatpush.msra.mxu0 %v3445
  %3623 = vmatpush.msra.mxu0 %v3444
  %3624 = vmatpush.msra.mxu0 %v3443
  %3625 = vmatpush.msra.mxu0 %v3442
  %3626 = vmatpush.msra.mxu0 %v3441
  %3627 = vmatpush.msra.mxu0 %v3440
  %3628 = vmatmul.f32.gmra.mxu0 %v3390
  %v3629 = vpop.f32.mrf.mxu0
  %v3630 = vadd.f32 %v3610, %v3629
  %3631 = vdwg.mxu0
  %3632 = vmatpush.msra.mxu0 %v3471
  %3633 = vmatpush.msra.mxu0 %v3470
  %3634 = vmatpush.msra.mxu0 %v3469
  %3635 = vmatpush.msra.mxu0 %v3468
  %3636 = vmatpush.msra.mxu0 %v3467
  %3637 = vmatpush.msra.mxu0 %v3466
  %3638 = vmatpush.msra.mxu0 %v3465
  %3639 = vmatpush.msra.mxu0 %v3464
  %3640 = vmatpush.msra.mxu0 %v3463
  %3641 = vmatpush.msra.mxu0 %v3462
  %3642 = vmatpush.msra.mxu0 %v3461
  %3643 = vmatpush.msra.mxu0 %v3460
  %3644 = vmatpush.msra.mxu0 %v3459
  %3645 = vmatpush.msra.mxu0 %v3458
  %3646 = vmatpush.msra.mxu0 %v3457
  %3647 = vmatpush.msra.mxu0 %v3456
  %3648 = vmatmul.f32.gmra.mxu0 %v3391
  %v3649 = vpop.f32.mrf.mxu0
  %v3650 = vadd.f32 %v3630, %v3649
  %3651 = vdwg.mxu0
  %3652 = vmatpush.msra.mxu0 %v3487
  %3653 = vmatpush.msra.mxu0 %v3486
  %3654 = vmatpush.msra.mxu0 %v3485
  %3655 = vmatpush.msra.mxu0 %v3484
  %3656 = vmatpush.msra.mxu0 %v3483
  %3657 = vmatpush.msra.mxu0 %v3482
  %3658 = vmatpush.msra.mxu0 %v3481
  %3659 = vmatpush.msra.mxu0 %v3480
  %3660 = vmatpush.msra.mxu0 %v3479
  %3661 = vmatpush.msra.mxu0 %v3478
  %3662 = vmatpush.msra.mxu0 %v3477
  %3663 = vmatpush.msra.mxu0 %v3476
  %3664 = vmatpush.msra.mxu0 %v3475
  %3665 = vmatpush.msra.mxu0 %v3474
  %3666 = vmatpush.msra.mxu0 %v3473
  %3667 = vmatpush.msra.mxu0 %v3472
  %3668 = vmatmul.f32.gmra.mxu0 %v3392
  %v3669 = vpop.f32.mrf.mxu0
  %v3670 = vadd.f32 %v3650, %v3669
  %3671 = vdwg.mxu0
  %3672 = vmatpush.msra.mxu0 %v3503
  %3673 = vmatpush.msra.mxu0 %v3502
  %3674 = vmatpush.msra.mxu0 %v3501
  %3675 = vmatpush.msra.mxu0 %v3500
  %3676 = vmatpush.msra.mxu0 %v3499
  %3677 = vmatpush.msra.mxu0 %v3498
  %3678 = vmatpush.msra.mxu0 %v3497
  %3679 = vmatpush.msra.mxu0 %v3496
  %3680 = vmatpush.msra.mxu0 %v3495
  %3681 = vmatpush.msra.mxu0 %v3494
  %3682 = vmatpush.msra.mxu0 %v3493
  %3683 = vmatpush.msra.mxu0 %v3492
  %3684 = vmatpush.msra.mxu0 %v3491
  %3685 = vmatpush.msra.mxu0 %v3490
  %3686 = vmatpush.msra.mxu0 %v3489
  %3687 = vmatpush.msra.mxu0 %v3488
  %3688 = vmatmul.f32.gmra.mxu0 %v3393
  %v3689 = vpop.f32.mrf.mxu0
  %v3690 = vadd.f32 %v3670, %v3689
  %3691 = vdwg.mxu0
  %3692 = vmatpush.msra.mxu0 %v3519
  %3693 = vmatpush.msra.mxu0 %v3518
  %3694 = vmatpush.msra.mxu0 %v3517
  %3695 = vmatpush.msra.mxu0 %v3516
  %3696 = vmatpush.msra.mxu0 %v3515
  %3697 = vmatpush.msra.mxu0 %v3514
  %3698 = vmatpush.msra.mxu0 %v3513
  %3699 = vmatpush.msra.mxu0 %v3512
  %3700 = vmatpush.msra.mxu0 %v3511
  %3701 = vmatpush.msra.mxu0 %v3510
  %3702 = vmatpush.msra.mxu0 %v3509
  %3703 = vmatpush.msra.mxu0 %v3508
  %3704 = vmatpush.msra.mxu0 %v3507
  %3705 = vmatpush.msra.mxu0 %v3506
  %3706 = vmatpush.msra.mxu0 %v3505
  %3707 = vmatpush.msra.mxu0 %v3504
  %3708 = vmatmul.f32.gmra.mxu0 %v3394
  %v3709 = vpop.f32.mrf.mxu0
  %v3710 = vadd.f32 %v3690, %v3709
  %3711 = vdwg.mxu0
  %3712 = vmatpush.msra.mxu0 %v3535
  %3713 = vmatpush.msra.mxu0 %v3534
  %3714 = vmatpush.msra.mxu0 %v3533
  %3715 = vmatpush.msra.mxu0 %v3532
  %3716 = vmatpush.msra.mxu0 %v3531
  %3717 = vmatpush.msra.mxu0 %v3530
  %3718 = vmatpush.msra.mxu0 %v3529
  %3719 = vmatpush.msra.mxu0 %v3528
  %3720 = vmatpush.msra.mxu0 %v3527
  %3721 = vmatpush.msra.mxu0 %v3526
  %3722 = vmatpush.msra.mxu0 %v3525
  %3723 = vmatpush.msra.mxu0 %v3524
  %3724 = vmatpush.msra.mxu0 %v3523
  %3725 = vmatpush.msra.mxu0 %v3522
  %3726 = vmatpush.msra.mxu0 %v3521
  %3727 = vmatpush.msra.mxu0 %v3520
  %3728 = vmatmul.f32.gmra.mxu0 %v3395
  %v3729 = vpop.f32.mrf.mxu0
  %v3730 = vadd.f32 %v3710, %v3729
  %3731 = vdwg.mxu0
  %3732 = vmatpush.msra.mxu0 %v3551
  %3733 = vmatpush.msra.mxu0 %v3550
  %3734 = vmatpush.msra.mxu0 %v3549
  %3735 = vmatpush.msra.mxu0 %v3548
  %3736 = vmatpush.msra.mxu0 %v3547
  %3737 = vmatpush.msra.mxu0 %v3546
  %3738 = vmatpush.msra.mxu0 %v3545
  %3739 = vmatpush.msra.mxu0 %v3544
  %3740 = vmatpush.msra.mxu0 %v3543
  %3741 = vmatpush.msra.mxu0 %v3542
  %3742 = vmatpush.msra.mxu0 %v3541
  %3743 = vmatpush.msra.mxu0 %v3540
  %3744 = vmatpush.msra.mxu0 %v3539
  %3745 = vmatpush.msra.mxu0 %v3538
  %3746 = vmatpush.msra.mxu0 %v3537
  %3747 = vmatpush.msra.mxu0 %v3536
  %3748 = vmatmul.f32.gmra.mxu0 %v3396
  %v3749 = vpop.f32.mrf.mxu0
  %v3750 = vadd.f32 %v3730, %v3749
  %3751 = vdwg.mxu0
  %3752 = vmatpush.msra.mxu0 %v3567
  %3753 = vmatpush.msra.mxu0 %v3566
  %3754 = vmatpush.msra.mxu0 %v3565
  %3755 = vmatpush.msra.mxu0 %v3564
  %3756 = vmatpush.msra.mxu0 %v3563
  %3757 = vmatpush.msra.mxu0 %v3562
  %3758 = vmatpush.msra.mxu0 %v3561
  %3759 = vmatpush.msra.mxu0 %v3560
  %3760 = vmatpush.msra.mxu0 %v3559
  %3761 = vmatpush.msra.mxu0 %v3558
  %3762 = vmatpush.msra.mxu0 %v3557
  %3763 = vmatpush.msra.mxu0 %v3556
  %3764 = vmatpush.msra.mxu0 %v3555
  %3765 = vmatpush.msra.mxu0 %v3554
  %3766 = vmatpush.msra.mxu0 %v3553
  %3767 = vmatpush.msra.mxu0 %v3552
  %3768 = vmatmul.f32.gmra.mxu0 %v3397
  %v3769 = vpop.f32.mrf.mxu0
  %v3770 = vadd.f32 %v3750, %v3769
  %3771 = vdwg.mxu0
  %3772 = vst [vmem:[%s8] sm:$0xff] %v3770
  // Predicated region
  $region30: #{_lambda_.1} parent=0 // pred_check
    _
  $region31: #{_lambda_.1} parent=0 // pred_check_branch
    %3774 = sbr.rel (0) target = $region33
  $region32: #{_lambda_.1} parent=0 // pred_region
    _
  $region33: #{_lambda_.1} parent=0 // pred_fallthru
    _
  // Predicated region
  $region34: #{_lambda_.1} parent=0 // pred_check
    _
  $region35: #{_lambda_.1} parent=0 // pred_check_branch
    %3776 = sbr.rel (0) target = $region37
  $region36: #{_lambda_.1} parent=0 // pred_region
    _
  $region37: #{_lambda_.1} parent=0 // pred_fallthru
    _
  // Predicated region
  $region38: #{_lambda_.1} parent=0 // pred_check
    _
  $region39: #{_lambda_.1} parent=0 // pred_check_branch
    %3778 = sbr.rel (0) target = $region41
  $region40: #{_lambda_.1} parent=0 // pred_region
    _
  $region41: #{_lambda_.1} parent=0 // pred_fallthru
    _
  // Predicated region
  $region42: #{_lambda_.1} parent=0 // pred_check
    _
  $region43: #{_lambda_.1} parent=0 // pred_check_branch
    %3780 = sbr.rel (0) target = $region45
  $region44: #{_lambda_.1} parent=0 // pred_region
    _
  $region45: #{_lambda_.1} parent=0 // pred_fallthru
    _

</llo_original>
